<compile_context>
chip_gen: v5e
topology: v5e:2x2
jax: 0.10.0
libtpu: 0.0.40
codegen_flags: <defaults>
</compile_context>

<pallas_src>
import functools
import math

import jax
import jax.numpy as jnp
from jax.experimental import pallas as pl
from jax.experimental.pallas import tpu as pltpu


# ----------------------------------------------------------------------------
# Helpers
# ----------------------------------------------------------------------------

def _round_up(x, m):
    return (x + m - 1) // m * m


@functools.lru_cache(maxsize=None)
def _vmem_limit_bytes():
    """Scoped VMEM budget derived from the actual chip (v7x has only 64 MiB)."""
    default = 64 * 1024 * 1024
    try:
        cap = int(getattr(pltpu.get_tpu_info(), "vmem_capacity_bytes", default))
    except Exception:
        cap = default
    # ~75% of physical, never more than 96 MiB even on 128 MiB parts.
    return int(min(cap * 3 // 4, 96 * 1024 * 1024))


def _choose_tm(Mp, K, N):
    """Row-tile for the matmul kernel: divides Mp, keeps x-block + out-block +
    f32 accumulator around <=2 MiB/step (fits double-buffered on v7x), and
    prefers >=2 grid steps so both v7x TensorCores get work."""
    per_row = 2 * K + 6 * N          # bf16 x + bf16 out + f32 acc, bytes/row
    cap = max(8, (2 * 1024 * 1024) // per_row)
    tiles = (4096, 2048, 1024, 512, 256, 128, 64, 32, 16, 8)
    for tm in tiles:
        if tm <= cap and Mp % tm == 0 and Mp // tm >= 2:
            return tm
    for tm in tiles:
        if tm <= cap and Mp % tm == 0:
            return tm
    return 8


def _choose_th(Ho, Wo, C):
    """Output-row tile for the depthwise kernel: divides Ho exactly (no masked
    / OOB row handling), bounds the f32 accumulator tile to ~256 KiB, and
    prefers >=2 grid steps."""
    cap = max(1, (256 * 1024) // (Wo * C * 4))
    if Ho >= 2:
        cap = min(cap, Ho // 2)
    cap = max(1, min(cap, Ho))
    for th in range(cap, 0, -1):
        if Ho % th == 0:
            return th
    return 1


# ----------------------------------------------------------------------------
# Pallas kernels
# ----------------------------------------------------------------------------

def _epilogue(y, s_ref, t_ref, act):
    y = y * s_ref[...] + t_ref[...]
    if act == "relu":
        y = jnp.maximum(y, 0.0)
    elif act == "tanh":
        y = jnp.tanh(y)
    return y


def _matmul_kernel(x_ref, w_ref, s_ref, t_ref, o_ref, *, act):
    """o = act((x @ w) * s + t);  x:(tm,K) bf16, w:(K,N) bf16, s,t:(1,N) f32."""
    y = jnp.dot(x_ref[...], w_ref[...], preferred_element_type=jnp.float32)
    o_ref[...] = _epilogue(y, s_ref, t_ref, act).astype(o_ref.dtype)


def _matmul_res_kernel(x_ref, w_ref, s_ref, t_ref, r_ref, o_ref, *, act):
    """Same as _matmul_kernel with a fused residual add (r:(tm,N) bf16)."""
    y = jnp.dot(x_ref[...], w_ref[...], preferred_element_type=jnp.float32)
    y = _epilogue(y, s_ref, t_ref, act) + r_ref[...].astype(jnp.float32)
    o_ref[...] = y.astype(o_ref.dtype)


def _dw_kernel(x_ref, w_ref, s_ref, t_ref, o_ref, *, k, stride, hs, act):
    """Depthwise conv tile.

    x_ref : (stride*stride*hs, ws, C) bf16 -- padded map, parity-decomposed
            (space-to-depth) for stride>1, resident in VMEM for all steps.
    w_ref : (k*k, 1, C) f32   s_ref, t_ref : (1, C) f32
    o_ref : (th, Wo, C) bf16  -- output rows [i*th, (i+1)*th) of this image.
    """
    th, wo, _ = o_ref.shape
    row0 = pl.program_id(0) * th
    acc = None
    for dy in range(k):
        for dx in range(k):
            plane = (dy % stride) * stride + (dx % stride)
            tap = x_ref[pl.ds(plane * hs + row0 + dy // stride, th),
                        pl.ds(dx // stride, wo), :]
            term = tap.astype(jnp.float32) * w_ref[dy * k + dx]
            acc = term if acc is None else acc + term
    o_ref[...] = _epilogue(acc, s_ref, t_ref, act).astype(o_ref.dtype)


# ----------------------------------------------------------------------------
# pallas_call builders (cached per shape signature)
# ----------------------------------------------------------------------------

@functools.lru_cache(maxsize=None)
def _matmul_call(Mp, K, N, tm, act, has_res):
    kernel = functools.partial(
        _matmul_res_kernel if has_res else _matmul_kernel, act=act)
    in_specs = [pl.BlockSpec((tm, K), lambda i: (i, 0)),
                pl.BlockSpec((K, N), lambda i: (0, 0)),
                pl.BlockSpec((1, N), lambda i: (0, 0)),
                pl.BlockSpec((1, N), lambda i: (0, 0))]
    if has_res:
        in_specs.append(pl.BlockSpec((tm, N), lambda i: (i, 0)))
    return jax.jit(pl.pallas_call(
        kernel,
        out_shape=jax.ShapeDtypeStruct((Mp, N), jnp.bfloat16),
        grid=(Mp // tm,),
        in_specs=in_specs,
        out_specs=pl.BlockSpec((tm, N), lambda i: (i, 0)),
        compiler_params=pltpu.CompilerParams(
            dimension_semantics=("parallel",),
            vmem_limit_bytes=_vmem_limit_bytes()),
    ))


@functools.lru_cache(maxsize=None)
def _dw_call(hp, ws, C, Ho, Wo, th, k, stride, hs, act):
    kernel = functools.partial(_dw_kernel, k=k, stride=stride, hs=hs, act=act)
    return jax.jit(pl.pallas_call(
        kernel,
        out_shape=jax.ShapeDtypeStruct((Ho, Wo, C), jnp.bfloat16),
        grid=(Ho // th,),
        in_specs=[pl.BlockSpec((hp, ws, C), lambda i: (0, 0, 0)),
                  pl.BlockSpec((k * k, 1, C), lambda i: (0, 0, 0)),
                  pl.BlockSpec((1, C), lambda i: (0, 0)),
                  pl.BlockSpec((1, C), lambda i: (0, 0))],
        out_specs=pl.BlockSpec((th, Wo, C), lambda i: (i, 0, 0)),
        compiler_params=pltpu.CompilerParams(
            dimension_semantics=("parallel",),
            vmem_limit_bytes=_vmem_limit_bytes()),
    ))


# ----------------------------------------------------------------------------
# Conv wrappers (glue: reshape / padding / parity decomposition only)
# ----------------------------------------------------------------------------

def matmul_bias_act(x, w, scale, shift, act, residual=None):
    """x:(M,K) bf16 @ w:(K,N) bf16, per-column scale/shift (f32), activation,
    optional fused residual (M,N) bf16."""
    M, K = x.shape
    N = w.shape[1]
    Mp = _round_up(M, 8)
    tm = _choose_tm(Mp, K, N)          # guaranteed to divide Mp
    if Mp != M:                        # only the tiny odd-M eye-head projections
        x = jnp.pad(x, ((0, Mp - M), (0, 0)))
        if residual is not None:
            residual = jnp.pad(residual, ((0, Mp - M), (0, 0)))
    fn = _matmul_call(Mp, K, N, tm, act, residual is not None)
    args = (x, w, scale.reshape(1, N).astype(jnp.float32),
            shift.reshape(1, N).astype(jnp.float32))
    if residual is not None:
        args = args + (residual,)
    out = fn(*args)
    return out if Mp == M else out[:M]


def pointwise(x, w, scale, shift, act, residual=None):
    """1x1 conv, x NHWC bf16, w:(Cin,Cout) bf16, optional fused residual."""
    N, H, W, Cin = x.shape
    Cout = w.shape[1]
    r = None if residual is None else residual.reshape(N * H * W, Cout)
    y = matmul_bias_act(x.reshape(N * H * W, Cin), w, scale, shift, act, r)
    return y.reshape(N, H, W, Cout)


def depthwise(x, w, scale, shift, act, stride, pad):
    """Depthwise conv, x NHWC bf16, w:(k,k,C) f32.

    Taps are extracted in-kernel from the VMEM-resident padded map; stride>1
    uses a space-to-depth parity decomposition (one copy of the input, not
    k^2 copies)."""
    N, H, W, C = x.shape
    k = w.shape[0]
    Ho = (H + 2 * pad - k) // stride + 1
    Wo = (W + 2 * pad - k) // stride + 1
    hs = Ho + (k - 1) // stride        # rows needed per parity plane
    ws = Wo + (k - 1) // stride
    pad_b = max(0, stride * hs - H - pad)
    pad_r = max(0, stride * ws - W - pad)
    xp = jnp.pad(x, ((0, 0), (pad, pad_b), (pad, pad_r), (0, 0)))
    th = _choose_th(Ho, Wo, C)
    fn = _dw_call(stride * stride * hs, ws, C, Ho, Wo, th, k, stride, hs, act)
    w_r = w.reshape(k * k, 1, C).astype(jnp.float32)
    sc = scale.reshape(1, C).astype(jnp.float32)
    sh = shift.reshape(1, C).astype(jnp.float32)
    outs = []
    for n in range(N):                 # batch == 1 in this model's harness
        if stride == 1:
            xs = xp[n, :hs, :ws, :]
        else:
            planes = [xp[n, py::stride, px::stride][:hs, :ws]
                      for py in range(stride) for px in range(stride)]
            xs = jnp.concatenate(planes, axis=0)
        outs.append(fn(xs, w_r, sc, sh))
    return jnp.stack(outs, axis=0)


def conv2d_im2col(x, w, scale, shift, act, stride, pad):
    """Dense conv via im2col + matmul, x NHWC bf16, w:(kh,kw,Cin,Cout) f32.
    Only used for the 3x3x3->32 stem (Cin=3, so the im2col copy is tiny)."""
    N, H, W, Cin = x.shape
    kh, kw, _, Cout = w.shape
    Ho = (H + 2 * pad - kh) // stride + 1
    Wo = (W + 2 * pad - kw) // stride + 1
    xp = jnp.pad(x, ((0, 0), (pad, pad), (pad, pad), (0, 0)))
    cols = [xp[:, dy:dy + (Ho - 1) * stride + 1:stride,
               dx:dx + (Wo - 1) * stride + 1:stride, :]
            for dy in range(kh) for dx in range(kw)]
    Xc = jnp.concatenate(cols, axis=-1).reshape(N * Ho * Wo, kh * kw * Cin)
    Wc = w.reshape(kh * kw * Cin, Cout).astype(jnp.bfloat16)
    y = matmul_bias_act(Xc, Wc, scale, shift, act)
    return y.reshape(N, Ho, Wo, Cout)


# ----------------------------------------------------------------------------
# Deterministic parameter construction
# ----------------------------------------------------------------------------

class _KeyGen:
    def __init__(self, seed):
        self._key = jax.random.PRNGKey(seed)

    def __call__(self):
        self._key, sub = jax.random.split(self._key)
        return sub


_kg = _KeyGen(42)


def conv_w(kh, kw, cin, cout):
    fan_in = kh * kw * cin
    return (jax.random.normal(_kg(), (kh, kw, cin, cout), jnp.float32)
            * math.sqrt(2.0 / fan_in))


def dw_w(k, c):
    return jax.random.normal(_kg(), (k, k, c), jnp.float32) * math.sqrt(2.0 / (k * k))


def bn_params(c, eps=1e-5):
    gamma = 1.0 + 0.1 * jax.random.normal(_kg(), (c,), jnp.float32)
    beta = 0.1 * jax.random.normal(_kg(), (c,), jnp.float32)
    mean = 0.1 * jax.random.normal(_kg(), (c,), jnp.float32)
    var = jnp.abs(1.0 + 0.1 * jax.random.normal(_kg(), (c,), jnp.float32))
    scale = gamma / jnp.sqrt(var + eps)
    shift = beta - mean * scale
    return scale, shift


def bias_p(c):
    return 0.01 * jax.random.normal(_kg(), (c,), jnp.float32)


# --- InvertedResidual -------------------------------------------------------

def make_ir(cin, cout, k, exp):
    mid = cin * exp
    s1, t1 = bn_params(mid)
    s2, t2 = bn_params(mid)
    s3, t3 = bn_params(cout)
    return dict(
        w1=conv_w(1, 1, cin, mid).reshape(cin, mid).astype(jnp.bfloat16),
        s1=s1, t1=t1,
        dw=dw_w(k, mid), s2=s2, t2=t2,
        w2=conv_w(1, 1, mid, cout).reshape(mid, cout).astype(jnp.bfloat16),
        s3=s3, t3=t3,
        k=k, cin=cin, cout=cout)


def apply_ir(x, p, stride):
    y = pointwise(x, p['w1'], p['s1'], p['t1'], 'relu')
    y = depthwise(y, p['dw'], p['s2'], p['t2'], 'relu',
                  stride=stride, pad=(p['k'] - 1) // 2)
    res = x if (p['cin'] == p['cout'] and stride == 1) else None
    return pointwise(y, p['w2'], p['s3'], p['t3'], 'none', residual=res)


# --- Trunk (MNASNet backbone) -----------------------------------------------

def make_trunk():
    p = {}
    p['conv0_w'] = conv_w(3, 3, 3, 32)
    p['bn0'] = bn_params(32)
    p['dw1_w'] = dw_w(3, 32)
    p['bn1'] = bn_params(32)
    p['pw2_w'] = conv_w(1, 1, 32, 16).reshape(32, 16).astype(jnp.bfloat16)
    p['bn2'] = bn_params(16)

    def make_stack(cin, cout, k, stride, exp, repeats):
        irs = [make_ir(cin, cout, k, exp)]
        for _ in range(1, repeats):
            irs.append(make_ir(cout, cout, k, exp))
        return dict(irs=irs, stride=stride)

    p['stacks'] = [
        make_stack(16, 24, 3, 2, 3, 3),
        make_stack(24, 40, 5, 2, 3, 3),
        make_stack(40, 80, 5, 2, 6, 3),
        make_stack(80, 96, 3, 1, 6, 2),
    ]
    return p


def apply_trunk(x, p):
    s0, t0 = p['bn0']
    y = conv2d_im2col(x, p['conv0_w'], s0, t0, 'relu', stride=2, pad=1)
    s1, t1 = p['bn1']
    y = depthwise(y, p['dw1_w'], s1, t1, 'relu', stride=1, pad=1)
    s2, t2 = p['bn2']
    y = pointwise(y, p['pw2_w'], s2, t2, 'none')
    for st in p['stacks']:
        for idx, ir in enumerate(st['irs']):
            y = apply_ir(y, ir, st['stride'] if idx == 0 else 1)
    return y


# --- Rescale ----------------------------------------------------------------

def make_rescale(c):
    return [make_ir(c, c, 2, 6), make_ir(c, c, 3, 6), make_ir(c, c, 3, 6)]


def apply_rescale(x, irs):
    x = apply_ir(x, irs[0], stride=2)
    x = apply_ir(x, irs[1], stride=1)
    x = apply_ir(x, irs[2], stride=1)
    return x


# --- Eye --------------------------------------------------------------------

def make_eye_whatever(cin, cout, k, exp):
    mid = cin * exp
    return dict(
        w1=conv_w(1, 1, cin, mid).reshape(cin, mid).astype(jnp.bfloat16),
        b1=bias_p(mid),
        dw=dw_w(k, mid), b2=bias_p(mid),
        w2=conv_w(1, 1, mid, cout).reshape(mid, cout).astype(jnp.bfloat16),
        b3=bias_p(cout),
        ones_mid=jnp.ones((mid,), jnp.float32),
        ones_out=jnp.ones((cout,), jnp.float32),
        k=k)


def apply_eye_whatever(x, p):
    y = pointwise(x, p['w1'], p['ones_mid'], p['b1'], 'relu')
    y = depthwise(y, p['dw'], p['ones_mid'], p['b2'], 'relu',
                  stride=1, pad=(p['k'] - 1) // 2)
    # apply_residual is always True here (in_ch == out_ch, stride == 1)
    return pointwise(y, p['w2'], p['ones_out'], p['b3'], 'none', residual=x)


def make_eye_last(cin, cout, exp):
    mid = cin * exp
    return dict(
        w1=conv_w(1, 1, cin, mid).reshape(cin, mid).astype(jnp.bfloat16),
        b1=bias_p(mid),
        dw=dw_w(4, mid), b2=bias_p(mid),
        w2=conv_w(1, 1, mid, cout).reshape(mid, cout).astype(jnp.bfloat16),
        b3=bias_p(cout),
        ones_mid=jnp.ones((mid,), jnp.float32),
        ones_out=jnp.ones((cout,), jnp.float32))


def apply_eye_last(x, p):
    y = pointwise(x, p['w1'], p['ones_mid'], p['b1'], 'relu')
    y = depthwise(y, p['dw'], p['ones_mid'], p['b2'], 'tanh', stride=2, pad=0)
    return pointwise(y, p['w2'], p['ones_out'], p['b3'], 'none')


def make_eye(cin=96, cout=50):
    return dict(w=[make_eye_whatever(cin, cin, 3, 6),
                   make_eye_whatever(cin, cin, 3, 6)],
                last=make_eye_last(cin, cout, 6))


def apply_eye(x, p):
    x = apply_eye_whatever(x, p['w'][0])
    x = apply_eye_whatever(x, p['w'][1])
    return apply_eye_last(x, p['last'])


# --- Full model ---------------------------------------------------------------

def make_mynet():
    return dict(trunk=make_trunk(),
                rescale1=make_rescale(96),
                rescale2=make_rescale(96),
                rescale3=make_rescale(96),
                eye1=make_eye(), eye2=make_eye(),
                eye3=make_eye(), eye4=make_eye())


def mynet_forward(x_nchw, params):
    x = jnp.transpose(x_nchw, (0, 2, 3, 1)).astype(jnp.bfloat16)  # NCHW -> NHWC
    ft1 = apply_trunk(x, params['trunk'])
    ft2 = apply_rescale(ft1, params['rescale1'])
    ft3 = apply_rescale(ft2, params['rescale2'])
    ft4 = apply_rescale(ft3, params['rescale3'])
    d1 = apply_eye(ft1, params['eye1'])
    d2 = apply_eye(ft2, params['eye2'])
    d3 = apply_eye(ft3, params['eye3'])
    d4 = apply_eye(ft4, params['eye4'])
    to_nchw = lambda t: jnp.transpose(t.astype(jnp.float32), (0, 3, 1, 2))
    return tuple(to_nchw(d) for d in (d1, d2, d3, d4))


if __name__ == "__main__":
    params = make_mynet()
    # Smallest input consistent with the module: 512x512 (the eye heads need
    # >=4x4 feature maps and the trunk + 3 rescales downsample by 16*2*2*2).
    x = jax.random.normal(jax.random.PRNGKey(0), (1, 3, 512, 512), jnp.float32)
    outs = jax.block_until_ready(mynet_forward(x, params))
    expected = [(1, 50, 15, 15), (1, 50, 7, 7), (1, 50, 3, 3), (1, 50, 1, 1)]
    assert [tuple(o.shape) for o in outs] == expected, \
        [tuple(o.shape) for o in outs]
    assert all(bool(jnp.all(jnp.isfinite(o))) for o in outs)
    print("KERNEL_OK")
</pallas_src>

<mosaic_0001>
module attributes {stable_mosaic.version = 11 : i64} {
  func.func @_matmul_kernel(%arg0: i32, %arg1: memref<4096x27xbf16, #tpu.memory_space<vmem>>, %arg2: memref<27x32xbf16, #tpu.memory_space<vmem>>, %arg3: memref<1x32xf32, #tpu.memory_space<vmem>>, %arg4: memref<1x32xf32, #tpu.memory_space<vmem>>, %arg5: memref<4096x32xbf16, #tpu.memory_space<vmem>>) attributes {dimension_semantics = [#tpu.dimension_semantics<parallel>], iteration_bounds = array<i64: 16>, scalar_prefetch = 0 : i64, scratch_operands = 0 : i64, tpu.core_type = #tpu.core_type<tc>, window_params = [{transform_indices = @transform_0, window_bounds = array<i64: 4096, 27>}, {pipeline_mode = #tpu.pipeline_mode<synchronous>, transform_indices = @transform_1, window_bounds = array<i64: 27, 32>}, {pipeline_mode = #tpu.pipeline_mode<synchronous>, transform_indices = @transform_2, window_bounds = array<i64: 1, 32>}, {pipeline_mode = #tpu.pipeline_mode<synchronous>, transform_indices = @transform_3, window_bounds = array<i64: 1, 32>}, {transform_indices = @transform_4, window_bounds = array<i64: 4096, 32>}]} {
    %c0 = arith.constant 0 : index
    %c0_0 = arith.constant 0 : index
    %0 = vector.load %arg1[%c0, %c0_0] : memref<4096x27xbf16, #tpu.memory_space<vmem>>, vector<4096x27xbf16>
    %c0_1 = arith.constant 0 : index
    %c0_2 = arith.constant 0 : index
    %1 = vector.load %arg2[%c0_1, %c0_2] : memref<27x32xbf16, #tpu.memory_space<vmem>>, vector<27x32xbf16>
    %cst = arith.constant dense<0.000000e+00> : vector<4096x32xf32>
    %2 = tpu.matmul %0, %1, %cst {dimension_numbers = #tpu.dot_dimension_numbers<[1], [0], [0], [1], [0, 0, 1, 1], [], []>} : vector<4096x27xbf16>, vector<27x32xbf16>, vector<4096x32xf32> -> vector<4096x32xf32>
    %c0_3 = arith.constant 0 : index
    %c0_4 = arith.constant 0 : index
    %3 = vector.load %arg3[%c0_3, %c0_4] : memref<1x32xf32, #tpu.memory_space<vmem>>, vector<1x32xf32>
    %4 = vector.broadcast %3 : vector<1x32xf32> to vector<4096x32xf32>
    %5 = arith.mulf %2, %4 : vector<4096x32xf32>
    %c0_5 = arith.constant 0 : index
    %c0_6 = arith.constant 0 : index
    %6 = vector.load %arg4[%c0_5, %c0_6] : memref<1x32xf32, #tpu.memory_space<vmem>>, vector<1x32xf32>
    %7 = vector.broadcast %6 : vector<1x32xf32> to vector<4096x32xf32>
    %8 = arith.addf %5, %7 : vector<4096x32xf32>
    %cst_7 = arith.constant 0.000000e+00 : f32
    %9 = vector.broadcast %cst_7 : f32 to vector<4096x32xf32>
    %10 = arith.maximumf %8, %9 : vector<4096x32xf32>
    %11 = arith.truncf %10 : vector<4096x32xf32> to vector<4096x32xbf16>
    %c0_8 = arith.constant 0 : index
    %c0_9 = arith.constant 0 : index
    %12 = vector.load %arg5[%c0_8, %c0_9] : memref<4096x32xbf16, #tpu.memory_space<vmem>>, vector<4096x32xbf16>
    tpu.vector_store %arg5[%c0_8, %c0_9], %11 {strides = array<i32>} : memref<4096x32xbf16, #tpu.memory_space<vmem>>, vector<4096x32xbf16>,
    return
  }
  func.func @transform_0(%arg0: i32) -> (i32, i32) {
    %c0_i32 = arith.constant 0 : i32
    %c0_i32_0 = arith.constant 0 : i32
    return %arg0, %c0_i32 : i32, i32
  }
  func.func @transform_1(%arg0: i32) -> (i32, i32) {
    %c0_i32 = arith.constant 0 : i32
    %c0_i32_0 = arith.constant 0 : i32
    %c0_i32_1 = arith.constant 0 : i32
    return %c0_i32, %c0_i32_0 : i32, i32
  }
  func.func @transform_2(%arg0: i32) -> (i32, i32) {
    %c0_i32 = arith.constant 0 : i32
    %c0_i32_0 = arith.constant 0 : i32
    %c0_i32_1 = arith.constant 0 : i32
    return %c0_i32, %c0_i32_0 : i32, i32
  }
  func.func @transform_3(%arg0: i32) -> (i32, i32) {
    %c0_i32 = arith.constant 0 : i32
    %c0_i32_0 = arith.constant 0 : i32
    %c0_i32_1 = arith.constant 0 : i32
    return %c0_i32, %c0_i32_0 : i32, i32
  }
  func.func @transform_4(%arg0: i32) -> (i32, i32) {
    %c0_i32 = arith.constant 0 : i32
    %c0_i32_0 = arith.constant 0 : i32
    return %arg0, %c0_i32 : i32, i32
  }
}

</mosaic_0001>

<llo_original>
// kernel: tpu_custom_call.1
$region0: #{tpu_custom_call.1}
  #allocation0 [shape = 'u32[]', space=smem, size = 0x4, offset = 0x4, fixed_abs, tag = 'smem constant byte address 0x4 - core index']
  #allocation1 [shape = 'u32[72,128]{1,0:T(1,128)}', space=vmem, size = 0x9000, scoped, tag = 'internal scratch']
  %s0 = inlined_call_operand.vmem [shape: bf16[65536,27], index: 0, kind: input, shape index: {}]
  %s1 = inlined_call_operand.vmem [shape: bf16[27,32], index: 1, kind: input, shape index: {}]
  %s2 = inlined_call_operand.vmem [shape: f32[1,32], index: 2, kind: input, shape index: {}]
  %s3 = inlined_call_operand.vmem [shape: f32[1,32], index: 3, kind: input, shape index: {}]
  %s4 = inlined_call_operand.vmem [shape: bf16[65536,32], index: 4, kind: output, shape index: {}]
  %s5 = sld [smem:[#allocation0]]
  $region49: #{tpu_custom_call.1} parent=0
    _
  %s7 = ssub.s32 1, %s5
  %s8 = scalar_select 0, %s7, %s5
  loop: start=0, step=1, limit=18
  $region2: #{tpu_custom_call.1} parent=0 // loop_pre_header
    _
  $region3: #{tpu_custom_call.1} parent=0 // loop_header
    %s10 = sphi 0, %s14
    %p11 = scmp.ge.s32.totalorder %s10, 18
    %s20 = sphi 0, %s22
    %s23 = sphi 0, %s20
    %s24 = sphi 0, %s23
    %s40 = sphi 0, %s24
    %s44 = sphi 0, %s44
    %s46 = sphi 0, %s44
    %s47 = sphi 0, %s46
    %s61 = sphi 0, %s47
    %s65 = sphi 0, %s65
    %s67 = sphi 0, %s65
    %s68 = sphi 0, %s67
    %s82 = sphi 0, %s68
    %s86 = sphi 0, %s86
    %s88 = sphi 0, %s86
    %s89 = sphi 0, %s88
    %s103 = sphi 0, %s89
    %s109 = sphi 0, %s111
    %s112 = sphi 0, %s109
    %s113 = sphi 0, %s112
    %s129 = sphi 0, %s113
  $region4: #{tpu_custom_call.1} parent=0 // loop_header_branch
    %13 = sbr.rel (%p11) target = $region8
  $region5: #{tpu_custom_call.1} parent=0 // loop_body
    %s15 = ssub.s32 %s10, 1
    %s16 = ssub.s32 %s10, 2
    %s17 = sadd.s32 %s10, 1
    %s18 = ssub.s32 %s10, %s17
    %p19 = scmp.eq.s32.totalorder %s18, 0
    %s21 = sadd.s32 %s20, 1
    %s22 = scalar_select %p19, %s20, %s21
    %p25 = pneg %p19
    %p26 = scmp.eq.s32.totalorder %s10, 15
    %p27 = por %p25, %p26
    %p28 = scmp.ne.s32.totalorder %s20, %s23
    %p29 = scmp.eq.s32.totalorder %s10, 0
    %p30 = por %p28, %p29
    %p31 = scmp.ne.s32.totalorder %s20, %s23
    %p32 = scmp.eq.s32.totalorder %s15, 15
    %p33 = por %p31, %p32
    %p34 = scmp.ne.s32.totalorder %s23, %s24
    %p35 = scmp.eq.s32.totalorder %s15, 0
    %p36 = por %p34, %p35
    %p37 = scmp.ne.s32.totalorder %s23, %s24
    %p38 = scmp.eq.s32.totalorder %s16, 15
    %p39 = por %p37, %p38
    %p41 = scmp.ne.s32.totalorder %s24, %s40
    %p42 = scmp.eq.s32.totalorder %s16, 0
    %p43 = por %p41, %p42
    %s45 = sadd.s32 %s44, 1
    %p48 = scmp.eq.s32.totalorder %s10, 15
    %p49 = scmp.ne.s32.totalorder %s44, %s46
    %p50 = scmp.eq.s32.totalorder %s10, 0
    %p51 = por %p49, %p50
    %p52 = scmp.ne.s32.totalorder %s44, %s46
    %p53 = scmp.eq.s32.totalorder %s15, 15
    %p54 = por %p52, %p53
    %p55 = scmp.ne.s32.totalorder %s46, %s47
    %p56 = scmp.eq.s32.totalorder %s15, 0
    %p57 = por %p55, %p56
    %p58 = scmp.ne.s32.totalorder %s46, %s47
    %p59 = scmp.eq.s32.totalorder %s16, 15
    %p60 = por %p58, %p59
    %p62 = scmp.ne.s32.totalorder %s47, %s61
    %p63 = scmp.eq.s32.totalorder %s16, 0
    %p64 = por %p62, %p63
    %s66 = sadd.s32 %s65, 1
    %p69 = scmp.eq.s32.totalorder %s10, 15
    %p70 = scmp.ne.s32.totalorder %s65, %s67
    %p71 = scmp.eq.s32.totalorder %s10, 0
    %p72 = por %p70, %p71
    %p73 = scmp.ne.s32.totalorder %s65, %s67
    %p74 = scmp.eq.s32.totalorder %s15, 15
    %p75 = por %p73, %p74
    %p76 = scmp.ne.s32.totalorder %s67, %s68
    %p77 = scmp.eq.s32.totalorder %s15, 0
    %p78 = por %p76, %p77
    %p79 = scmp.ne.s32.totalorder %s67, %s68
    %p80 = scmp.eq.s32.totalorder %s16, 15
    %p81 = por %p79, %p80
    %p83 = scmp.ne.s32.totalorder %s68, %s82
    %p84 = scmp.eq.s32.totalorder %s16, 0
    %p85 = por %p83, %p84
    %s87 = sadd.s32 %s86, 1
    %p90 = scmp.eq.s32.totalorder %s10, 15
    %p91 = scmp.ne.s32.totalorder %s86, %s88
    %p92 = scmp.eq.s32.totalorder %s10, 0
    %p93 = por %p91, %p92
    %p94 = scmp.ne.s32.totalorder %s86, %s88
    %p95 = scmp.eq.s32.totalorder %s15, 15
    %p96 = por %p94, %p95
    %p97 = scmp.ne.s32.totalorder %s88, %s89
    %p98 = scmp.eq.s32.totalorder %s15, 0
    %p99 = por %p97, %p98
    %p100 = scmp.ne.s32.totalorder %s88, %s89
    %p101 = scmp.eq.s32.totalorder %s16, 15
    %p102 = por %p100, %p101
    %p104 = scmp.ne.s32.totalorder %s89, %s103
    %p105 = scmp.eq.s32.totalorder %s16, 0
    %p106 = por %p104, %p105
    %s107 = ssub.s32 %s10, %s17
    %p108 = scmp.eq.s32.totalorder %s107, 0
    %s110 = sadd.s32 %s109, 1
    %s111 = scalar_select %p108, %s109, %s110
    %p114 = pneg %p108
    %p115 = scmp.eq.s32.totalorder %s10, 15
    %p116 = por %p114, %p115
    %p117 = scmp.ne.s32.totalorder %s109, %s112
    %p118 = scmp.eq.s32.totalorder %s10, 0
    %p119 = por %p117, %p118
    %p120 = scmp.ne.s32.totalorder %s109, %s112
    %p121 = scmp.eq.s32.totalorder %s15, 15
    %p122 = por %p120, %p121
    %p123 = scmp.ne.s32.totalorder %s112, %s113
    %p124 = scmp.eq.s32.totalorder %s15, 0
    %p125 = por %p123, %p124
    %p126 = scmp.ne.s32.totalorder %s112, %s113
    %p127 = scmp.eq.s32.totalorder %s16, 15
    %p128 = por %p126, %p127
    %p130 = scmp.ne.s32.totalorder %s113, %s129
    %p131 = scmp.eq.s32.totalorder %s16, 0
    %p132 = por %p130, %p131
    %p133 = scmp.le.s32.totalorder 1, %s10
    %p134 = scmp.lt.s32.totalorder %s10, 17
    %p135 = pnand %p133, %p134
    %p136 = pneg %p135
    // Predicated region
    $region9: #{tpu_custom_call.1} parent=5 // pred_check
      _
    $region10: #{tpu_custom_call.1} parent=5 // pred_check_branch
      %138 = sbr.rel (%p135) target = $region12
    $region11: #{tpu_custom_call.1} parent=5 // pred_region
      %s139 = ssub.s32 %s10, 1
      // Predicated region
      $region13: #{tpu_custom_call.1} parent=11 // pred_check
        %p140 = pneg %p57
      $region14: #{tpu_custom_call.1} parent=11 // pred_check_branch
        %142 = sbr.rel (%p140) target = $region16
      $region15: #{tpu_custom_call.1} parent=11 // pred_region
        _
      $region16: #{tpu_custom_call.1} parent=11 // pred_fallthru
        _
      // Predicated region
      $region17: #{tpu_custom_call.1} parent=11 // pred_check
        %p143 = pneg %p78
      $region18: #{tpu_custom_call.1} parent=11 // pred_check_branch
        %145 = sbr.rel (%p143) target = $region20
      $region19: #{tpu_custom_call.1} parent=11 // pred_region
        _
      $region20: #{tpu_custom_call.1} parent=11 // pred_fallthru
        _
      // Predicated region
      $region21: #{tpu_custom_call.1} parent=11 // pred_check
        %p146 = pneg %p99
      $region22: #{tpu_custom_call.1} parent=11 // pred_check_branch
        %148 = sbr.rel (%p146) target = $region24
      $region23: #{tpu_custom_call.1} parent=11 // pred_region
        _
      $region24: #{tpu_custom_call.1} parent=11 // pred_fallthru
        _
    $region12: #{tpu_custom_call.1} parent=5 // pred_fallthru
      _
    %p149 = scmp.lt.s32.totalorder %s10, 16
    // Predicated region
    $region25: #{tpu_custom_call.1} parent=5 // pred_check
      %p150 = pneg %p149
    $region26: #{tpu_custom_call.1} parent=5 // pred_check_branch
      %152 = sbr.rel (%p150) target = $region28
    $region27: #{tpu_custom_call.1} parent=5 // pred_region
      // Predicated region
      $region29: #{tpu_custom_call.1} parent=27 // pred_check
        %p153 = pneg %p30
      $region30: #{tpu_custom_call.1} parent=27 // pred_check_branch
        %155 = sbr.rel (%p153) target = $region32
      $region31: #{tpu_custom_call.1} parent=27 // pred_region
        %s156 = smul.u32 512, %s10
        %p157 = scmp.lt.s32.totalorder %s156, 8191
        %s158 = scalar_select %p157, %s156, 8191
        %s159 = smul.addr %s158, 4
        %s160 = scalar_lea.vmem %s0, %s159
        %s161 = smul.u32 512, %s10
      $region32: #{tpu_custom_call.1} parent=27 // pred_fallthru
        _
    $region28: #{tpu_custom_call.1} parent=5 // pred_fallthru
      _
    %p162 = scmp.le.s32.totalorder 1, %s10
    %p163 = scmp.lt.s32.totalorder %s10, 17
    %p164 = pnand %p162, %p163
    %p165 = pneg %p164
    // Predicated region
    $region33: #{tpu_custom_call.1} parent=5 // pred_check
      _
    $region34: #{tpu_custom_call.1} parent=5 // pred_check_branch
      %167 = sbr.rel (%p164) target = $region36
    $region35: #{tpu_custom_call.1} parent=5 // pred_region
      %s168 = ssub.s32 %s10, 1
      %s169 = smul.u32 512, %s15
      %p170 = scmp.lt.s32.totalorder %s169, 8191
      %s171 = scalar_select %p170, %s169, 8191
      %s172 = smul.addr %s171, 4
      %s173 = scalar_lea.vmem %s0, %s172
      %p174 = pneg %p36
      %p175 = pneg %p33
      %p176 = pneg %p57
      %p177 = pneg %p54
      %p178 = pneg %p78
      %p179 = pneg %p75
      %p180 = pneg %p99
      %p181 = pneg %p96
      %p182 = pneg %p125
      %p183 = pneg %p122
      %s184 = smul.u32 512, %s15
      %p185 = scmp.lt.s32.totalorder %s184, 8191
      %s186 = scalar_select %p185, %s184, 8191
      %s187 = smul.addr %s186, 4
      %s188 = scalar_lea.vmem %s4, %s187
      %s189 = smul.u32 512, %s15
      %p190 = scmp.lt.s32.totalorder %s189, 8191
      %s191 = scalar_select %p190, %s189, 8191
      %s192 = smul.addr %s191, 4
      %s193 = scalar_lea.vmem %s0, %s192
      %s194 = smul.u32 512, %s15
      %s195 = smul.u32 512, %s15
      %p196 = scmp.lt.s32.totalorder %s195, 8191
      %s197 = scalar_select %p196, %s195, 8191
      %s198 = smul.addr %s197, 4
      %s199 = scalar_lea.vmem %s4, %s198
      %s200 = smul.u32 512, %s15
      %v202 = vld [vmem:[%s193] sm:$0xf]
      %v203 = vld [vmem:[%s193 + $0x4] sm:$0xf]
      %v204 = vld [vmem:[%s193 + $0x8] sm:$0xf]
      %v205 = vld [vmem:[%s193 + $0xc] sm:$0xf]
      %v206 = vld [vmem:[%s193 + $0x10] sm:$0xf]
      %v207 = vld [vmem:[%s193 + $0x14] sm:$0xf]
      %v208 = vld [vmem:[%s193 + $0x18] sm:$0xf]
      %v209 = vld [vmem:[%s193 + $0x1c] sm:$0xf]
      %v210 = vld [vmem:[%s193 + $0x20] sm:$0xf]
      %v211 = vld [vmem:[%s193 + $0x24] sm:$0xf]
      %v212 = vld [vmem:[%s193 + $0x28] sm:$0xf]
      %v213 = vld [vmem:[%s193 + $0x2c] sm:$0xf]
      %v214 = vld [vmem:[%s193 + $0x30] sm:$0xf]
      %v215 = vld [vmem:[%s193 + $0x34] sm:$0xf]
      %v216 = vld [vmem:[%s193 + $0x38] sm:$0xf]
      %v217 = vld [vmem:[%s193 + $0x3c] sm:$0xf]
      %v218 = vld [vmem:[%s193 + $0x40] sm:$0xf]
      %v219 = vld [vmem:[%s193 + $0x44] sm:$0xf]
      %v220 = vld [vmem:[%s193 + $0x48] sm:$0xf]
      %v221 = vld [vmem:[%s193 + $0x4c] sm:$0xf]
      %v222 = vld [vmem:[%s193 + $0x50] sm:$0xf]
      %v223 = vld [vmem:[%s193 + $0x54] sm:$0xf]
      %v224 = vld [vmem:[%s193 + $0x58] sm:$0xf]
      %v225 = vld [vmem:[%s193 + $0x5c] sm:$0xf]
      %v226 = vld [vmem:[%s193 + $0x60] sm:$0xf]
      %v227 = vld [vmem:[%s193 + $0x64] sm:$0xf]
      %v228 = vld [vmem:[%s193 + $0x68] sm:$0xf]
      %v229 = vld [vmem:[%s193 + $0x6c] sm:$0xf]
      %v230 = vld [vmem:[%s193 + $0x70] sm:$0xf]
      %v231 = vld [vmem:[%s193 + $0x74] sm:$0xf]
      %v232 = vld [vmem:[%s193 + $0x78] sm:$0xf]
      %v233 = vld [vmem:[%s193 + $0x7c] sm:$0xf]
      %v234 = vld [vmem:[%s193 + $0x80] sm:$0xf]
      %v235 = vld [vmem:[%s193 + $0x84] sm:$0xf]
      %v236 = vld [vmem:[%s193 + $0x88] sm:$0xf]
      %v237 = vld [vmem:[%s193 + $0x8c] sm:$0xf]
      %v238 = vld [vmem:[%s193 + $0x90] sm:$0xf]
      %v239 = vld [vmem:[%s193 + $0x94] sm:$0xf]
      %v240 = vld [vmem:[%s193 + $0x98] sm:$0xf]
      %v241 = vld [vmem:[%s193 + $0x9c] sm:$0xf]
      %v242 = vld [vmem:[%s193 + $0xa0] sm:$0xf]
      %v243 = vld [vmem:[%s193 + $0xa4] sm:$0xf]
      %v244 = vld [vmem:[%s193 + $0xa8] sm:$0xf]
      %v245 = vld [vmem:[%s193 + $0xac] sm:$0xf]
      %v246 = vld [vmem:[%s193 + $0xb0] sm:$0xf]
      %v247 = vld [vmem:[%s193 + $0xb4] sm:$0xf]
      %v248 = vld [vmem:[%s193 + $0xb8] sm:$0xf]
      %v249 = vld [vmem:[%s193 + $0xbc] sm:$0xf]
      %v250 = vld [vmem:[%s193 + $0xc0] sm:$0xf]
      %v251 = vld [vmem:[%s193 + $0xc4] sm:$0xf]
      %v252 = vld [vmem:[%s193 + $0xc8] sm:$0xf]
      %v253 = vld [vmem:[%s193 + $0xcc] sm:$0xf]
      %v254 = vld [vmem:[%s193 + $0xd0] sm:$0xf]
      %v255 = vld [vmem:[%s193 + $0xd4] sm:$0xf]
      %v256 = vld [vmem:[%s193 + $0xd8] sm:$0xf]
      %v257 = vld [vmem:[%s193 + $0xdc] sm:$0xf]
      %v258 = vld [vmem:[%s193 + $0xe0] sm:$0xf]
      %v259 = vld [vmem:[%s193 + $0xe4] sm:$0xf]
      %v260 = vld [vmem:[%s193 + $0xe8] sm:$0xf]
      %v261 = vld [vmem:[%s193 + $0xec] sm:$0xf]
      %v262 = vld [vmem:[%s193 + $0xf0] sm:$0xf]
      %v263 = vld [vmem:[%s193 + $0xf4] sm:$0xf]
      %v264 = vld [vmem:[%s193 + $0xf8] sm:$0xf]
      %v265 = vld [vmem:[%s193 + $0xfc] sm:$0xf]
      %v266 = vld [vmem:[%s193 + $0x100] sm:$0xf]
      %v267 = vld [vmem:[%s193 + $0x104] sm:$0xf]
      %v268 = vld [vmem:[%s193 + $0x108] sm:$0xf]
      %v269 = vld [vmem:[%s193 + $0x10c] sm:$0xf]
      %v270 = vld [vmem:[%s193 + $0x110] sm:$0xf]
      %v271 = vld [vmem:[%s193 + $0x114] sm:$0xf]
      %v272 = vld [vmem:[%s193 + $0x118] sm:$0xf]
      %v273 = vld [vmem:[%s193 + $0x11c] sm:$0xf]
      %v274 = vld [vmem:[%s193 + $0x120] sm:$0xf]
      %v275 = vld [vmem:[%s193 + $0x124] sm:$0xf]
      %v276 = vld [vmem:[%s193 + $0x128] sm:$0xf]
      %v277 = vld [vmem:[%s193 + $0x12c] sm:$0xf]
      %v278 = vld [vmem:[%s193 + $0x130] sm:$0xf]
      %v279 = vld [vmem:[%s193 + $0x134] sm:$0xf]
      %v280 = vld [vmem:[%s193 + $0x138] sm:$0xf]
      %v281 = vld [vmem:[%s193 + $0x13c] sm:$0xf]
      %v282 = vld [vmem:[%s193 + $0x140] sm:$0xf]
      %v283 = vld [vmem:[%s193 + $0x144] sm:$0xf]
      %v284 = vld [vmem:[%s193 + $0x148] sm:$0xf]
      %v285 = vld [vmem:[%s193 + $0x14c] sm:$0xf]
      %v286 = vld [vmem:[%s193 + $0x150] sm:$0xf]
      %v287 = vld [vmem:[%s193 + $0x154] sm:$0xf]
      %v288 = vld [vmem:[%s193 + $0x158] sm:$0xf]
      %v289 = vld [vmem:[%s193 + $0x15c] sm:$0xf]
      %v290 = vld [vmem:[%s193 + $0x160] sm:$0xf]
      %v291 = vld [vmem:[%s193 + $0x164] sm:$0xf]
      %v292 = vld [vmem:[%s193 + $0x168] sm:$0xf]
      %v293 = vld [vmem:[%s193 + $0x16c] sm:$0xf]
      %v294 = vld [vmem:[%s193 + $0x170] sm:$0xf]
      %v295 = vld [vmem:[%s193 + $0x174] sm:$0xf]
      %v296 = vld [vmem:[%s193 + $0x178] sm:$0xf]
      %v297 = vld [vmem:[%s193 + $0x17c] sm:$0xf]
      %v298 = vld [vmem:[%s193 + $0x180] sm:$0xf]
      %v299 = vld [vmem:[%s193 + $0x184] sm:$0xf]
      %v300 = vld [vmem:[%s193 + $0x188] sm:$0xf]
      %v301 = vld [vmem:[%s193 + $0x18c] sm:$0xf]
      %v302 = vld [vmem:[%s193 + $0x190] sm:$0xf]
      %v303 = vld [vmem:[%s193 + $0x194] sm:$0xf]
      %v304 = vld [vmem:[%s193 + $0x198] sm:$0xf]
      %v305 = vld [vmem:[%s193 + $0x19c] sm:$0xf]
      %v306 = vld [vmem:[%s193 + $0x1a0] sm:$0xf]
      %v307 = vld [vmem:[%s193 + $0x1a4] sm:$0xf]
      %v308 = vld [vmem:[%s193 + $0x1a8] sm:$0xf]
      %v309 = vld [vmem:[%s193 + $0x1ac] sm:$0xf]
      %v310 = vld [vmem:[%s193 + $0x1b0] sm:$0xf]
      %v311 = vld [vmem:[%s193 + $0x1b4] sm:$0xf]
      %v312 = vld [vmem:[%s193 + $0x1b8] sm:$0xf]
      %v313 = vld [vmem:[%s193 + $0x1bc] sm:$0xf]
      %v314 = vld [vmem:[%s193 + $0x1c0] sm:$0xf]
      %v315 = vld [vmem:[%s193 + $0x1c4] sm:$0xf]
      %v316 = vld [vmem:[%s193 + $0x1c8] sm:$0xf]
      %v317 = vld [vmem:[%s193 + $0x1cc] sm:$0xf]
      %v318 = vld [vmem:[%s193 + $0x1d0] sm:$0xf]
      %v319 = vld [vmem:[%s193 + $0x1d4] sm:$0xf]
      %v320 = vld [vmem:[%s193 + $0x1d8] sm:$0xf]
      %v321 = vld [vmem:[%s193 + $0x1dc] sm:$0xf]
      %v322 = vld [vmem:[%s193 + $0x1e0] sm:$0xf]
      %v323 = vld [vmem:[%s193 + $0x1e4] sm:$0xf]
      %v324 = vld [vmem:[%s193 + $0x1e8] sm:$0xf]
      %v325 = vld [vmem:[%s193 + $0x1ec] sm:$0xf]
      %v326 = vld [vmem:[%s193 + $0x1f0] sm:$0xf]
      %v327 = vld [vmem:[%s193 + $0x1f4] sm:$0xf]
      %v328 = vld [vmem:[%s193 + $0x1f8] sm:$0xf]
      %v329 = vld [vmem:[%s193 + $0x1fc] sm:$0xf]
      %v330 = vld [vmem:[%s193 + $0x200] sm:$0xf]
      %v331 = vld [vmem:[%s193 + $0x204] sm:$0xf]
      %v332 = vld [vmem:[%s193 + $0x208] sm:$0xf]
      %v333 = vld [vmem:[%s193 + $0x20c] sm:$0xf]
      %v334 = vld [vmem:[%s193 + $0x210] sm:$0xf]
      %v335 = vld [vmem:[%s193 + $0x214] sm:$0xf]
      %v336 = vld [vmem:[%s193 + $0x218] sm:$0xf]
      %v337 = vld [vmem:[%s193 + $0x21c] sm:$0xf]
      %v338 = vld [vmem:[%s193 + $0x220] sm:$0xf]
      %v339 = vld [vmem:[%s193 + $0x224] sm:$0xf]
      %v340 = vld [vmem:[%s193 + $0x228] sm:$0xf]
      %v341 = vld [vmem:[%s193 + $0x22c] sm:$0xf]
      %v342 = vld [vmem:[%s193 + $0x230] sm:$0xf]
      %v343 = vld [vmem:[%s193 + $0x234] sm:$0xf]
      %v344 = vld [vmem:[%s193 + $0x238] sm:$0xf]
      %v345 = vld [vmem:[%s193 + $0x23c] sm:$0xf]
      %v346 = vld [vmem:[%s193 + $0x240] sm:$0xf]
      %v347 = vld [vmem:[%s193 + $0x244] sm:$0xf]
      %v348 = vld [vmem:[%s193 + $0x248] sm:$0xf]
      %v349 = vld [vmem:[%s193 + $0x24c] sm:$0xf]
      %v350 = vld [vmem:[%s193 + $0x250] sm:$0xf]
      %v351 = vld [vmem:[%s193 + $0x254] sm:$0xf]
      %v352 = vld [vmem:[%s193 + $0x258] sm:$0xf]
      %v353 = vld [vmem:[%s193 + $0x25c] sm:$0xf]
      %v354 = vld [vmem:[%s193 + $0x260] sm:$0xf]
      %v355 = vld [vmem:[%s193 + $0x264] sm:$0xf]
      %v356 = vld [vmem:[%s193 + $0x268] sm:$0xf]
      %v357 = vld [vmem:[%s193 + $0x26c] sm:$0xf]
      %v358 = vld [vmem:[%s193 + $0x270] sm:$0xf]
      %v359 = vld [vmem:[%s193 + $0x274] sm:$0xf]
      %v360 = vld [vmem:[%s193 + $0x278] sm:$0xf]
      %v361 = vld [vmem:[%s193 + $0x27c] sm:$0xf]
      %v362 = vld [vmem:[%s193 + $0x280] sm:$0xf]
      %v363 = vld [vmem:[%s193 + $0x284] sm:$0xf]
      %v364 = vld [vmem:[%s193 + $0x288] sm:$0xf]
      %v365 = vld [vmem:[%s193 + $0x28c] sm:$0xf]
      %v366 = vld [vmem:[%s193 + $0x290] sm:$0xf]
      %v367 = vld [vmem:[%s193 + $0x294] sm:$0xf]
      %v368 = vld [vmem:[%s193 + $0x298] sm:$0xf]
      %v369 = vld [vmem:[%s193 + $0x29c] sm:$0xf]
      %v370 = vld [vmem:[%s193 + $0x2a0] sm:$0xf]
      %v371 = vld [vmem:[%s193 + $0x2a4] sm:$0xf]
      %v372 = vld [vmem:[%s193 + $0x2a8] sm:$0xf]
      %v373 = vld [vmem:[%s193 + $0x2ac] sm:$0xf]
      %v374 = vld [vmem:[%s193 + $0x2b0] sm:$0xf]
      %v375 = vld [vmem:[%s193 + $0x2b4] sm:$0xf]
      %v376 = vld [vmem:[%s193 + $0x2b8] sm:$0xf]
      %v377 = vld [vmem:[%s193 + $0x2bc] sm:$0xf]
      %v378 = vld [vmem:[%s193 + $0x2c0] sm:$0xf]
      %v379 = vld [vmem:[%s193 + $0x2c4] sm:$0xf]
      %v380 = vld [vmem:[%s193 + $0x2c8] sm:$0xf]
      %v381 = vld [vmem:[%s193 + $0x2cc] sm:$0xf]
      %v382 = vld [vmem:[%s193 + $0x2d0] sm:$0xf]
      %v383 = vld [vmem:[%s193 + $0x2d4] sm:$0xf]
      %v384 = vld [vmem:[%s193 + $0x2d8] sm:$0xf]
      %v385 = vld [vmem:[%s193 + $0x2dc] sm:$0xf]
      %v386 = vld [vmem:[%s193 + $0x2e0] sm:$0xf]
      %v387 = vld [vmem:[%s193 + $0x2e4] sm:$0xf]
      %v388 = vld [vmem:[%s193 + $0x2e8] sm:$0xf]
      %v389 = vld [vmem:[%s193 + $0x2ec] sm:$0xf]
      %v390 = vld [vmem:[%s193 + $0x2f0] sm:$0xf]
      %v391 = vld [vmem:[%s193 + $0x2f4] sm:$0xf]
      %v392 = vld [vmem:[%s193 + $0x2f8] sm:$0xf]
      %v393 = vld [vmem:[%s193 + $0x2fc] sm:$0xf]
      %v394 = vld [vmem:[%s193 + $0x300] sm:$0xf]
      %v395 = vld [vmem:[%s193 + $0x304] sm:$0xf]
      %v396 = vld [vmem:[%s193 + $0x308] sm:$0xf]
      %v397 = vld [vmem:[%s193 + $0x30c] sm:$0xf]
      %v398 = vld [vmem:[%s193 + $0x310] sm:$0xf]
      %v399 = vld [vmem:[%s193 + $0x314] sm:$0xf]
      %v400 = vld [vmem:[%s193 + $0x318] sm:$0xf]
      %v401 = vld [vmem:[%s193 + $0x31c] sm:$0xf]
      %v402 = vld [vmem:[%s193 + $0x320] sm:$0xf]
      %v403 = vld [vmem:[%s193 + $0x324] sm:$0xf]
      %v404 = vld [vmem:[%s193 + $0x328] sm:$0xf]
      %v405 = vld [vmem:[%s193 + $0x32c] sm:$0xf]
      %v406 = vld [vmem:[%s193 + $0x330] sm:$0xf]
      %v407 = vld [vmem:[%s193 + $0x334] sm:$0xf]
      %v408 = vld [vmem:[%s193 + $0x338] sm:$0xf]
      %v409 = vld [vmem:[%s193 + $0x33c] sm:$0xf]
      %v410 = vld [vmem:[%s193 + $0x340] sm:$0xf]
      %v411 = vld [vmem:[%s193 + $0x344] sm:$0xf]
      %v412 = vld [vmem:[%s193 + $0x348] sm:$0xf]
      %v413 = vld [vmem:[%s193 + $0x34c] sm:$0xf]
      %v414 = vld [vmem:[%s193 + $0x350] sm:$0xf]
      %v415 = vld [vmem:[%s193 + $0x354] sm:$0xf]
      %v416 = vld [vmem:[%s193 + $0x358] sm:$0xf]
      %v417 = vld [vmem:[%s193 + $0x35c] sm:$0xf]
      %v418 = vld [vmem:[%s193 + $0x360] sm:$0xf]
      %v419 = vld [vmem:[%s193 + $0x364] sm:$0xf]
      %v420 = vld [vmem:[%s193 + $0x368] sm:$0xf]
      %v421 = vld [vmem:[%s193 + $0x36c] sm:$0xf]
      %v422 = vld [vmem:[%s193 + $0x370] sm:$0xf]
      %v423 = vld [vmem:[%s193 + $0x374] sm:$0xf]
      %v424 = vld [vmem:[%s193 + $0x378] sm:$0xf]
      %v425 = vld [vmem:[%s193 + $0x37c] sm:$0xf]
      %v426 = vld [vmem:[%s193 + $0x380] sm:$0xf]
      %v427 = vld [vmem:[%s193 + $0x384] sm:$0xf]
      %v428 = vld [vmem:[%s193 + $0x388] sm:$0xf]
      %v429 = vld [vmem:[%s193 + $0x38c] sm:$0xf]
      %v430 = vld [vmem:[%s193 + $0x390] sm:$0xf]
      %v431 = vld [vmem:[%s193 + $0x394] sm:$0xf]
      %v432 = vld [vmem:[%s193 + $0x398] sm:$0xf]
      %v433 = vld [vmem:[%s193 + $0x39c] sm:$0xf]
      %v434 = vld [vmem:[%s193 + $0x3a0] sm:$0xf]
      %v435 = vld [vmem:[%s193 + $0x3a4] sm:$0xf]
      %v436 = vld [vmem:[%s193 + $0x3a8] sm:$0xf]
      %v437 = vld [vmem:[%s193 + $0x3ac] sm:$0xf]
      %v438 = vld [vmem:[%s193 + $0x3b0] sm:$0xf]
      %v439 = vld [vmem:[%s193 + $0x3b4] sm:$0xf]
      %v440 = vld [vmem:[%s193 + $0x3b8] sm:$0xf]
      %v441 = vld [vmem:[%s193 + $0x3bc] sm:$0xf]
      %v442 = vld [vmem:[%s193 + $0x3c0] sm:$0xf]
      %v443 = vld [vmem:[%s193 + $0x3c4] sm:$0xf]
      %v444 = vld [vmem:[%s193 + $0x3c8] sm:$0xf]
      %v445 = vld [vmem:[%s193 + $0x3cc] sm:$0xf]
      %v446 = vld [vmem:[%s193 + $0x3d0] sm:$0xf]
      %v447 = vld [vmem:[%s193 + $0x3d4] sm:$0xf]
      %v448 = vld [vmem:[%s193 + $0x3d8] sm:$0xf]
      %v449 = vld [vmem:[%s193 + $0x3dc] sm:$0xf]
      %v450 = vld [vmem:[%s193 + $0x3e0] sm:$0xf]
      %v451 = vld [vmem:[%s193 + $0x3e4] sm:$0xf]
      %v452 = vld [vmem:[%s193 + $0x3e8] sm:$0xf]
      %v453 = vld [vmem:[%s193 + $0x3ec] sm:$0xf]
      %v454 = vld [vmem:[%s193 + $0x3f0] sm:$0xf]
      %v455 = vld [vmem:[%s193 + $0x3f4] sm:$0xf]
      %v456 = vld [vmem:[%s193 + $0x3f8] sm:$0xf]
      %v457 = vld [vmem:[%s193 + $0x3fc] sm:$0xf]
      %v458 = vld [vmem:[%s193 + $0x400] sm:$0xf]
      %v459 = vld [vmem:[%s193 + $0x404] sm:$0xf]
      %v460 = vld [vmem:[%s193 + $0x408] sm:$0xf]
      %v461 = vld [vmem:[%s193 + $0x40c] sm:$0xf]
      %v462 = vld [vmem:[%s193 + $0x410] sm:$0xf]
      %v463 = vld [vmem:[%s193 + $0x414] sm:$0xf]
      %v464 = vld [vmem:[%s193 + $0x418] sm:$0xf]
      %v465 = vld [vmem:[%s193 + $0x41c] sm:$0xf]
      %v466 = vld [vmem:[%s193 + $0x420] sm:$0xf]
      %v467 = vld [vmem:[%s193 + $0x424] sm:$0xf]
      %v468 = vld [vmem:[%s193 + $0x428] sm:$0xf]
      %v469 = vld [vmem:[%s193 + $0x42c] sm:$0xf]
      %v470 = vld [vmem:[%s193 + $0x430] sm:$0xf]
      %v471 = vld [vmem:[%s193 + $0x434] sm:$0xf]
      %v472 = vld [vmem:[%s193 + $0x438] sm:$0xf]
      %v473 = vld [vmem:[%s193 + $0x43c] sm:$0xf]
      %v474 = vld [vmem:[%s193 + $0x440] sm:$0xf]
      %v475 = vld [vmem:[%s193 + $0x444] sm:$0xf]
      %v476 = vld [vmem:[%s193 + $0x448] sm:$0xf]
      %v477 = vld [vmem:[%s193 + $0x44c] sm:$0xf]
      %v478 = vld [vmem:[%s193 + $0x450] sm:$0xf]
      %v479 = vld [vmem:[%s193 + $0x454] sm:$0xf]
      %v480 = vld [vmem:[%s193 + $0x458] sm:$0xf]
      %v481 = vld [vmem:[%s193 + $0x45c] sm:$0xf]
      %v482 = vld [vmem:[%s193 + $0x460] sm:$0xf]
      %v483 = vld [vmem:[%s193 + $0x464] sm:$0xf]
      %v484 = vld [vmem:[%s193 + $0x468] sm:$0xf]
      %v485 = vld [vmem:[%s193 + $0x46c] sm:$0xf]
      %v486 = vld [vmem:[%s193 + $0x470] sm:$0xf]
      %v487 = vld [vmem:[%s193 + $0x474] sm:$0xf]
      %v488 = vld [vmem:[%s193 + $0x478] sm:$0xf]
      %v489 = vld [vmem:[%s193 + $0x47c] sm:$0xf]
      %v490 = vld [vmem:[%s193 + $0x480] sm:$0xf]
      %v491 = vld [vmem:[%s193 + $0x484] sm:$0xf]
      %v492 = vld [vmem:[%s193 + $0x488] sm:$0xf]
      %v493 = vld [vmem:[%s193 + $0x48c] sm:$0xf]
      %v494 = vld [vmem:[%s193 + $0x490] sm:$0xf]
      %v495 = vld [vmem:[%s193 + $0x494] sm:$0xf]
      %v496 = vld [vmem:[%s193 + $0x498] sm:$0xf]
      %v497 = vld [vmem:[%s193 + $0x49c] sm:$0xf]
      %v498 = vld [vmem:[%s193 + $0x4a0] sm:$0xf]
      %v499 = vld [vmem:[%s193 + $0x4a4] sm:$0xf]
      %v500 = vld [vmem:[%s193 + $0x4a8] sm:$0xf]
      %v501 = vld [vmem:[%s193 + $0x4ac] sm:$0xf]
      %v502 = vld [vmem:[%s193 + $0x4b0] sm:$0xf]
      %v503 = vld [vmem:[%s193 + $0x4b4] sm:$0xf]
      %v504 = vld [vmem:[%s193 + $0x4b8] sm:$0xf]
      %v505 = vld [vmem:[%s193 + $0x4bc] sm:$0xf]
      %v506 = vld [vmem:[%s193 + $0x4c0] sm:$0xf]
      %v507 = vld [vmem:[%s193 + $0x4c4] sm:$0xf]
      %v508 = vld [vmem:[%s193 + $0x4c8] sm:$0xf]
      %v509 = vld [vmem:[%s193 + $0x4cc] sm:$0xf]
      %v510 = vld [vmem:[%s193 + $0x4d0] sm:$0xf]
      %v511 = vld [vmem:[%s193 + $0x4d4] sm:$0xf]
      %v512 = vld [vmem:[%s193 + $0x4d8] sm:$0xf]
      %v513 = vld [vmem:[%s193 + $0x4dc] sm:$0xf]
      %v514 = vld [vmem:[%s193 + $0x4e0] sm:$0xf]
      %v515 = vld [vmem:[%s193 + $0x4e4] sm:$0xf]
      %v516 = vld [vmem:[%s193 + $0x4e8] sm:$0xf]
      %v517 = vld [vmem:[%s193 + $0x4ec] sm:$0xf]
      %v518 = vld [vmem:[%s193 + $0x4f0] sm:$0xf]
      %v519 = vld [vmem:[%s193 + $0x4f4] sm:$0xf]
      %v520 = vld [vmem:[%s193 + $0x4f8] sm:$0xf]
      %v521 = vld [vmem:[%s193 + $0x4fc] sm:$0xf]
      %v522 = vld [vmem:[%s193 + $0x500] sm:$0xf]
      %v523 = vld [vmem:[%s193 + $0x504] sm:$0xf]
      %v524 = vld [vmem:[%s193 + $0x508] sm:$0xf]
      %v525 = vld [vmem:[%s193 + $0x50c] sm:$0xf]
      %v526 = vld [vmem:[%s193 + $0x510] sm:$0xf]
      %v527 = vld [vmem:[%s193 + $0x514] sm:$0xf]
      %v528 = vld [vmem:[%s193 + $0x518] sm:$0xf]
      %v529 = vld [vmem:[%s193 + $0x51c] sm:$0xf]
      %v530 = vld [vmem:[%s193 + $0x520] sm:$0xf]
      %v531 = vld [vmem:[%s193 + $0x524] sm:$0xf]
      %v532 = vld [vmem:[%s193 + $0x528] sm:$0xf]
      %v533 = vld [vmem:[%s193 + $0x52c] sm:$0xf]
      %v534 = vld [vmem:[%s193 + $0x530] sm:$0xf]
      %v535 = vld [vmem:[%s193 + $0x534] sm:$0xf]
      %v536 = vld [vmem:[%s193 + $0x538] sm:$0xf]
      %v537 = vld [vmem:[%s193 + $0x53c] sm:$0xf]
      %v538 = vld [vmem:[%s193 + $0x540] sm:$0xf]
      %v539 = vld [vmem:[%s193 + $0x544] sm:$0xf]
      %v540 = vld [vmem:[%s193 + $0x548] sm:$0xf]
      %v541 = vld [vmem:[%s193 + $0x54c] sm:$0xf]
      %v542 = vld [vmem:[%s193 + $0x550] sm:$0xf]
      %v543 = vld [vmem:[%s193 + $0x554] sm:$0xf]
      %v544 = vld [vmem:[%s193 + $0x558] sm:$0xf]
      %v545 = vld [vmem:[%s193 + $0x55c] sm:$0xf]
      %v546 = vld [vmem:[%s193 + $0x560] sm:$0xf]
      %v547 = vld [vmem:[%s193 + $0x564] sm:$0xf]
      %v548 = vld [vmem:[%s193 + $0x568] sm:$0xf]
      %v549 = vld [vmem:[%s193 + $0x56c] sm:$0xf]
      %v550 = vld [vmem:[%s193 + $0x570] sm:$0xf]
      %v551 = vld [vmem:[%s193 + $0x574] sm:$0xf]
      %v552 = vld [vmem:[%s193 + $0x578] sm:$0xf]
      %v553 = vld [vmem:[%s193 + $0x57c] sm:$0xf]
      %v554 = vld [vmem:[%s193 + $0x580] sm:$0xf]
      %v555 = vld [vmem:[%s193 + $0x584] sm:$0xf]
      %v556 = vld [vmem:[%s193 + $0x588] sm:$0xf]
      %v557 = vld [vmem:[%s193 + $0x58c] sm:$0xf]
      %v558 = vld [vmem:[%s193 + $0x590] sm:$0xf]
      %v559 = vld [vmem:[%s193 + $0x594] sm:$0xf]
      %v560 = vld [vmem:[%s193 + $0x598] sm:$0xf]
      %v561 = vld [vmem:[%s193 + $0x59c] sm:$0xf]
      %v562 = vld [vmem:[%s193 + $0x5a0] sm:$0xf]
      %v563 = vld [vmem:[%s193 + $0x5a4] sm:$0xf]
      %v564 = vld [vmem:[%s193 + $0x5a8] sm:$0xf]
      %v565 = vld [vmem:[%s193 + $0x5ac] sm:$0xf]
      %v566 = vld [vmem:[%s193 + $0x5b0] sm:$0xf]
      %v567 = vld [vmem:[%s193 + $0x5b4] sm:$0xf]
      %v568 = vld [vmem:[%s193 + $0x5b8] sm:$0xf]
      %v569 = vld [vmem:[%s193 + $0x5bc] sm:$0xf]
      %v570 = vld [vmem:[%s193 + $0x5c0] sm:$0xf]
      %v571 = vld [vmem:[%s193 + $0x5c4] sm:$0xf]
      %v572 = vld [vmem:[%s193 + $0x5c8] sm:$0xf]
      %v573 = vld [vmem:[%s193 + $0x5cc] sm:$0xf]
      %v574 = vld [vmem:[%s193 + $0x5d0] sm:$0xf]
      %v575 = vld [vmem:[%s193 + $0x5d4] sm:$0xf]
      %v576 = vld [vmem:[%s193 + $0x5d8] sm:$0xf]
      %v577 = vld [vmem:[%s193 + $0x5dc] sm:$0xf]
      %v578 = vld [vmem:[%s193 + $0x5e0] sm:$0xf]
      %v579 = vld [vmem:[%s193 + $0x5e4] sm:$0xf]
      %v580 = vld [vmem:[%s193 + $0x5e8] sm:$0xf]
      %v581 = vld [vmem:[%s193 + $0x5ec] sm:$0xf]
      %v582 = vld [vmem:[%s193 + $0x5f0] sm:$0xf]
      %v583 = vld [vmem:[%s193 + $0x5f4] sm:$0xf]
      %v584 = vld [vmem:[%s193 + $0x5f8] sm:$0xf]
      %v585 = vld [vmem:[%s193 + $0x5fc] sm:$0xf]
      %v586 = vld [vmem:[%s193 + $0x600] sm:$0xf]
      %v587 = vld [vmem:[%s193 + $0x604] sm:$0xf]
      %v588 = vld [vmem:[%s193 + $0x608] sm:$0xf]
      %v589 = vld [vmem:[%s193 + $0x60c] sm:$0xf]
      %v590 = vld [vmem:[%s193 + $0x610] sm:$0xf]
      %v591 = vld [vmem:[%s193 + $0x614] sm:$0xf]
      %v592 = vld [vmem:[%s193 + $0x618] sm:$0xf]
      %v593 = vld [vmem:[%s193 + $0x61c] sm:$0xf]
      %v594 = vld [vmem:[%s193 + $0x620] sm:$0xf]
      %v595 = vld [vmem:[%s193 + $0x624] sm:$0xf]
      %v596 = vld [vmem:[%s193 + $0x628] sm:$0xf]
      %v597 = vld [vmem:[%s193 + $0x62c] sm:$0xf]
      %v598 = vld [vmem:[%s193 + $0x630] sm:$0xf]
      %v599 = vld [vmem:[%s193 + $0x634] sm:$0xf]
      %v600 = vld [vmem:[%s193 + $0x638] sm:$0xf]
      %v601 = vld [vmem:[%s193 + $0x63c] sm:$0xf]
      %v602 = vld [vmem:[%s193 + $0x640] sm:$0xf]
      %v603 = vld [vmem:[%s193 + $0x644] sm:$0xf]
      %v604 = vld [vmem:[%s193 + $0x648] sm:$0xf]
      %v605 = vld [vmem:[%s193 + $0x64c] sm:$0xf]
      %v606 = vld [vmem:[%s193 + $0x650] sm:$0xf]
      %v607 = vld [vmem:[%s193 + $0x654] sm:$0xf]
      %v608 = vld [vmem:[%s193 + $0x658] sm:$0xf]
      %v609 = vld [vmem:[%s193 + $0x65c] sm:$0xf]
      %v610 = vld [vmem:[%s193 + $0x660] sm:$0xf]
      %v611 = vld [vmem:[%s193 + $0x664] sm:$0xf]
      %v612 = vld [vmem:[%s193 + $0x668] sm:$0xf]
      %v613 = vld [vmem:[%s193 + $0x66c] sm:$0xf]
      %v614 = vld [vmem:[%s193 + $0x670] sm:$0xf]
      %v615 = vld [vmem:[%s193 + $0x674] sm:$0xf]
      %v616 = vld [vmem:[%s193 + $0x678] sm:$0xf]
      %v617 = vld [vmem:[%s193 + $0x67c] sm:$0xf]
      %v618 = vld [vmem:[%s193 + $0x680] sm:$0xf]
      %v619 = vld [vmem:[%s193 + $0x684] sm:$0xf]
      %v620 = vld [vmem:[%s193 + $0x688] sm:$0xf]
      %v621 = vld [vmem:[%s193 + $0x68c] sm:$0xf]
      %v622 = vld [vmem:[%s193 + $0x690] sm:$0xf]
      %v623 = vld [vmem:[%s193 + $0x694] sm:$0xf]
      %v624 = vld [vmem:[%s193 + $0x698] sm:$0xf]
      %v625 = vld [vmem:[%s193 + $0x69c] sm:$0xf]
      %v626 = vld [vmem:[%s193 + $0x6a0] sm:$0xf]
      %v627 = vld [vmem:[%s193 + $0x6a4] sm:$0xf]
      %v628 = vld [vmem:[%s193 + $0x6a8] sm:$0xf]
      %v629 = vld [vmem:[%s193 + $0x6ac] sm:$0xf]
      %v630 = vld [vmem:[%s193 + $0x6b0] sm:$0xf]
      %v631 = vld [vmem:[%s193 + $0x6b4] sm:$0xf]
      %v632 = vld [vmem:[%s193 + $0x6b8] sm:$0xf]
      %v633 = vld [vmem:[%s193 + $0x6bc] sm:$0xf]
      %v634 = vld [vmem:[%s193 + $0x6c0] sm:$0xf]
      %v635 = vld [vmem:[%s193 + $0x6c4] sm:$0xf]
      %v636 = vld [vmem:[%s193 + $0x6c8] sm:$0xf]
      %v637 = vld [vmem:[%s193 + $0x6cc] sm:$0xf]
      %v638 = vld [vmem:[%s193 + $0x6d0] sm:$0xf]
      %v639 = vld [vmem:[%s193 + $0x6d4] sm:$0xf]
      %v640 = vld [vmem:[%s193 + $0x6d8] sm:$0xf]
      %v641 = vld [vmem:[%s193 + $0x6dc] sm:$0xf]
      %v642 = vld [vmem:[%s193 + $0x6e0] sm:$0xf]
      %v643 = vld [vmem:[%s193 + $0x6e4] sm:$0xf]
      %v644 = vld [vmem:[%s193 + $0x6e8] sm:$0xf]
      %v645 = vld [vmem:[%s193 + $0x6ec] sm:$0xf]
      %v646 = vld [vmem:[%s193 + $0x6f0] sm:$0xf]
      %v647 = vld [vmem:[%s193 + $0x6f4] sm:$0xf]
      %v648 = vld [vmem:[%s193 + $0x6f8] sm:$0xf]
      %v649 = vld [vmem:[%s193 + $0x6fc] sm:$0xf]
      %v650 = vld [vmem:[%s193 + $0x700] sm:$0xf]
      %v651 = vld [vmem:[%s193 + $0x704] sm:$0xf]
      %v652 = vld [vmem:[%s193 + $0x708] sm:$0xf]
      %v653 = vld [vmem:[%s193 + $0x70c] sm:$0xf]
      %v654 = vld [vmem:[%s193 + $0x710] sm:$0xf]
      %v655 = vld [vmem:[%s193 + $0x714] sm:$0xf]
      %v656 = vld [vmem:[%s193 + $0x718] sm:$0xf]
      %v657 = vld [vmem:[%s193 + $0x71c] sm:$0xf]
      %v658 = vld [vmem:[%s193 + $0x720] sm:$0xf]
      %v659 = vld [vmem:[%s193 + $0x724] sm:$0xf]
      %v660 = vld [vmem:[%s193 + $0x728] sm:$0xf]
      %v661 = vld [vmem:[%s193 + $0x72c] sm:$0xf]
      %v662 = vld [vmem:[%s193 + $0x730] sm:$0xf]
      %v663 = vld [vmem:[%s193 + $0x734] sm:$0xf]
      %v664 = vld [vmem:[%s193 + $0x738] sm:$0xf]
      %v665 = vld [vmem:[%s193 + $0x73c] sm:$0xf]
      %v666 = vld [vmem:[%s193 + $0x740] sm:$0xf]
      %v667 = vld [vmem:[%s193 + $0x744] sm:$0xf]
      %v668 = vld [vmem:[%s193 + $0x748] sm:$0xf]
      %v669 = vld [vmem:[%s193 + $0x74c] sm:$0xf]
      %v670 = vld [vmem:[%s193 + $0x750] sm:$0xf]
      %v671 = vld [vmem:[%s193 + $0x754] sm:$0xf]
      %v672 = vld [vmem:[%s193 + $0x758] sm:$0xf]
      %v673 = vld [vmem:[%s193 + $0x75c] sm:$0xf]
      %v674 = vld [vmem:[%s193 + $0x760] sm:$0xf]
      %v675 = vld [vmem:[%s193 + $0x764] sm:$0xf]
      %v676 = vld [vmem:[%s193 + $0x768] sm:$0xf]
      %v677 = vld [vmem:[%s193 + $0x76c] sm:$0xf]
      %v678 = vld [vmem:[%s193 + $0x770] sm:$0xf]
      %v679 = vld [vmem:[%s193 + $0x774] sm:$0xf]
      %v680 = vld [vmem:[%s193 + $0x778] sm:$0xf]
      %v681 = vld [vmem:[%s193 + $0x77c] sm:$0xf]
      %v682 = vld [vmem:[%s193 + $0x780] sm:$0xf]
      %v683 = vld [vmem:[%s193 + $0x784] sm:$0xf]
      %v684 = vld [vmem:[%s193 + $0x788] sm:$0xf]
      %v685 = vld [vmem:[%s193 + $0x78c] sm:$0xf]
      %v686 = vld [vmem:[%s193 + $0x790] sm:$0xf]
      %v687 = vld [vmem:[%s193 + $0x794] sm:$0xf]
      %v688 = vld [vmem:[%s193 + $0x798] sm:$0xf]
      %v689 = vld [vmem:[%s193 + $0x79c] sm:$0xf]
      %v690 = vld [vmem:[%s193 + $0x7a0] sm:$0xf]
      %v691 = vld [vmem:[%s193 + $0x7a4] sm:$0xf]
      %v692 = vld [vmem:[%s193 + $0x7a8] sm:$0xf]
      %v693 = vld [vmem:[%s193 + $0x7ac] sm:$0xf]
      %v694 = vld [vmem:[%s193 + $0x7b0] sm:$0xf]
      %v695 = vld [vmem:[%s193 + $0x7b4] sm:$0xf]
      %v696 = vld [vmem:[%s193 + $0x7b8] sm:$0xf]
      %v697 = vld [vmem:[%s193 + $0x7bc] sm:$0xf]
      %v698 = vld [vmem:[%s193 + $0x7c0] sm:$0xf]
      %v699 = vld [vmem:[%s193 + $0x7c4] sm:$0xf]
      %v700 = vld [vmem:[%s193 + $0x7c8] sm:$0xf]
      %v701 = vld [vmem:[%s193 + $0x7cc] sm:$0xf]
      %v702 = vld [vmem:[%s193 + $0x7d0] sm:$0xf]
      %v703 = vld [vmem:[%s193 + $0x7d4] sm:$0xf]
      %v704 = vld [vmem:[%s193 + $0x7d8] sm:$0xf]
      %v705 = vld [vmem:[%s193 + $0x7dc] sm:$0xf]
      %v706 = vld [vmem:[%s193 + $0x7e0] sm:$0xf]
      %v707 = vld [vmem:[%s193 + $0x7e4] sm:$0xf]
      %v708 = vld [vmem:[%s193 + $0x7e8] sm:$0xf]
      %v709 = vld [vmem:[%s193 + $0x7ec] sm:$0xf]
      %v710 = vld [vmem:[%s193 + $0x7f0] sm:$0xf]
      %v711 = vld [vmem:[%s193 + $0x7f4] sm:$0xf]
      %v712 = vld [vmem:[%s193 + $0x7f8] sm:$0xf]
      %v713 = vld [vmem:[%s193 + $0x7fc] sm:$0xf]
      %v714 = vld [vmem:[%s1] sm:$0xf]
      %v715 = vld [vmem:[%s1 + $0x4] sm:$0xf]
      %v716 = vld [vmem:[%s1 + $0x8] sm:$0xf]
      %v717 = vld [vmem:[%s1 + $0xc] sm:$0x3]
      %v1230 = vunpack.c.l.b16 %v202
      %v1231 = vunpack.c.l.b16 %v203
      %v1232 = vunpack.c.l.b16 %v204
      %v1233 = vunpack.c.l.b16 %v205
      %v1234 = vunpack.c.l.b16 %v206
      %v1235 = vunpack.c.l.b16 %v207
      %v1236 = vunpack.c.l.b16 %v208
      %v1237 = vunpack.c.l.b16 %v209
      %v1238 = vunpack.c.l.b16 %v210
      %v1239 = vunpack.c.l.b16 %v211
      %v1240 = vunpack.c.l.b16 %v212
      %v1241 = vunpack.c.l.b16 %v213
      %v1242 = vunpack.c.l.b16 %v214
      %v1243 = vunpack.c.l.b16 %v215
      %v1244 = vunpack.c.l.b16 %v216
      %v1245 = vunpack.c.l.b16 %v217
      %v1246 = vunpack.c.l.b16 %v218
      %v1247 = vunpack.c.l.b16 %v219
      %v1248 = vunpack.c.l.b16 %v220
      %v1249 = vunpack.c.l.b16 %v221
      %v1250 = vunpack.c.l.b16 %v222
      %v1251 = vunpack.c.l.b16 %v223
      %v1252 = vunpack.c.l.b16 %v224
      %v1253 = vunpack.c.l.b16 %v225
      %v1254 = vunpack.c.l.b16 %v226
      %v1255 = vunpack.c.l.b16 %v227
      %v1256 = vunpack.c.l.b16 %v228
      %v1257 = vunpack.c.l.b16 %v229
      %v1258 = vunpack.c.l.b16 %v230
      %v1259 = vunpack.c.l.b16 %v231
      %v1260 = vunpack.c.l.b16 %v232
      %v1261 = vunpack.c.l.b16 %v233
      %v1262 = vunpack.c.l.b16 %v234
      %v1263 = vunpack.c.l.b16 %v235
      %v1264 = vunpack.c.l.b16 %v236
      %v1265 = vunpack.c.l.b16 %v237
      %v1266 = vunpack.c.l.b16 %v238
      %v1267 = vunpack.c.l.b16 %v239
      %v1268 = vunpack.c.l.b16 %v240
      %v1269 = vunpack.c.l.b16 %v241
      %v1270 = vunpack.c.l.b16 %v242
      %v1271 = vunpack.c.l.b16 %v243
      %v1272 = vunpack.c.l.b16 %v244
      %v1273 = vunpack.c.l.b16 %v245
      %v1274 = vunpack.c.l.b16 %v246
      %v1275 = vunpack.c.l.b16 %v247
      %v1276 = vunpack.c.l.b16 %v248
      %v1277 = vunpack.c.l.b16 %v249
      %v1278 = vunpack.c.l.b16 %v250
      %v1279 = vunpack.c.l.b16 %v251
      %v1280 = vunpack.c.l.b16 %v252
      %v1281 = vunpack.c.l.b16 %v253
      %v1282 = vunpack.c.l.b16 %v254
      %v1283 = vunpack.c.l.b16 %v255
      %v1284 = vunpack.c.l.b16 %v256
      %v1285 = vunpack.c.l.b16 %v257
      %v1286 = vunpack.c.l.b16 %v258
      %v1287 = vunpack.c.l.b16 %v259
      %v1288 = vunpack.c.l.b16 %v260
      %v1289 = vunpack.c.l.b16 %v261
      %v1290 = vunpack.c.l.b16 %v262
      %v1291 = vunpack.c.l.b16 %v263
      %v1292 = vunpack.c.l.b16 %v264
      %v1293 = vunpack.c.l.b16 %v265
      %v1294 = vunpack.c.l.b16 %v266
      %v1295 = vunpack.c.l.b16 %v267
      %v1296 = vunpack.c.l.b16 %v268
      %v1297 = vunpack.c.l.b16 %v269
      %v1298 = vunpack.c.l.b16 %v270
      %v1299 = vunpack.c.l.b16 %v271
      %v1300 = vunpack.c.l.b16 %v272
      %v1301 = vunpack.c.l.b16 %v273
      %v1302 = vunpack.c.l.b16 %v274
      %v1303 = vunpack.c.l.b16 %v275
      %v1304 = vunpack.c.l.b16 %v276
      %v1305 = vunpack.c.l.b16 %v277
      %v1306 = vunpack.c.l.b16 %v278
      %v1307 = vunpack.c.l.b16 %v279
      %v1308 = vunpack.c.l.b16 %v280
      %v1309 = vunpack.c.l.b16 %v281
      %v1310 = vunpack.c.l.b16 %v282
      %v1311 = vunpack.c.l.b16 %v283
      %v1312 = vunpack.c.l.b16 %v284
      %v1313 = vunpack.c.l.b16 %v285
      %v1314 = vunpack.c.l.b16 %v286
      %v1315 = vunpack.c.l.b16 %v287
      %v1316 = vunpack.c.l.b16 %v288
      %v1317 = vunpack.c.l.b16 %v289
      %v1318 = vunpack.c.l.b16 %v290
      %v1319 = vunpack.c.l.b16 %v291
      %v1320 = vunpack.c.l.b16 %v292
      %v1321 = vunpack.c.l.b16 %v293
      %v1322 = vunpack.c.l.b16 %v294
      %v1323 = vunpack.c.l.b16 %v295
      %v1324 = vunpack.c.l.b16 %v296
      %v1325 = vunpack.c.l.b16 %v297
      %v1326 = vunpack.c.l.b16 %v298
      %v1327 = vunpack.c.l.b16 %v299
      %v1328 = vunpack.c.l.b16 %v300
      %v1329 = vunpack.c.l.b16 %v301
      %v1330 = vunpack.c.l.b16 %v302
      %v1331 = vunpack.c.l.b16 %v303
      %v1332 = vunpack.c.l.b16 %v304
      %v1333 = vunpack.c.l.b16 %v305
      %v1334 = vunpack.c.l.b16 %v306
      %v1335 = vunpack.c.l.b16 %v307
      %v1336 = vunpack.c.l.b16 %v308
      %v1337 = vunpack.c.l.b16 %v309
      %v1338 = vunpack.c.l.b16 %v310
      %v1339 = vunpack.c.l.b16 %v311
      %v1340 = vunpack.c.l.b16 %v312
      %v1341 = vunpack.c.l.b16 %v313
      %v1342 = vunpack.c.l.b16 %v314
      %v1343 = vunpack.c.l.b16 %v315
      %v1344 = vunpack.c.l.b16 %v316
      %v1345 = vunpack.c.l.b16 %v317
      %v1346 = vunpack.c.l.b16 %v318
      %v1347 = vunpack.c.l.b16 %v319
      %v1348 = vunpack.c.l.b16 %v320
      %v1349 = vunpack.c.l.b16 %v321
      %v1350 = vunpack.c.l.b16 %v322
      %v1351 = vunpack.c.l.b16 %v323
      %v1352 = vunpack.c.l.b16 %v324
      %v1353 = vunpack.c.l.b16 %v325
      %v1354 = vunpack.c.l.b16 %v326
      %v1355 = vunpack.c.l.b16 %v327
      %v1356 = vunpack.c.l.b16 %v328
      %v1357 = vunpack.c.l.b16 %v329
      %v1358 = vunpack.c.l.b16 %v330
      %v1359 = vunpack.c.l.b16 %v331
      %v1360 = vunpack.c.l.b16 %v332
      %v1361 = vunpack.c.l.b16 %v333
      %v1362 = vunpack.c.l.b16 %v334
      %v1363 = vunpack.c.l.b16 %v335
      %v1364 = vunpack.c.l.b16 %v336
      %v1365 = vunpack.c.l.b16 %v337
      %v1366 = vunpack.c.l.b16 %v338
      %v1367 = vunpack.c.l.b16 %v339
      %v1368 = vunpack.c.l.b16 %v340
      %v1369 = vunpack.c.l.b16 %v341
      %v1370 = vunpack.c.l.b16 %v342
      %v1371 = vunpack.c.l.b16 %v343
      %v1372 = vunpack.c.l.b16 %v344
      %v1373 = vunpack.c.l.b16 %v345
      %v1374 = vunpack.c.l.b16 %v346
      %v1375 = vunpack.c.l.b16 %v347
      %v1376 = vunpack.c.l.b16 %v348
      %v1377 = vunpack.c.l.b16 %v349
      %v1378 = vunpack.c.l.b16 %v350
      %v1379 = vunpack.c.l.b16 %v351
      %v1380 = vunpack.c.l.b16 %v352
      %v1381 = vunpack.c.l.b16 %v353
      %v1382 = vunpack.c.l.b16 %v354
      %v1383 = vunpack.c.l.b16 %v355
      %v1384 = vunpack.c.l.b16 %v356
      %v1385 = vunpack.c.l.b16 %v357
      %v1386 = vunpack.c.l.b16 %v358
      %v1387 = vunpack.c.l.b16 %v359
      %v1388 = vunpack.c.l.b16 %v360
      %v1389 = vunpack.c.l.b16 %v361
      %v1390 = vunpack.c.l.b16 %v362
      %v1391 = vunpack.c.l.b16 %v363
      %v1392 = vunpack.c.l.b16 %v364
      %v1393 = vunpack.c.l.b16 %v365
      %v1394 = vunpack.c.l.b16 %v366
      %v1395 = vunpack.c.l.b16 %v367
      %v1396 = vunpack.c.l.b16 %v368
      %v1397 = vunpack.c.l.b16 %v369
      %v1398 = vunpack.c.l.b16 %v370
      %v1399 = vunpack.c.l.b16 %v371
      %v1400 = vunpack.c.l.b16 %v372
      %v1401 = vunpack.c.l.b16 %v373
      %v1402 = vunpack.c.l.b16 %v374
      %v1403 = vunpack.c.l.b16 %v375
      %v1404 = vunpack.c.l.b16 %v376
      %v1405 = vunpack.c.l.b16 %v377
      %v1406 = vunpack.c.l.b16 %v378
      %v1407 = vunpack.c.l.b16 %v379
      %v1408 = vunpack.c.l.b16 %v380
      %v1409 = vunpack.c.l.b16 %v381
      %v1410 = vunpack.c.l.b16 %v382
      %v1411 = vunpack.c.l.b16 %v383
      %v1412 = vunpack.c.l.b16 %v384
      %v1413 = vunpack.c.l.b16 %v385
      %v1414 = vunpack.c.l.b16 %v386
      %v1415 = vunpack.c.l.b16 %v387
      %v1416 = vunpack.c.l.b16 %v388
      %v1417 = vunpack.c.l.b16 %v389
      %v1418 = vunpack.c.l.b16 %v390
      %v1419 = vunpack.c.l.b16 %v391
      %v1420 = vunpack.c.l.b16 %v392
      %v1421 = vunpack.c.l.b16 %v393
      %v1422 = vunpack.c.l.b16 %v394
      %v1423 = vunpack.c.l.b16 %v395
      %v1424 = vunpack.c.l.b16 %v396
      %v1425 = vunpack.c.l.b16 %v397
      %v1426 = vunpack.c.l.b16 %v398
      %v1427 = vunpack.c.l.b16 %v399
      %v1428 = vunpack.c.l.b16 %v400
      %v1429 = vunpack.c.l.b16 %v401
      %v1430 = vunpack.c.l.b16 %v402
      %v1431 = vunpack.c.l.b16 %v403
      %v1432 = vunpack.c.l.b16 %v404
      %v1433 = vunpack.c.l.b16 %v405
      %v1434 = vunpack.c.l.b16 %v406
      %v1435 = vunpack.c.l.b16 %v407
      %v1436 = vunpack.c.l.b16 %v408
      %v1437 = vunpack.c.l.b16 %v409
      %v1438 = vunpack.c.l.b16 %v410
      %v1439 = vunpack.c.l.b16 %v411
      %v1440 = vunpack.c.l.b16 %v412
      %v1441 = vunpack.c.l.b16 %v413
      %v1442 = vunpack.c.l.b16 %v414
      %v1443 = vunpack.c.l.b16 %v415
      %v1444 = vunpack.c.l.b16 %v416
      %v1445 = vunpack.c.l.b16 %v417
      %v1446 = vunpack.c.l.b16 %v418
      %v1447 = vunpack.c.l.b16 %v419
      %v1448 = vunpack.c.l.b16 %v420
      %v1449 = vunpack.c.l.b16 %v421
      %v1450 = vunpack.c.l.b16 %v422
      %v1451 = vunpack.c.l.b16 %v423
      %v1452 = vunpack.c.l.b16 %v424
      %v1453 = vunpack.c.l.b16 %v425
      %v1454 = vunpack.c.l.b16 %v426
      %v1455 = vunpack.c.l.b16 %v427
      %v1456 = vunpack.c.l.b16 %v428
      %v1457 = vunpack.c.l.b16 %v429
      %v1458 = vunpack.c.l.b16 %v430
      %v1459 = vunpack.c.l.b16 %v431
      %v1460 = vunpack.c.l.b16 %v432
      %v1461 = vunpack.c.l.b16 %v433
      %v1462 = vunpack.c.l.b16 %v434
      %v1463 = vunpack.c.l.b16 %v435
      %v1464 = vunpack.c.l.b16 %v436
      %v1465 = vunpack.c.l.b16 %v437
      %v1466 = vunpack.c.l.b16 %v438
      %v1467 = vunpack.c.l.b16 %v439
      %v1468 = vunpack.c.l.b16 %v440
      %v1469 = vunpack.c.l.b16 %v441
      %v1470 = vunpack.c.l.b16 %v442
      %v1471 = vunpack.c.l.b16 %v443
      %v1472 = vunpack.c.l.b16 %v444
      %v1473 = vunpack.c.l.b16 %v445
      %v1474 = vunpack.c.l.b16 %v446
      %v1475 = vunpack.c.l.b16 %v447
      %v1476 = vunpack.c.l.b16 %v448
      %v1477 = vunpack.c.l.b16 %v449
      %v1478 = vunpack.c.l.b16 %v450
      %v1479 = vunpack.c.l.b16 %v451
      %v1480 = vunpack.c.l.b16 %v452
      %v1481 = vunpack.c.l.b16 %v453
      %v1482 = vunpack.c.l.b16 %v454
      %v1483 = vunpack.c.l.b16 %v455
      %v1484 = vunpack.c.l.b16 %v456
      %v1485 = vunpack.c.l.b16 %v457
      %v1486 = vunpack.c.l.b16 %v458
      %v1487 = vunpack.c.l.b16 %v459
      %v1488 = vunpack.c.l.b16 %v460
      %v1489 = vunpack.c.l.b16 %v461
      %v1490 = vunpack.c.l.b16 %v462
      %v1491 = vunpack.c.l.b16 %v463
      %v1492 = vunpack.c.l.b16 %v464
      %v1493 = vunpack.c.l.b16 %v465
      %v1494 = vunpack.c.l.b16 %v466
      %v1495 = vunpack.c.l.b16 %v467
      %v1496 = vunpack.c.l.b16 %v468
      %v1497 = vunpack.c.l.b16 %v469
      %v1498 = vunpack.c.l.b16 %v470
      %v1499 = vunpack.c.l.b16 %v471
      %v1500 = vunpack.c.l.b16 %v472
      %v1501 = vunpack.c.l.b16 %v473
      %v1502 = vunpack.c.l.b16 %v474
      %v1503 = vunpack.c.l.b16 %v475
      %v1504 = vunpack.c.l.b16 %v476
      %v1505 = vunpack.c.l.b16 %v477
      %v1506 = vunpack.c.l.b16 %v478
      %v1507 = vunpack.c.l.b16 %v479
      %v1508 = vunpack.c.l.b16 %v480
      %v1509 = vunpack.c.l.b16 %v481
      %v1510 = vunpack.c.l.b16 %v482
      %v1511 = vunpack.c.l.b16 %v483
      %v1512 = vunpack.c.l.b16 %v484
      %v1513 = vunpack.c.l.b16 %v485
      %v1514 = vunpack.c.l.b16 %v486
      %v1515 = vunpack.c.l.b16 %v487
      %v1516 = vunpack.c.l.b16 %v488
      %v1517 = vunpack.c.l.b16 %v489
      %v1518 = vunpack.c.l.b16 %v490
      %v1519 = vunpack.c.l.b16 %v491
      %v1520 = vunpack.c.l.b16 %v492
      %v1521 = vunpack.c.l.b16 %v493
      %v1522 = vunpack.c.l.b16 %v494
      %v1523 = vunpack.c.l.b16 %v495
      %v1524 = vunpack.c.l.b16 %v496
      %v1525 = vunpack.c.l.b16 %v497
      %v1526 = vunpack.c.l.b16 %v498
      %v1527 = vunpack.c.l.b16 %v499
      %v1528 = vunpack.c.l.b16 %v500
      %v1529 = vunpack.c.l.b16 %v501
      %v1530 = vunpack.c.l.b16 %v502
      %v1531 = vunpack.c.l.b16 %v503
      %v1532 = vunpack.c.l.b16 %v504
      %v1533 = vunpack.c.l.b16 %v505
      %v1534 = vunpack.c.l.b16 %v506
      %v1535 = vunpack.c.l.b16 %v507
      %v1536 = vunpack.c.l.b16 %v508
      %v1537 = vunpack.c.l.b16 %v509
      %v1538 = vunpack.c.l.b16 %v510
      %v1539 = vunpack.c.l.b16 %v511
      %v1540 = vunpack.c.l.b16 %v512
      %v1541 = vunpack.c.l.b16 %v513
      %v1542 = vunpack.c.l.b16 %v514
      %v1543 = vunpack.c.l.b16 %v515
      %v1544 = vunpack.c.l.b16 %v516
      %v1545 = vunpack.c.l.b16 %v517
      %v1546 = vunpack.c.l.b16 %v518
      %v1547 = vunpack.c.l.b16 %v519
      %v1548 = vunpack.c.l.b16 %v520
      %v1549 = vunpack.c.l.b16 %v521
      %v1550 = vunpack.c.l.b16 %v522
      %v1551 = vunpack.c.l.b16 %v523
      %v1552 = vunpack.c.l.b16 %v524
      %v1553 = vunpack.c.l.b16 %v525
      %v1554 = vunpack.c.l.b16 %v526
      %v1555 = vunpack.c.l.b16 %v527
      %v1556 = vunpack.c.l.b16 %v528
      %v1557 = vunpack.c.l.b16 %v529
      %v1558 = vunpack.c.l.b16 %v530
      %v1559 = vunpack.c.l.b16 %v531
      %v1560 = vunpack.c.l.b16 %v532
      %v1561 = vunpack.c.l.b16 %v533
      %v1562 = vunpack.c.l.b16 %v534
      %v1563 = vunpack.c.l.b16 %v535
      %v1564 = vunpack.c.l.b16 %v536
      %v1565 = vunpack.c.l.b16 %v537
      %v1566 = vunpack.c.l.b16 %v538
      %v1567 = vunpack.c.l.b16 %v539
      %v1568 = vunpack.c.l.b16 %v540
      %v1569 = vunpack.c.l.b16 %v541
      %v1570 = vunpack.c.l.b16 %v542
      %v1571 = vunpack.c.l.b16 %v543
      %v1572 = vunpack.c.l.b16 %v544
      %v1573 = vunpack.c.l.b16 %v545
      %v1574 = vunpack.c.l.b16 %v546
      %v1575 = vunpack.c.l.b16 %v547
      %v1576 = vunpack.c.l.b16 %v548
      %v1577 = vunpack.c.l.b16 %v549
      %v1578 = vunpack.c.l.b16 %v550
      %v1579 = vunpack.c.l.b16 %v551
      %v1580 = vunpack.c.l.b16 %v552
      %v1581 = vunpack.c.l.b16 %v553
      %v1582 = vunpack.c.l.b16 %v554
      %v1583 = vunpack.c.l.b16 %v555
      %v1584 = vunpack.c.l.b16 %v556
      %v1585 = vunpack.c.l.b16 %v557
      %v1586 = vunpack.c.l.b16 %v558
      %v1587 = vunpack.c.l.b16 %v559
      %v1588 = vunpack.c.l.b16 %v560
      %v1589 = vunpack.c.l.b16 %v561
      %v1590 = vunpack.c.l.b16 %v562
      %v1591 = vunpack.c.l.b16 %v563
      %v1592 = vunpack.c.l.b16 %v564
      %v1593 = vunpack.c.l.b16 %v565
      %v1594 = vunpack.c.l.b16 %v566
      %v1595 = vunpack.c.l.b16 %v567
      %v1596 = vunpack.c.l.b16 %v568
      %v1597 = vunpack.c.l.b16 %v569
      %v1598 = vunpack.c.l.b16 %v570
      %v1599 = vunpack.c.l.b16 %v571
      %v1600 = vunpack.c.l.b16 %v572
      %v1601 = vunpack.c.l.b16 %v573
      %v1602 = vunpack.c.l.b16 %v574
      %v1603 = vunpack.c.l.b16 %v575
      %v1604 = vunpack.c.l.b16 %v576
      %v1605 = vunpack.c.l.b16 %v577
      %v1606 = vunpack.c.l.b16 %v578
      %v1607 = vunpack.c.l.b16 %v579
      %v1608 = vunpack.c.l.b16 %v580
      %v1609 = vunpack.c.l.b16 %v581
      %v1610 = vunpack.c.l.b16 %v582
      %v1611 = vunpack.c.l.b16 %v583
      %v1612 = vunpack.c.l.b16 %v584
      %v1613 = vunpack.c.l.b16 %v585
      %v1614 = vunpack.c.l.b16 %v586
      %v1615 = vunpack.c.l.b16 %v587
      %v1616 = vunpack.c.l.b16 %v588
      %v1617 = vunpack.c.l.b16 %v589
      %v1618 = vunpack.c.l.b16 %v590
      %v1619 = vunpack.c.l.b16 %v591
      %v1620 = vunpack.c.l.b16 %v592
      %v1621 = vunpack.c.l.b16 %v593
      %v1622 = vunpack.c.l.b16 %v594
      %v1623 = vunpack.c.l.b16 %v595
      %v1624 = vunpack.c.l.b16 %v596
      %v1625 = vunpack.c.l.b16 %v597
      %v1626 = vunpack.c.l.b16 %v598
      %v1627 = vunpack.c.l.b16 %v599
      %v1628 = vunpack.c.l.b16 %v600
      %v1629 = vunpack.c.l.b16 %v601
      %v1630 = vunpack.c.l.b16 %v602
      %v1631 = vunpack.c.l.b16 %v603
      %v1632 = vunpack.c.l.b16 %v604
      %v1633 = vunpack.c.l.b16 %v605
      %v1634 = vunpack.c.l.b16 %v606
      %v1635 = vunpack.c.l.b16 %v607
      %v1636 = vunpack.c.l.b16 %v608
      %v1637 = vunpack.c.l.b16 %v609
      %v1638 = vunpack.c.l.b16 %v610
      %v1639 = vunpack.c.l.b16 %v611
      %v1640 = vunpack.c.l.b16 %v612
      %v1641 = vunpack.c.l.b16 %v613
      %v1642 = vunpack.c.l.b16 %v614
      %v1643 = vunpack.c.l.b16 %v615
      %v1644 = vunpack.c.l.b16 %v616
      %v1645 = vunpack.c.l.b16 %v617
      %v1646 = vunpack.c.l.b16 %v618
      %v1647 = vunpack.c.l.b16 %v619
      %v1648 = vunpack.c.l.b16 %v620
      %v1649 = vunpack.c.l.b16 %v621
      %v1650 = vunpack.c.l.b16 %v622
      %v1651 = vunpack.c.l.b16 %v623
      %v1652 = vunpack.c.l.b16 %v624
      %v1653 = vunpack.c.l.b16 %v625
      %v1654 = vunpack.c.l.b16 %v626
      %v1655 = vunpack.c.l.b16 %v627
      %v1656 = vunpack.c.l.b16 %v628
      %v1657 = vunpack.c.l.b16 %v629
      %v1658 = vunpack.c.l.b16 %v630
      %v1659 = vunpack.c.l.b16 %v631
      %v1660 = vunpack.c.l.b16 %v632
      %v1661 = vunpack.c.l.b16 %v633
      %v1662 = vunpack.c.l.b16 %v634
      %v1663 = vunpack.c.l.b16 %v635
      %v1664 = vunpack.c.l.b16 %v636
      %v1665 = vunpack.c.l.b16 %v637
      %v1666 = vunpack.c.l.b16 %v638
      %v1667 = vunpack.c.l.b16 %v639
      %v1668 = vunpack.c.l.b16 %v640
      %v1669 = vunpack.c.l.b16 %v641
      %v1670 = vunpack.c.l.b16 %v642
      %v1671 = vunpack.c.l.b16 %v643
      %v1672 = vunpack.c.l.b16 %v644
      %v1673 = vunpack.c.l.b16 %v645
      %v1674 = vunpack.c.l.b16 %v646
      %v1675 = vunpack.c.l.b16 %v647
      %v1676 = vunpack.c.l.b16 %v648
      %v1677 = vunpack.c.l.b16 %v649
      %v1678 = vunpack.c.l.b16 %v650
      %v1679 = vunpack.c.l.b16 %v651
      %v1680 = vunpack.c.l.b16 %v652
      %v1681 = vunpack.c.l.b16 %v653
      %v1682 = vunpack.c.l.b16 %v654
      %v1683 = vunpack.c.l.b16 %v655
      %v1684 = vunpack.c.l.b16 %v656
      %v1685 = vunpack.c.l.b16 %v657
      %v1686 = vunpack.c.l.b16 %v658
      %v1687 = vunpack.c.l.b16 %v659
      %v1688 = vunpack.c.l.b16 %v660
      %v1689 = vunpack.c.l.b16 %v661
      %v1690 = vunpack.c.l.b16 %v662
      %v1691 = vunpack.c.l.b16 %v663
      %v1692 = vunpack.c.l.b16 %v664
      %v1693 = vunpack.c.l.b16 %v665
      %v1694 = vunpack.c.l.b16 %v666
      %v1695 = vunpack.c.l.b16 %v667
      %v1696 = vunpack.c.l.b16 %v668
      %v1697 = vunpack.c.l.b16 %v669
      %v1698 = vunpack.c.l.b16 %v670
      %v1699 = vunpack.c.l.b16 %v671
      %v1700 = vunpack.c.l.b16 %v672
      %v1701 = vunpack.c.l.b16 %v673
      %v1702 = vunpack.c.l.b16 %v674
      %v1703 = vunpack.c.l.b16 %v675
      %v1704 = vunpack.c.l.b16 %v676
      %v1705 = vunpack.c.l.b16 %v677
      %v1706 = vunpack.c.l.b16 %v678
      %v1707 = vunpack.c.l.b16 %v679
      %v1708 = vunpack.c.l.b16 %v680
      %v1709 = vunpack.c.l.b16 %v681
      %v1710 = vunpack.c.l.b16 %v682
      %v1711 = vunpack.c.l.b16 %v683
      %v1712 = vunpack.c.l.b16 %v684
      %v1713 = vunpack.c.l.b16 %v685
      %v1714 = vunpack.c.l.b16 %v686
      %v1715 = vunpack.c.l.b16 %v687
      %v1716 = vunpack.c.l.b16 %v688
      %v1717 = vunpack.c.l.b16 %v689
      %v1718 = vunpack.c.l.b16 %v690
      %v1719 = vunpack.c.l.b16 %v691
      %v1720 = vunpack.c.l.b16 %v692
      %v1721 = vunpack.c.l.b16 %v693
      %v1722 = vunpack.c.l.b16 %v694
      %v1723 = vunpack.c.l.b16 %v695
      %v1724 = vunpack.c.l.b16 %v696
      %v1725 = vunpack.c.l.b16 %v697
      %v1726 = vunpack.c.l.b16 %v698
      %v1727 = vunpack.c.l.b16 %v699
      %v1728 = vunpack.c.l.b16 %v700
      %v1729 = vunpack.c.l.b16 %v701
      %v1730 = vunpack.c.l.b16 %v702
      %v1731 = vunpack.c.l.b16 %v703
      %v1732 = vunpack.c.l.b16 %v704
      %v1733 = vunpack.c.l.b16 %v705
      %v1734 = vunpack.c.l.b16 %v706
      %v1735 = vunpack.c.l.b16 %v707
      %v1736 = vunpack.c.l.b16 %v708
      %v1737 = vunpack.c.l.b16 %v709
      %v1738 = vunpack.c.l.b16 %v710
      %v1739 = vunpack.c.l.b16 %v711
      %v1740 = vunpack.c.l.b16 %v712
      %v1741 = vunpack.c.l.b16 %v713
      %v1742 = vpack.c.b16 %v1231, %v1230
      %v1743 = vpack.c.b16 %v1233, %v1232
      %v1744 = vpack.c.b16 %v1235, %v1234
      %v1745 = vpack.c.b16 %v1237, %v1236
      %v1746 = vpack.c.b16 %v1239, %v1238
      %v1747 = vpack.c.b16 %v1241, %v1240
      %v1748 = vpack.c.b16 %v1243, %v1242
      %v1749 = vpack.c.b16 %v1245, %v1244
      %v1750 = vpack.c.b16 %v1247, %v1246
      %v1751 = vpack.c.b16 %v1249, %v1248
      %v1752 = vpack.c.b16 %v1251, %v1250
      %v1753 = vpack.c.b16 %v1253, %v1252
      %v1754 = vpack.c.b16 %v1255, %v1254
      %v1755 = vpack.c.b16 %v1257, %v1256
      %v1756 = vpack.c.b16 %v1259, %v1258
      %v1757 = vpack.c.b16 %v1261, %v1260
      %v1758 = vpack.c.b16 %v1263, %v1262
      %v1759 = vpack.c.b16 %v1265, %v1264
      %v1760 = vpack.c.b16 %v1267, %v1266
      %v1761 = vpack.c.b16 %v1269, %v1268
      %v1762 = vpack.c.b16 %v1271, %v1270
      %v1763 = vpack.c.b16 %v1273, %v1272
      %v1764 = vpack.c.b16 %v1275, %v1274
      %v1765 = vpack.c.b16 %v1277, %v1276
      %v1766 = vpack.c.b16 %v1279, %v1278
      %v1767 = vpack.c.b16 %v1281, %v1280
      %v1768 = vpack.c.b16 %v1283, %v1282
      %v1769 = vpack.c.b16 %v1285, %v1284
      %v1770 = vpack.c.b16 %v1287, %v1286
      %v1771 = vpack.c.b16 %v1289, %v1288
      %v1772 = vpack.c.b16 %v1291, %v1290
      %v1773 = vpack.c.b16 %v1293, %v1292
      %v1774 = vpack.c.b16 %v1295, %v1294
      %v1775 = vpack.c.b16 %v1297, %v1296
      %v1776 = vpack.c.b16 %v1299, %v1298
      %v1777 = vpack.c.b16 %v1301, %v1300
      %v1778 = vpack.c.b16 %v1303, %v1302
      %v1779 = vpack.c.b16 %v1305, %v1304
      %v1780 = vpack.c.b16 %v1307, %v1306
      %v1781 = vpack.c.b16 %v1309, %v1308
      %v1782 = vpack.c.b16 %v1311, %v1310
      %v1783 = vpack.c.b16 %v1313, %v1312
      %v1784 = vpack.c.b16 %v1315, %v1314
      %v1785 = vpack.c.b16 %v1317, %v1316
      %v1786 = vpack.c.b16 %v1319, %v1318
      %v1787 = vpack.c.b16 %v1321, %v1320
      %v1788 = vpack.c.b16 %v1323, %v1322
      %v1789 = vpack.c.b16 %v1325, %v1324
      %v1790 = vpack.c.b16 %v1327, %v1326
      %v1791 = vpack.c.b16 %v1329, %v1328
      %v1792 = vpack.c.b16 %v1331, %v1330
      %v1793 = vpack.c.b16 %v1333, %v1332
      %v1794 = vpack.c.b16 %v1335, %v1334
      %v1795 = vpack.c.b16 %v1337, %v1336
      %v1796 = vpack.c.b16 %v1339, %v1338
      %v1797 = vpack.c.b16 %v1341, %v1340
      %v1798 = vpack.c.b16 %v1343, %v1342
      %v1799 = vpack.c.b16 %v1345, %v1344
      %v1800 = vpack.c.b16 %v1347, %v1346
      %v1801 = vpack.c.b16 %v1349, %v1348
      %v1802 = vpack.c.b16 %v1351, %v1350
      %v1803 = vpack.c.b16 %v1353, %v1352
      %v1804 = vpack.c.b16 %v1355, %v1354
      %v1805 = vpack.c.b16 %v1357, %v1356
      %v1806 = vpack.c.b16 %v1359, %v1358
      %v1807 = vpack.c.b16 %v1361, %v1360
      %v1808 = vpack.c.b16 %v1363, %v1362
      %v1809 = vpack.c.b16 %v1365, %v1364
      %v1810 = vpack.c.b16 %v1367, %v1366
      %v1811 = vpack.c.b16 %v1369, %v1368
      %v1812 = vpack.c.b16 %v1371, %v1370
      %v1813 = vpack.c.b16 %v1373, %v1372
      %v1814 = vpack.c.b16 %v1375, %v1374
      %v1815 = vpack.c.b16 %v1377, %v1376
      %v1816 = vpack.c.b16 %v1379, %v1378
      %v1817 = vpack.c.b16 %v1381, %v1380
      %v1818 = vpack.c.b16 %v1383, %v1382
      %v1819 = vpack.c.b16 %v1385, %v1384
      %v1820 = vpack.c.b16 %v1387, %v1386
      %v1821 = vpack.c.b16 %v1389, %v1388
      %v1822 = vpack.c.b16 %v1391, %v1390
      %v1823 = vpack.c.b16 %v1393, %v1392
      %v1824 = vpack.c.b16 %v1395, %v1394
      %v1825 = vpack.c.b16 %v1397, %v1396
      %v1826 = vpack.c.b16 %v1399, %v1398
      %v1827 = vpack.c.b16 %v1401, %v1400
      %v1828 = vpack.c.b16 %v1403, %v1402
      %v1829 = vpack.c.b16 %v1405, %v1404
      %v1830 = vpack.c.b16 %v1407, %v1406
      %v1831 = vpack.c.b16 %v1409, %v1408
      %v1832 = vpack.c.b16 %v1411, %v1410
      %v1833 = vpack.c.b16 %v1413, %v1412
      %v1834 = vpack.c.b16 %v1415, %v1414
      %v1835 = vpack.c.b16 %v1417, %v1416
      %v1836 = vpack.c.b16 %v1419, %v1418
      %v1837 = vpack.c.b16 %v1421, %v1420
      %v1838 = vpack.c.b16 %v1423, %v1422
      %v1839 = vpack.c.b16 %v1425, %v1424
      %v1840 = vpack.c.b16 %v1427, %v1426
      %v1841 = vpack.c.b16 %v1429, %v1428
      %v1842 = vpack.c.b16 %v1431, %v1430
      %v1843 = vpack.c.b16 %v1433, %v1432
      %v1844 = vpack.c.b16 %v1435, %v1434
      %v1845 = vpack.c.b16 %v1437, %v1436
      %v1846 = vpack.c.b16 %v1439, %v1438
      %v1847 = vpack.c.b16 %v1441, %v1440
      %v1848 = vpack.c.b16 %v1443, %v1442
      %v1849 = vpack.c.b16 %v1445, %v1444
      %v1850 = vpack.c.b16 %v1447, %v1446
      %v1851 = vpack.c.b16 %v1449, %v1448
      %v1852 = vpack.c.b16 %v1451, %v1450
      %v1853 = vpack.c.b16 %v1453, %v1452
      %v1854 = vpack.c.b16 %v1455, %v1454
      %v1855 = vpack.c.b16 %v1457, %v1456
      %v1856 = vpack.c.b16 %v1459, %v1458
      %v1857 = vpack.c.b16 %v1461, %v1460
      %v1858 = vpack.c.b16 %v1463, %v1462
      %v1859 = vpack.c.b16 %v1465, %v1464
      %v1860 = vpack.c.b16 %v1467, %v1466
      %v1861 = vpack.c.b16 %v1469, %v1468
      %v1862 = vpack.c.b16 %v1471, %v1470
      %v1863 = vpack.c.b16 %v1473, %v1472
      %v1864 = vpack.c.b16 %v1475, %v1474
      %v1865 = vpack.c.b16 %v1477, %v1476
      %v1866 = vpack.c.b16 %v1479, %v1478
      %v1867 = vpack.c.b16 %v1481, %v1480
      %v1868 = vpack.c.b16 %v1483, %v1482
      %v1869 = vpack.c.b16 %v1485, %v1484
      %v1870 = vpack.c.b16 %v1487, %v1486
      %v1871 = vpack.c.b16 %v1489, %v1488
      %v1872 = vpack.c.b16 %v1491, %v1490
      %v1873 = vpack.c.b16 %v1493, %v1492
      %v1874 = vpack.c.b16 %v1495, %v1494
      %v1875 = vpack.c.b16 %v1497, %v1496
      %v1876 = vpack.c.b16 %v1499, %v1498
      %v1877 = vpack.c.b16 %v1501, %v1500
      %v1878 = vpack.c.b16 %v1503, %v1502
      %v1879 = vpack.c.b16 %v1505, %v1504
      %v1880 = vpack.c.b16 %v1507, %v1506
      %v1881 = vpack.c.b16 %v1509, %v1508
      %v1882 = vpack.c.b16 %v1511, %v1510
      %v1883 = vpack.c.b16 %v1513, %v1512
      %v1884 = vpack.c.b16 %v1515, %v1514
      %v1885 = vpack.c.b16 %v1517, %v1516
      %v1886 = vpack.c.b16 %v1519, %v1518
      %v1887 = vpack.c.b16 %v1521, %v1520
      %v1888 = vpack.c.b16 %v1523, %v1522
      %v1889 = vpack.c.b16 %v1525, %v1524
      %v1890 = vpack.c.b16 %v1527, %v1526
      %v1891 = vpack.c.b16 %v1529, %v1528
      %v1892 = vpack.c.b16 %v1531, %v1530
      %v1893 = vpack.c.b16 %v1533, %v1532
      %v1894 = vpack.c.b16 %v1535, %v1534
      %v1895 = vpack.c.b16 %v1537, %v1536
      %v1896 = vpack.c.b16 %v1539, %v1538
      %v1897 = vpack.c.b16 %v1541, %v1540
      %v1898 = vpack.c.b16 %v1543, %v1542
      %v1899 = vpack.c.b16 %v1545, %v1544
      %v1900 = vpack.c.b16 %v1547, %v1546
      %v1901 = vpack.c.b16 %v1549, %v1548
      %v1902 = vpack.c.b16 %v1551, %v1550
      %v1903 = vpack.c.b16 %v1553, %v1552
      %v1904 = vpack.c.b16 %v1555, %v1554
      %v1905 = vpack.c.b16 %v1557, %v1556
      %v1906 = vpack.c.b16 %v1559, %v1558
      %v1907 = vpack.c.b16 %v1561, %v1560
      %v1908 = vpack.c.b16 %v1563, %v1562
      %v1909 = vpack.c.b16 %v1565, %v1564
      %v1910 = vpack.c.b16 %v1567, %v1566
      %v1911 = vpack.c.b16 %v1569, %v1568
      %v1912 = vpack.c.b16 %v1571, %v1570
      %v1913 = vpack.c.b16 %v1573, %v1572
      %v1914 = vpack.c.b16 %v1575, %v1574
      %v1915 = vpack.c.b16 %v1577, %v1576
      %v1916 = vpack.c.b16 %v1579, %v1578
      %v1917 = vpack.c.b16 %v1581, %v1580
      %v1918 = vpack.c.b16 %v1583, %v1582
      %v1919 = vpack.c.b16 %v1585, %v1584
      %v1920 = vpack.c.b16 %v1587, %v1586
      %v1921 = vpack.c.b16 %v1589, %v1588
      %v1922 = vpack.c.b16 %v1591, %v1590
      %v1923 = vpack.c.b16 %v1593, %v1592
      %v1924 = vpack.c.b16 %v1595, %v1594
      %v1925 = vpack.c.b16 %v1597, %v1596
      %v1926 = vpack.c.b16 %v1599, %v1598
      %v1927 = vpack.c.b16 %v1601, %v1600
      %v1928 = vpack.c.b16 %v1603, %v1602
      %v1929 = vpack.c.b16 %v1605, %v1604
      %v1930 = vpack.c.b16 %v1607, %v1606
      %v1931 = vpack.c.b16 %v1609, %v1608
      %v1932 = vpack.c.b16 %v1611, %v1610
      %v1933 = vpack.c.b16 %v1613, %v1612
      %v1934 = vpack.c.b16 %v1615, %v1614
      %v1935 = vpack.c.b16 %v1617, %v1616
      %v1936 = vpack.c.b16 %v1619, %v1618
      %v1937 = vpack.c.b16 %v1621, %v1620
      %v1938 = vpack.c.b16 %v1623, %v1622
      %v1939 = vpack.c.b16 %v1625, %v1624
      %v1940 = vpack.c.b16 %v1627, %v1626
      %v1941 = vpack.c.b16 %v1629, %v1628
      %v1942 = vpack.c.b16 %v1631, %v1630
      %v1943 = vpack.c.b16 %v1633, %v1632
      %v1944 = vpack.c.b16 %v1635, %v1634
      %v1945 = vpack.c.b16 %v1637, %v1636
      %v1946 = vpack.c.b16 %v1639, %v1638
      %v1947 = vpack.c.b16 %v1641, %v1640
      %v1948 = vpack.c.b16 %v1643, %v1642
      %v1949 = vpack.c.b16 %v1645, %v1644
      %v1950 = vpack.c.b16 %v1647, %v1646
      %v1951 = vpack.c.b16 %v1649, %v1648
      %v1952 = vpack.c.b16 %v1651, %v1650
      %v1953 = vpack.c.b16 %v1653, %v1652
      %v1954 = vpack.c.b16 %v1655, %v1654
      %v1955 = vpack.c.b16 %v1657, %v1656
      %v1956 = vpack.c.b16 %v1659, %v1658
      %v1957 = vpack.c.b16 %v1661, %v1660
      %v1958 = vpack.c.b16 %v1663, %v1662
      %v1959 = vpack.c.b16 %v1665, %v1664
      %v1960 = vpack.c.b16 %v1667, %v1666
      %v1961 = vpack.c.b16 %v1669, %v1668
      %v1962 = vpack.c.b16 %v1671, %v1670
      %v1963 = vpack.c.b16 %v1673, %v1672
      %v1964 = vpack.c.b16 %v1675, %v1674
      %v1965 = vpack.c.b16 %v1677, %v1676
      %v1966 = vpack.c.b16 %v1679, %v1678
      %v1967 = vpack.c.b16 %v1681, %v1680
      %v1968 = vpack.c.b16 %v1683, %v1682
      %v1969 = vpack.c.b16 %v1685, %v1684
      %v1970 = vpack.c.b16 %v1687, %v1686
      %v1971 = vpack.c.b16 %v1689, %v1688
      %v1972 = vpack.c.b16 %v1691, %v1690
      %v1973 = vpack.c.b16 %v1693, %v1692
      %v1974 = vpack.c.b16 %v1695, %v1694
      %v1975 = vpack.c.b16 %v1697, %v1696
      %v1976 = vpack.c.b16 %v1699, %v1698
      %v1977 = vpack.c.b16 %v1701, %v1700
      %v1978 = vpack.c.b16 %v1703, %v1702
      %v1979 = vpack.c.b16 %v1705, %v1704
      %v1980 = vpack.c.b16 %v1707, %v1706
      %v1981 = vpack.c.b16 %v1709, %v1708
      %v1982 = vpack.c.b16 %v1711, %v1710
      %v1983 = vpack.c.b16 %v1713, %v1712
      %v1984 = vpack.c.b16 %v1715, %v1714
      %v1985 = vpack.c.b16 %v1717, %v1716
      %v1986 = vpack.c.b16 %v1719, %v1718
      %v1987 = vpack.c.b16 %v1721, %v1720
      %v1988 = vpack.c.b16 %v1723, %v1722
      %v1989 = vpack.c.b16 %v1725, %v1724
      %v1990 = vpack.c.b16 %v1727, %v1726
      %v1991 = vpack.c.b16 %v1729, %v1728
      %v1992 = vpack.c.b16 %v1731, %v1730
      %v1993 = vpack.c.b16 %v1733, %v1732
      %v1994 = vpack.c.b16 %v1735, %v1734
      %v1995 = vpack.c.b16 %v1737, %v1736
      %v1996 = vpack.c.b16 %v1739, %v1738
      %v1997 = vpack.c.b16 %v1741, %v1740
      %v2002 = vunpack.c.l.b16 %v714
      %v2003 = vunpack.c.l.b16 %v715
      %v2004 = vunpack.c.l.b16 %v716
      %v2005 = vunpack.c.l.b16 %v717
      %v2006 = vpack.c.b16 %v2003, %v2002
      %v2007 = vpack.c.b16 %v2005, %v2004
      %vm2009 = vcmask 220160
      %v2011 = vsel %vm2009, %v1742, 0
      %v2014 = vsel %vm2009, %v1743, 0
      %v2017 = vsel %vm2009, %v1744, 0
      %v2020 = vsel %vm2009, %v1745, 0
      %v2023 = vsel %vm2009, %v1746, 0
      %v2026 = vsel %vm2009, %v1747, 0
      %v2029 = vsel %vm2009, %v1748, 0
      %v2032 = vsel %vm2009, %v1749, 0
      %v2035 = vsel %vm2009, %v1750, 0
      %v2038 = vsel %vm2009, %v1751, 0
      %v2041 = vsel %vm2009, %v1752, 0
      %v2044 = vsel %vm2009, %v1753, 0
      %v2047 = vsel %vm2009, %v1754, 0
      %v2050 = vsel %vm2009, %v1755, 0
      %v2053 = vsel %vm2009, %v1756, 0
      %v2056 = vsel %vm2009, %v1757, 0
      %v2059 = vsel %vm2009, %v1758, 0
      %v2062 = vsel %vm2009, %v1759, 0
      %v2065 = vsel %vm2009, %v1760, 0
      %v2068 = vsel %vm2009, %v1761, 0
      %v2071 = vsel %vm2009, %v1762, 0
      %v2074 = vsel %vm2009, %v1763, 0
      %v2077 = vsel %vm2009, %v1764, 0
      %v2080 = vsel %vm2009, %v1765, 0
      %v2083 = vsel %vm2009, %v1766, 0
      %v2086 = vsel %vm2009, %v1767, 0
      %v2089 = vsel %vm2009, %v1768, 0
      %v2092 = vsel %vm2009, %v1769, 0
      %v2095 = vsel %vm2009, %v1770, 0
      %v2098 = vsel %vm2009, %v1771, 0
      %v2101 = vsel %vm2009, %v1772, 0
      %v2104 = vsel %vm2009, %v1773, 0
      %v2107 = vsel %vm2009, %v1774, 0
      %v2110 = vsel %vm2009, %v1775, 0
      %v2113 = vsel %vm2009, %v1776, 0
      %v2116 = vsel %vm2009, %v1777, 0
      %v2119 = vsel %vm2009, %v1778, 0
      %v2122 = vsel %vm2009, %v1779, 0
      %v2125 = vsel %vm2009, %v1780, 0
      %v2128 = vsel %vm2009, %v1781, 0
      %v2131 = vsel %vm2009, %v1782, 0
      %v2134 = vsel %vm2009, %v1783, 0
      %v2137 = vsel %vm2009, %v1784, 0
      %v2140 = vsel %vm2009, %v1785, 0
      %v2143 = vsel %vm2009, %v1786, 0
      %v2146 = vsel %vm2009, %v1787, 0
      %v2149 = vsel %vm2009, %v1788, 0
      %v2152 = vsel %vm2009, %v1789, 0
      %v2155 = vsel %vm2009, %v1790, 0
      %v2158 = vsel %vm2009, %v1791, 0
      %v2161 = vsel %vm2009, %v1792, 0
      %v2164 = vsel %vm2009, %v1793, 0
      %v2167 = vsel %vm2009, %v1794, 0
      %v2170 = vsel %vm2009, %v1795, 0
      %v2173 = vsel %vm2009, %v1796, 0
      %v2176 = vsel %vm2009, %v1797, 0
      %v2179 = vsel %vm2009, %v1798, 0
      %v2182 = vsel %vm2009, %v1799, 0
      %v2185 = vsel %vm2009, %v1800, 0
      %v2188 = vsel %vm2009, %v1801, 0
      %v2191 = vsel %vm2009, %v1802, 0
      %v2194 = vsel %vm2009, %v1803, 0
      %v2197 = vsel %vm2009, %v1804, 0
      %v2200 = vsel %vm2009, %v1805, 0
      %v2203 = vsel %vm2009, %v1806, 0
      %v2206 = vsel %vm2009, %v1807, 0
      %v2209 = vsel %vm2009, %v1808, 0
      %v2212 = vsel %vm2009, %v1809, 0
      %v2215 = vsel %vm2009, %v1810, 0
      %v2218 = vsel %vm2009, %v1811, 0
      %v2221 = vsel %vm2009, %v1812, 0
      %v2224 = vsel %vm2009, %v1813, 0
      %v2227 = vsel %vm2009, %v1814, 0
      %v2230 = vsel %vm2009, %v1815, 0
      %v2233 = vsel %vm2009, %v1816, 0
      %v2236 = vsel %vm2009, %v1817, 0
      %v2239 = vsel %vm2009, %v1818, 0
      %v2242 = vsel %vm2009, %v1819, 0
      %v2245 = vsel %vm2009, %v1820, 0
      %v2248 = vsel %vm2009, %v1821, 0
      %v2251 = vsel %vm2009, %v1822, 0
      %v2254 = vsel %vm2009, %v1823, 0
      %v2257 = vsel %vm2009, %v1824, 0
      %v2260 = vsel %vm2009, %v1825, 0
      %v2263 = vsel %vm2009, %v1826, 0
      %v2266 = vsel %vm2009, %v1827, 0
      %v2269 = vsel %vm2009, %v1828, 0
      %v2272 = vsel %vm2009, %v1829, 0
      %v2275 = vsel %vm2009, %v1830, 0
      %v2278 = vsel %vm2009, %v1831, 0
      %v2281 = vsel %vm2009, %v1832, 0
      %v2284 = vsel %vm2009, %v1833, 0
      %v2287 = vsel %vm2009, %v1834, 0
      %v2290 = vsel %vm2009, %v1835, 0
      %v2293 = vsel %vm2009, %v1836, 0
      %v2296 = vsel %vm2009, %v1837, 0
      %v2299 = vsel %vm2009, %v1838, 0
      %v2302 = vsel %vm2009, %v1839, 0
      %v2305 = vsel %vm2009, %v1840, 0
      %v2308 = vsel %vm2009, %v1841, 0
      %v2311 = vsel %vm2009, %v1842, 0
      %v2314 = vsel %vm2009, %v1843, 0
      %v2317 = vsel %vm2009, %v1844, 0
      %v2320 = vsel %vm2009, %v1845, 0
      %v2323 = vsel %vm2009, %v1846, 0
      %v2326 = vsel %vm2009, %v1847, 0
      %v2329 = vsel %vm2009, %v1848, 0
      %v2332 = vsel %vm2009, %v1849, 0
      %v2335 = vsel %vm2009, %v1850, 0
      %v2338 = vsel %vm2009, %v1851, 0
      %v2341 = vsel %vm2009, %v1852, 0
      %v2344 = vsel %vm2009, %v1853, 0
      %v2347 = vsel %vm2009, %v1854, 0
      %v2350 = vsel %vm2009, %v1855, 0
      %v2353 = vsel %vm2009, %v1856, 0
      %v2356 = vsel %vm2009, %v1857, 0
      %v2359 = vsel %vm2009, %v1858, 0
      %v2362 = vsel %vm2009, %v1859, 0
      %v2365 = vsel %vm2009, %v1860, 0
      %v2368 = vsel %vm2009, %v1861, 0
      %v2371 = vsel %vm2009, %v1862, 0
      %v2374 = vsel %vm2009, %v1863, 0
      %v2377 = vsel %vm2009, %v1864, 0
      %v2380 = vsel %vm2009, %v1865, 0
      %v2383 = vsel %vm2009, %v1866, 0
      %v2386 = vsel %vm2009, %v1867, 0
      %v2389 = vsel %vm2009, %v1868, 0
      %v2392 = vsel %vm2009, %v1869, 0
      %v2395 = vsel %vm2009, %v1870, 0
      %v2398 = vsel %vm2009, %v1871, 0
      %v2401 = vsel %vm2009, %v1872, 0
      %v2404 = vsel %vm2009, %v1873, 0
      %v2407 = vsel %vm2009, %v1874, 0
      %v2410 = vsel %vm2009, %v1875, 0
      %v2413 = vsel %vm2009, %v1876, 0
      %v2416 = vsel %vm2009, %v1877, 0
      %v2419 = vsel %vm2009, %v1878, 0
      %v2422 = vsel %vm2009, %v1879, 0
      %v2425 = vsel %vm2009, %v1880, 0
      %v2428 = vsel %vm2009, %v1881, 0
      %v2431 = vsel %vm2009, %v1882, 0
      %v2434 = vsel %vm2009, %v1883, 0
      %v2437 = vsel %vm2009, %v1884, 0
      %v2440 = vsel %vm2009, %v1885, 0
      %v2443 = vsel %vm2009, %v1886, 0
      %v2446 = vsel %vm2009, %v1887, 0
      %v2449 = vsel %vm2009, %v1888, 0
      %v2452 = vsel %vm2009, %v1889, 0
      %v2455 = vsel %vm2009, %v1890, 0
      %v2458 = vsel %vm2009, %v1891, 0
      %v2461 = vsel %vm2009, %v1892, 0
      %v2464 = vsel %vm2009, %v1893, 0
      %v2467 = vsel %vm2009, %v1894, 0
      %v2470 = vsel %vm2009, %v1895, 0
      %v2473 = vsel %vm2009, %v1896, 0
      %v2476 = vsel %vm2009, %v1897, 0
      %v2479 = vsel %vm2009, %v1898, 0
      %v2482 = vsel %vm2009, %v1899, 0
      %v2485 = vsel %vm2009, %v1900, 0
      %v2488 = vsel %vm2009, %v1901, 0
      %v2491 = vsel %vm2009, %v1902, 0
      %v2494 = vsel %vm2009, %v1903, 0
      %v2497 = vsel %vm2009, %v1904, 0
      %v2500 = vsel %vm2009, %v1905, 0
      %v2503 = vsel %vm2009, %v1906, 0
      %v2506 = vsel %vm2009, %v1907, 0
      %v2509 = vsel %vm2009, %v1908, 0
      %v2512 = vsel %vm2009, %v1909, 0
      %v2515 = vsel %vm2009, %v1910, 0
      %v2518 = vsel %vm2009, %v1911, 0
      %v2521 = vsel %vm2009, %v1912, 0
      %v2524 = vsel %vm2009, %v1913, 0
      %v2527 = vsel %vm2009, %v1914, 0
      %v2530 = vsel %vm2009, %v1915, 0
      %v2533 = vsel %vm2009, %v1916, 0
      %v2536 = vsel %vm2009, %v1917, 0
      %v2539 = vsel %vm2009, %v1918, 0
      %v2542 = vsel %vm2009, %v1919, 0
      %v2545 = vsel %vm2009, %v1920, 0
      %v2548 = vsel %vm2009, %v1921, 0
      %v2551 = vsel %vm2009, %v1922, 0
      %v2554 = vsel %vm2009, %v1923, 0
      %v2557 = vsel %vm2009, %v1924, 0
      %v2560 = vsel %vm2009, %v1925, 0
      %v2563 = vsel %vm2009, %v1926, 0
      %v2566 = vsel %vm2009, %v1927, 0
      %v2569 = vsel %vm2009, %v1928, 0
      %v2572 = vsel %vm2009, %v1929, 0
      %v2575 = vsel %vm2009, %v1930, 0
      %v2578 = vsel %vm2009, %v1931, 0
      %v2581 = vsel %vm2009, %v1932, 0
      %v2584 = vsel %vm2009, %v1933, 0
      %v2587 = vsel %vm2009, %v1934, 0
      %v2590 = vsel %vm2009, %v1935, 0
      %v2593 = vsel %vm2009, %v1936, 0
      %v2596 = vsel %vm2009, %v1937, 0
      %v2599 = vsel %vm2009, %v1938, 0
      %v2602 = vsel %vm2009, %v1939, 0
      %v2605 = vsel %vm2009, %v1940, 0
      %v2608 = vsel %vm2009, %v1941, 0
      %v2611 = vsel %vm2009, %v1942, 0
      %v2614 = vsel %vm2009, %v1943, 0
      %v2617 = vsel %vm2009, %v1944, 0
      %v2620 = vsel %vm2009, %v1945, 0
      %v2623 = vsel %vm2009, %v1946, 0
      %v2626 = vsel %vm2009, %v1947, 0
      %v2629 = vsel %vm2009, %v1948, 0
      %v2632 = vsel %vm2009, %v1949, 0
      %v2635 = vsel %vm2009, %v1950, 0
      %v2638 = vsel %vm2009, %v1951, 0
      %v2641 = vsel %vm2009, %v1952, 0
      %v2644 = vsel %vm2009, %v1953, 0
      %v2647 = vsel %vm2009, %v1954, 0
      %v2650 = vsel %vm2009, %v1955, 0
      %v2653 = vsel %vm2009, %v1956, 0
      %v2656 = vsel %vm2009, %v1957, 0
      %v2659 = vsel %vm2009, %v1958, 0
      %v2662 = vsel %vm2009, %v1959, 0
      %v2665 = vsel %vm2009, %v1960, 0
      %v2668 = vsel %vm2009, %v1961, 0
      %v2671 = vsel %vm2009, %v1962, 0
      %v2674 = vsel %vm2009, %v1963, 0
      %v2677 = vsel %vm2009, %v1964, 0
      %v2680 = vsel %vm2009, %v1965, 0
      %v2683 = vsel %vm2009, %v1966, 0
      %v2686 = vsel %vm2009, %v1967, 0
      %v2689 = vsel %vm2009, %v1968, 0
      %v2692 = vsel %vm2009, %v1969, 0
      %v2695 = vsel %vm2009, %v1970, 0
      %v2698 = vsel %vm2009, %v1971, 0
      %v2701 = vsel %vm2009, %v1972, 0
      %v2704 = vsel %vm2009, %v1973, 0
      %v2707 = vsel %vm2009, %v1974, 0
      %v2710 = vsel %vm2009, %v1975, 0
      %v2713 = vsel %vm2009, %v1976, 0
      %v2716 = vsel %vm2009, %v1977, 0
      %v2719 = vsel %vm2009, %v1978, 0
      %v2722 = vsel %vm2009, %v1979, 0
      %v2725 = vsel %vm2009, %v1980, 0
      %v2728 = vsel %vm2009, %v1981, 0
      %v2731 = vsel %vm2009, %v1982, 0
      %v2734 = vsel %vm2009, %v1983, 0
      %v2737 = vsel %vm2009, %v1984, 0
      %v2740 = vsel %vm2009, %v1985, 0
      %v2743 = vsel %vm2009, %v1986, 0
      %v2746 = vsel %vm2009, %v1987, 0
      %v2749 = vsel %vm2009, %v1988, 0
      %v2752 = vsel %vm2009, %v1989, 0
      %v2755 = vsel %vm2009, %v1990, 0
      %v2758 = vsel %vm2009, %v1991, 0
      %v2761 = vsel %vm2009, %v1992, 0
      %v2764 = vsel %vm2009, %v1993, 0
      %v2767 = vsel %vm2009, %v1994, 0
      %v2770 = vsel %vm2009, %v1995, 0
      %v2773 = vsel %vm2009, %v1996, 0
      %v2776 = vsel %vm2009, %v1997, 0
      %vm2778 = vcmask 1044480
      %vm2779 = vcmask 1045504
      %v2780 = vsel %vm2778, 4294967295, 65535
      %v2781 = vsel %vm2779, %v2780, 0
      %v2783 = vand.u32 %v2007, %v2781
      %2785 = vmatpush.bf16.msra.mxu0 0
      %2786 = vmatpush.bf16.msra.mxu0 0
      %2787 = vmatpush.bf16.msra.mxu0 0
      %2788 = vmatpush.bf16.msra.mxu0 0
      %2789 = vmatpush.bf16.msra.mxu0 0
      %2790 = vmatpush.bf16.msra.mxu0 0
      %2791 = vmatpush.bf16.msra.mxu0 %v2783
      %2792 = vmatpush.bf16.msra.mxu0 %v2006
      %2793 = vmatmul.bf16.gmra.mxu0 %v2011
      %v2794 = vpop.f32.mrf.mxu0
      %v2795 = vadd.f32 0.0, %v2794
      %v2796 = vpop.f32.mrf.mxu0
      %v2797 = vadd.f32 0.0, %v2796
      %2798 = vmatmul.bf16.gmra.mxu0 %v2014
      %v2799 = vpop.f32.mrf.mxu0
      %v2800 = vadd.f32 0.0, %v2799
      %v2801 = vpop.f32.mrf.mxu0
      %v2802 = vadd.f32 0.0, %v2801
      %2803 = vmatmul.bf16.gmra.mxu0 %v2017
      %v2804 = vpop.f32.mrf.mxu0
      %v2805 = vadd.f32 0.0, %v2804
      %v2806 = vpop.f32.mrf.mxu0
      %v2807 = vadd.f32 0.0, %v2806
      %2808 = vmatmul.bf16.gmra.mxu0 %v2020
      %v2809 = vpop.f32.mrf.mxu0
      %v2810 = vadd.f32 0.0, %v2809
      %v2811 = vpop.f32.mrf.mxu0
      %v2812 = vadd.f32 0.0, %v2811
      %2813 = vmatmul.bf16.gmra.mxu0 %v2023
      %v2814 = vpop.f32.mrf.mxu0
      %v2815 = vadd.f32 0.0, %v2814
      %v2816 = vpop.f32.mrf.mxu0
      %v2817 = vadd.f32 0.0, %v2816
      %2818 = vmatmul.bf16.gmra.mxu0 %v2026
      %v2819 = vpop.f32.mrf.mxu0
      %v2820 = vadd.f32 0.0, %v2819
      %v2821 = vpop.f32.mrf.mxu0
      %v2822 = vadd.f32 0.0, %v2821
      %2823 = vmatmul.bf16.gmra.mxu0 %v2029
      %v2824 = vpop.f32.mrf.mxu0
      %v2825 = vadd.f32 0.0, %v2824
      %v2826 = vpop.f32.mrf.mxu0
      %v2827 = vadd.f32 0.0, %v2826
      %2828 = vmatmul.bf16.gmra.mxu0 %v2032
      %v2829 = vpop.f32.mrf.mxu0
      %v2830 = vadd.f32 0.0, %v2829
      %v2831 = vpop.f32.mrf.mxu0
      %v2832 = vadd.f32 0.0, %v2831
      %2833 = vmatmul.bf16.gmra.mxu0 %v2035
      %v2834 = vpop.f32.mrf.mxu0
      %v2835 = vadd.f32 0.0, %v2834
      %v2836 = vpop.f32.mrf.mxu0
      %v2837 = vadd.f32 0.0, %v2836
      %2838 = vmatmul.bf16.gmra.mxu0 %v2038
      %v2839 = vpop.f32.mrf.mxu0
      %v2840 = vadd.f32 0.0, %v2839
      %v2841 = vpop.f32.mrf.mxu0
      %v2842 = vadd.f32 0.0, %v2841
      %2843 = vmatmul.bf16.gmra.mxu0 %v2041
      %v2844 = vpop.f32.mrf.mxu0
      %v2845 = vadd.f32 0.0, %v2844
      %v2846 = vpop.f32.mrf.mxu0
      %v2847 = vadd.f32 0.0, %v2846
      %2848 = vmatmul.bf16.gmra.mxu0 %v2044
      %v2849 = vpop.f32.mrf.mxu0
      %v2850 = vadd.f32 0.0, %v2849
      %v2851 = vpop.f32.mrf.mxu0
      %v2852 = vadd.f32 0.0, %v2851
      %2853 = vmatmul.bf16.gmra.mxu0 %v2047
      %v2854 = vpop.f32.mrf.mxu0
      %v2855 = vadd.f32 0.0, %v2854
      %v2856 = vpop.f32.mrf.mxu0
      %v2857 = vadd.f32 0.0, %v2856
      %2858 = vmatmul.bf16.gmra.mxu0 %v2050
      %v2859 = vpop.f32.mrf.mxu0
      %v2860 = vadd.f32 0.0, %v2859
      %v2861 = vpop.f32.mrf.mxu0
      %v2862 = vadd.f32 0.0, %v2861
      %2863 = vmatmul.bf16.gmra.mxu0 %v2053
      %v2864 = vpop.f32.mrf.mxu0
      %v2865 = vadd.f32 0.0, %v2864
      %v2866 = vpop.f32.mrf.mxu0
      %v2867 = vadd.f32 0.0, %v2866
      %2868 = vmatmul.bf16.gmra.mxu0 %v2056
      %v2869 = vpop.f32.mrf.mxu0
      %v2870 = vadd.f32 0.0, %v2869
      %v2871 = vpop.f32.mrf.mxu0
      %v2872 = vadd.f32 0.0, %v2871
      %2873 = vmatmul.bf16.gmra.mxu0 %v2059
      %v2874 = vpop.f32.mrf.mxu0
      %v2875 = vadd.f32 0.0, %v2874
      %v2876 = vpop.f32.mrf.mxu0
      %v2877 = vadd.f32 0.0, %v2876
      %2878 = vmatmul.bf16.gmra.mxu0 %v2062
      %v2879 = vpop.f32.mrf.mxu0
      %v2880 = vadd.f32 0.0, %v2879
      %v2881 = vpop.f32.mrf.mxu0
      %v2882 = vadd.f32 0.0, %v2881
      %2883 = vmatmul.bf16.gmra.mxu0 %v2065
      %v2884 = vpop.f32.mrf.mxu0
      %v2885 = vadd.f32 0.0, %v2884
      %v2886 = vpop.f32.mrf.mxu0
      %v2887 = vadd.f32 0.0, %v2886
      %2888 = vmatmul.bf16.gmra.mxu0 %v2068
      %v2889 = vpop.f32.mrf.mxu0
      %v2890 = vadd.f32 0.0, %v2889
      %v2891 = vpop.f32.mrf.mxu0
      %v2892 = vadd.f32 0.0, %v2891
      %2893 = vmatmul.bf16.gmra.mxu0 %v2071
      %v2894 = vpop.f32.mrf.mxu0
      %v2895 = vadd.f32 0.0, %v2894
      %v2896 = vpop.f32.mrf.mxu0
      %v2897 = vadd.f32 0.0, %v2896
      %2898 = vmatmul.bf16.gmra.mxu0 %v2074
      %v2899 = vpop.f32.mrf.mxu0
      %v2900 = vadd.f32 0.0, %v2899
      %v2901 = vpop.f32.mrf.mxu0
      %v2902 = vadd.f32 0.0, %v2901
      %2903 = vmatmul.bf16.gmra.mxu0 %v2077
      %v2904 = vpop.f32.mrf.mxu0
      %v2905 = vadd.f32 0.0, %v2904
      %v2906 = vpop.f32.mrf.mxu0
      %v2907 = vadd.f32 0.0, %v2906
      %2908 = vmatmul.bf16.gmra.mxu0 %v2080
      %v2909 = vpop.f32.mrf.mxu0
      %v2910 = vadd.f32 0.0, %v2909
      %v2911 = vpop.f32.mrf.mxu0
      %v2912 = vadd.f32 0.0, %v2911
      %2913 = vmatmul.bf16.gmra.mxu0 %v2083
      %v2914 = vpop.f32.mrf.mxu0
      %v2915 = vadd.f32 0.0, %v2914
      %v2916 = vpop.f32.mrf.mxu0
      %v2917 = vadd.f32 0.0, %v2916
      %2918 = vmatmul.bf16.gmra.mxu0 %v2086
      %v2919 = vpop.f32.mrf.mxu0
      %v2920 = vadd.f32 0.0, %v2919
      %v2921 = vpop.f32.mrf.mxu0
      %v2922 = vadd.f32 0.0, %v2921
      %2923 = vmatmul.bf16.gmra.mxu0 %v2089
      %v2924 = vpop.f32.mrf.mxu0
      %v2925 = vadd.f32 0.0, %v2924
      %v2926 = vpop.f32.mrf.mxu0
      %v2927 = vadd.f32 0.0, %v2926
      %2928 = vmatmul.bf16.gmra.mxu0 %v2092
      %v2929 = vpop.f32.mrf.mxu0
      %v2930 = vadd.f32 0.0, %v2929
      %v2931 = vpop.f32.mrf.mxu0
      %v2932 = vadd.f32 0.0, %v2931
      %2933 = vmatmul.bf16.gmra.mxu0 %v2095
      %v2934 = vpop.f32.mrf.mxu0
      %v2935 = vadd.f32 0.0, %v2934
      %v2936 = vpop.f32.mrf.mxu0
      %v2937 = vadd.f32 0.0, %v2936
      %2938 = vmatmul.bf16.gmra.mxu0 %v2098
      %v2939 = vpop.f32.mrf.mxu0
      %v2940 = vadd.f32 0.0, %v2939
      %v2941 = vpop.f32.mrf.mxu0
      %v2942 = vadd.f32 0.0, %v2941
      %2943 = vmatmul.bf16.gmra.mxu0 %v2101
      %v2944 = vpop.f32.mrf.mxu0
      %v2945 = vadd.f32 0.0, %v2944
      %v2946 = vpop.f32.mrf.mxu0
      %v2947 = vadd.f32 0.0, %v2946
      %2948 = vmatmul.bf16.gmra.mxu0 %v2104
      %v2949 = vpop.f32.mrf.mxu0
      %v2950 = vadd.f32 0.0, %v2949
      %v2951 = vpop.f32.mrf.mxu0
      %v2952 = vadd.f32 0.0, %v2951
      %2953 = vmatmul.bf16.gmra.mxu0 %v2107
      %v2954 = vpop.f32.mrf.mxu0
      %v2955 = vadd.f32 0.0, %v2954
      %v2956 = vpop.f32.mrf.mxu0
      %v2957 = vadd.f32 0.0, %v2956
      %2958 = vmatmul.bf16.gmra.mxu0 %v2110
      %v2959 = vpop.f32.mrf.mxu0
      %v2960 = vadd.f32 0.0, %v2959
      %v2961 = vpop.f32.mrf.mxu0
      %v2962 = vadd.f32 0.0, %v2961
      %2963 = vmatmul.bf16.gmra.mxu0 %v2113
      %v2964 = vpop.f32.mrf.mxu0
      %v2965 = vadd.f32 0.0, %v2964
      %v2966 = vpop.f32.mrf.mxu0
      %v2967 = vadd.f32 0.0, %v2966
      %2968 = vmatmul.bf16.gmra.mxu0 %v2116
      %v2969 = vpop.f32.mrf.mxu0
      %v2970 = vadd.f32 0.0, %v2969
      %v2971 = vpop.f32.mrf.mxu0
      %v2972 = vadd.f32 0.0, %v2971
      %2973 = vmatmul.bf16.gmra.mxu0 %v2119
      %v2974 = vpop.f32.mrf.mxu0
      %v2975 = vadd.f32 0.0, %v2974
      %v2976 = vpop.f32.mrf.mxu0
      %v2977 = vadd.f32 0.0, %v2976
      %2978 = vmatmul.bf16.gmra.mxu0 %v2122
      %v2979 = vpop.f32.mrf.mxu0
      %v2980 = vadd.f32 0.0, %v2979
      %v2981 = vpop.f32.mrf.mxu0
      %v2982 = vadd.f32 0.0, %v2981
      %2983 = vmatmul.bf16.gmra.mxu0 %v2125
      %v2984 = vpop.f32.mrf.mxu0
      %v2985 = vadd.f32 0.0, %v2984
      %v2986 = vpop.f32.mrf.mxu0
      %v2987 = vadd.f32 0.0, %v2986
      %2988 = vmatmul.bf16.gmra.mxu0 %v2128
      %v2989 = vpop.f32.mrf.mxu0
      %v2990 = vadd.f32 0.0, %v2989
      %v2991 = vpop.f32.mrf.mxu0
      %v2992 = vadd.f32 0.0, %v2991
      %2993 = vmatmul.bf16.gmra.mxu0 %v2131
      %v2994 = vpop.f32.mrf.mxu0
      %v2995 = vadd.f32 0.0, %v2994
      %v2996 = vpop.f32.mrf.mxu0
      %v2997 = vadd.f32 0.0, %v2996
      %2998 = vmatmul.bf16.gmra.mxu0 %v2134
      %v2999 = vpop.f32.mrf.mxu0
      %v3000 = vadd.f32 0.0, %v2999
      %v3001 = vpop.f32.mrf.mxu0
      %v3002 = vadd.f32 0.0, %v3001
      %3003 = vmatmul.bf16.gmra.mxu0 %v2137
      %v3004 = vpop.f32.mrf.mxu0
      %v3005 = vadd.f32 0.0, %v3004
      %v3006 = vpop.f32.mrf.mxu0
      %v3007 = vadd.f32 0.0, %v3006
      %3008 = vmatmul.bf16.gmra.mxu0 %v2140
      %v3009 = vpop.f32.mrf.mxu0
      %v3010 = vadd.f32 0.0, %v3009
      %v3011 = vpop.f32.mrf.mxu0
      %v3012 = vadd.f32 0.0, %v3011
      %3013 = vmatmul.bf16.gmra.mxu0 %v2143
      %v3014 = vpop.f32.mrf.mxu0
      %v3015 = vadd.f32 0.0, %v3014
      %v3016 = vpop.f32.mrf.mxu0
      %v3017 = vadd.f32 0.0, %v3016
      %3018 = vmatmul.bf16.gmra.mxu0 %v2146
      %v3019 = vpop.f32.mrf.mxu0
      %v3020 = vadd.f32 0.0, %v3019
      %v3021 = vpop.f32.mrf.mxu0
      %v3022 = vadd.f32 0.0, %v3021
      %3023 = vmatmul.bf16.gmra.mxu0 %v2149
      %v3024 = vpop.f32.mrf.mxu0
      %v3025 = vadd.f32 0.0, %v3024
      %v3026 = vpop.f32.mrf.mxu0
      %v3027 = vadd.f32 0.0, %v3026
      %3028 = vmatmul.bf16.gmra.mxu0 %v2152
      %v3029 = vpop.f32.mrf.mxu0
      %v3030 = vadd.f32 0.0, %v3029
      %v3031 = vpop.f32.mrf.mxu0
      %v3032 = vadd.f32 0.0, %v3031
      %3033 = vmatmul.bf16.gmra.mxu0 %v2155
      %v3034 = vpop.f32.mrf.mxu0
      %v3035 = vadd.f32 0.0, %v3034
      %v3036 = vpop.f32.mrf.mxu0
      %v3037 = vadd.f32 0.0, %v3036
      %3038 = vmatmul.bf16.gmra.mxu0 %v2158
      %v3039 = vpop.f32.mrf.mxu0
      %v3040 = vadd.f32 0.0, %v3039
      %v3041 = vpop.f32.mrf.mxu0
      %v3042 = vadd.f32 0.0, %v3041
      %3043 = vmatmul.bf16.gmra.mxu0 %v2161
      %v3044 = vpop.f32.mrf.mxu0
      %v3045 = vadd.f32 0.0, %v3044
      %v3046 = vpop.f32.mrf.mxu0
      %v3047 = vadd.f32 0.0, %v3046
      %3048 = vmatmul.bf16.gmra.mxu0 %v2164
      %v3049 = vpop.f32.mrf.mxu0
      %v3050 = vadd.f32 0.0, %v3049
      %v3051 = vpop.f32.mrf.mxu0
      %v3052 = vadd.f32 0.0, %v3051
      %3053 = vmatmul.bf16.gmra.mxu0 %v2167
      %v3054 = vpop.f32.mrf.mxu0
      %v3055 = vadd.f32 0.0, %v3054
      %v3056 = vpop.f32.mrf.mxu0
      %v3057 = vadd.f32 0.0, %v3056
      %3058 = vmatmul.bf16.gmra.mxu0 %v2170
      %v3059 = vpop.f32.mrf.mxu0
      %v3060 = vadd.f32 0.0, %v3059
      %v3061 = vpop.f32.mrf.mxu0
      %v3062 = vadd.f32 0.0, %v3061
      %3063 = vmatmul.bf16.gmra.mxu0 %v2173
      %v3064 = vpop.f32.mrf.mxu0
      %v3065 = vadd.f32 0.0, %v3064
      %v3066 = vpop.f32.mrf.mxu0
      %v3067 = vadd.f32 0.0, %v3066
      %3068 = vmatmul.bf16.gmra.mxu0 %v2176
      %v3069 = vpop.f32.mrf.mxu0
      %v3070 = vadd.f32 0.0, %v3069
      %v3071 = vpop.f32.mrf.mxu0
      %v3072 = vadd.f32 0.0, %v3071
      %3073 = vmatmul.bf16.gmra.mxu0 %v2179
      %v3074 = vpop.f32.mrf.mxu0
      %v3075 = vadd.f32 0.0, %v3074
      %v3076 = vpop.f32.mrf.mxu0
      %v3077 = vadd.f32 0.0, %v3076
      %3078 = vmatmul.bf16.gmra.mxu0 %v2182
      %v3079 = vpop.f32.mrf.mxu0
      %v3080 = vadd.f32 0.0, %v3079
      %v3081 = vpop.f32.mrf.mxu0
      %v3082 = vadd.f32 0.0, %v3081
      %3083 = vmatmul.bf16.gmra.mxu0 %v2185
      %v3084 = vpop.f32.mrf.mxu0
      %v3085 = vadd.f32 0.0, %v3084
      %v3086 = vpop.f32.mrf.mxu0
      %v3087 = vadd.f32 0.0, %v3086
      %3088 = vmatmul.bf16.gmra.mxu0 %v2188
      %v3089 = vpop.f32.mrf.mxu0
      %v3090 = vadd.f32 0.0, %v3089
      %v3091 = vpop.f32.mrf.mxu0
      %v3092 = vadd.f32 0.0, %v3091
      %3093 = vmatmul.bf16.gmra.mxu0 %v2191
      %v3094 = vpop.f32.mrf.mxu0
      %v3095 = vadd.f32 0.0, %v3094
      %v3096 = vpop.f32.mrf.mxu0
      %v3097 = vadd.f32 0.0, %v3096
      %3098 = vmatmul.bf16.gmra.mxu0 %v2194
      %v3099 = vpop.f32.mrf.mxu0
      %v3100 = vadd.f32 0.0, %v3099
      %v3101 = vpop.f32.mrf.mxu0
      %v3102 = vadd.f32 0.0, %v3101
      %3103 = vmatmul.bf16.gmra.mxu0 %v2197
      %v3104 = vpop.f32.mrf.mxu0
      %v3105 = vadd.f32 0.0, %v3104
      %v3106 = vpop.f32.mrf.mxu0
      %v3107 = vadd.f32 0.0, %v3106
      %3108 = vmatmul.bf16.gmra.mxu0 %v2200
      %v3109 = vpop.f32.mrf.mxu0
      %v3110 = vadd.f32 0.0, %v3109
      %v3111 = vpop.f32.mrf.mxu0
      %v3112 = vadd.f32 0.0, %v3111
      %3113 = vmatmul.bf16.gmra.mxu0 %v2203
      %v3114 = vpop.f32.mrf.mxu0
      %v3115 = vadd.f32 0.0, %v3114
      %v3116 = vpop.f32.mrf.mxu0
      %v3117 = vadd.f32 0.0, %v3116
      %3118 = vmatmul.bf16.gmra.mxu0 %v2206
      %v3119 = vpop.f32.mrf.mxu0
      %v3120 = vadd.f32 0.0, %v3119
      %v3121 = vpop.f32.mrf.mxu0
      %v3122 = vadd.f32 0.0, %v3121
      %3123 = vmatmul.bf16.gmra.mxu0 %v2209
      %v3124 = vpop.f32.mrf.mxu0
      %v3125 = vadd.f32 0.0, %v3124
      %v3126 = vpop.f32.mrf.mxu0
      %v3127 = vadd.f32 0.0, %v3126
      %3128 = vmatmul.bf16.gmra.mxu0 %v2212
      %v3129 = vpop.f32.mrf.mxu0
      %v3130 = vadd.f32 0.0, %v3129
      %v3131 = vpop.f32.mrf.mxu0
      %v3132 = vadd.f32 0.0, %v3131
      %3133 = vmatmul.bf16.gmra.mxu0 %v2215
      %v3134 = vpop.f32.mrf.mxu0
      %v3135 = vadd.f32 0.0, %v3134
      %v3136 = vpop.f32.mrf.mxu0
      %v3137 = vadd.f32 0.0, %v3136
      %3138 = vmatmul.bf16.gmra.mxu0 %v2218
      %v3139 = vpop.f32.mrf.mxu0
      %v3140 = vadd.f32 0.0, %v3139
      %v3141 = vpop.f32.mrf.mxu0
      %v3142 = vadd.f32 0.0, %v3141
      %3143 = vmatmul.bf16.gmra.mxu0 %v2221
      %v3144 = vpop.f32.mrf.mxu0
      %v3145 = vadd.f32 0.0, %v3144
      %v3146 = vpop.f32.mrf.mxu0
      %v3147 = vadd.f32 0.0, %v3146
      %3148 = vmatmul.bf16.gmra.mxu0 %v2224
      %v3149 = vpop.f32.mrf.mxu0
      %v3150 = vadd.f32 0.0, %v3149
      %v3151 = vpop.f32.mrf.mxu0
      %v3152 = vadd.f32 0.0, %v3151
      %3153 = vmatmul.bf16.gmra.mxu0 %v2227
      %v3154 = vpop.f32.mrf.mxu0
      %v3155 = vadd.f32 0.0, %v3154
      %v3156 = vpop.f32.mrf.mxu0
      %v3157 = vadd.f32 0.0, %v3156
      %3158 = vmatmul.bf16.gmra.mxu0 %v2230
      %v3159 = vpop.f32.mrf.mxu0
      %v3160 = vadd.f32 0.0, %v3159
      %v3161 = vpop.f32.mrf.mxu0
      %v3162 = vadd.f32 0.0, %v3161
      %3163 = vmatmul.bf16.gmra.mxu0 %v2233
      %v3164 = vpop.f32.mrf.mxu0
      %v3165 = vadd.f32 0.0, %v3164
      %v3166 = vpop.f32.mrf.mxu0
      %v3167 = vadd.f32 0.0, %v3166
      %3168 = vmatmul.bf16.gmra.mxu0 %v2236
      %v3169 = vpop.f32.mrf.mxu0
      %v3170 = vadd.f32 0.0, %v3169
      %v3171 = vpop.f32.mrf.mxu0
      %v3172 = vadd.f32 0.0, %v3171
      %3173 = vmatmul.bf16.gmra.mxu0 %v2239
      %v3174 = vpop.f32.mrf.mxu0
      %v3175 = vadd.f32 0.0, %v3174
      %v3176 = vpop.f32.mrf.mxu0
      %v3177 = vadd.f32 0.0, %v3176
      %3178 = vmatmul.bf16.gmra.mxu0 %v2242
      %v3179 = vpop.f32.mrf.mxu0
      %v3180 = vadd.f32 0.0, %v3179
      %v3181 = vpop.f32.mrf.mxu0
      %v3182 = vadd.f32 0.0, %v3181
      %3183 = vmatmul.bf16.gmra.mxu0 %v2245
      %v3184 = vpop.f32.mrf.mxu0
      %v3185 = vadd.f32 0.0, %v3184
      %v3186 = vpop.f32.mrf.mxu0
      %v3187 = vadd.f32 0.0, %v3186
      %3188 = vmatmul.bf16.gmra.mxu0 %v2248
      %v3189 = vpop.f32.mrf.mxu0
      %v3190 = vadd.f32 0.0, %v3189
      %v3191 = vpop.f32.mrf.mxu0
      %v3192 = vadd.f32 0.0, %v3191
      %3193 = vmatmul.bf16.gmra.mxu0 %v2251
      %v3194 = vpop.f32.mrf.mxu0
      %v3195 = vadd.f32 0.0, %v3194
      %v3196 = vpop.f32.mrf.mxu0
      %v3197 = vadd.f32 0.0, %v3196
      %3198 = vmatmul.bf16.gmra.mxu0 %v2254
      %v3199 = vpop.f32.mrf.mxu0
      %v3200 = vadd.f32 0.0, %v3199
      %v3201 = vpop.f32.mrf.mxu0
      %v3202 = vadd.f32 0.0, %v3201
      %3203 = vmatmul.bf16.gmra.mxu0 %v2257
      %v3204 = vpop.f32.mrf.mxu0
      %v3205 = vadd.f32 0.0, %v3204
      %v3206 = vpop.f32.mrf.mxu0
      %v3207 = vadd.f32 0.0, %v3206
      %3208 = vmatmul.bf16.gmra.mxu0 %v2260
      %v3209 = vpop.f32.mrf.mxu0
      %v3210 = vadd.f32 0.0, %v3209
      %v3211 = vpop.f32.mrf.mxu0
      %v3212 = vadd.f32 0.0, %v3211
      %3213 = vmatmul.bf16.gmra.mxu0 %v2263
      %v3214 = vpop.f32.mrf.mxu0
      %v3215 = vadd.f32 0.0, %v3214
      %v3216 = vpop.f32.mrf.mxu0
      %v3217 = vadd.f32 0.0, %v3216
      %3218 = vmatmul.bf16.gmra.mxu0 %v2266
      %v3219 = vpop.f32.mrf.mxu0
      %v3220 = vadd.f32 0.0, %v3219
      %v3221 = vpop.f32.mrf.mxu0
      %v3222 = vadd.f32 0.0, %v3221
      %3223 = vmatmul.bf16.gmra.mxu0 %v2269
      %v3224 = vpop.f32.mrf.mxu0
      %v3225 = vadd.f32 0.0, %v3224
      %v3226 = vpop.f32.mrf.mxu0
      %v3227 = vadd.f32 0.0, %v3226
      %3228 = vmatmul.bf16.gmra.mxu0 %v2272
      %v3229 = vpop.f32.mrf.mxu0
      %v3230 = vadd.f32 0.0, %v3229
      %v3231 = vpop.f32.mrf.mxu0
      %v3232 = vadd.f32 0.0, %v3231
      %3233 = vmatmul.bf16.gmra.mxu0 %v2275
      %v3234 = vpop.f32.mrf.mxu0
      %v3235 = vadd.f32 0.0, %v3234
      %v3236 = vpop.f32.mrf.mxu0
      %v3237 = vadd.f32 0.0, %v3236
      %3238 = vmatmul.bf16.gmra.mxu0 %v2278
      %v3239 = vpop.f32.mrf.mxu0
      %v3240 = vadd.f32 0.0, %v3239
      %v3241 = vpop.f32.mrf.mxu0
      %v3242 = vadd.f32 0.0, %v3241
      %3243 = vmatmul.bf16.gmra.mxu0 %v2281
      %v3244 = vpop.f32.mrf.mxu0
      %v3245 = vadd.f32 0.0, %v3244
      %v3246 = vpop.f32.mrf.mxu0
      %v3247 = vadd.f32 0.0, %v3246
      %3248 = vmatmul.bf16.gmra.mxu0 %v2284
      %v3249 = vpop.f32.mrf.mxu0
      %v3250 = vadd.f32 0.0, %v3249
      %v3251 = vpop.f32.mrf.mxu0
      %v3252 = vadd.f32 0.0, %v3251
      %3253 = vmatmul.bf16.gmra.mxu0 %v2287
      %v3254 = vpop.f32.mrf.mxu0
      %v3255 = vadd.f32 0.0, %v3254
      %v3256 = vpop.f32.mrf.mxu0
      %v3257 = vadd.f32 0.0, %v3256
      %3258 = vmatmul.bf16.gmra.mxu0 %v2290
      %v3259 = vpop.f32.mrf.mxu0
      %v3260 = vadd.f32 0.0, %v3259
      %v3261 = vpop.f32.mrf.mxu0
      %v3262 = vadd.f32 0.0, %v3261
      %3263 = vmatmul.bf16.gmra.mxu0 %v2293
      %v3264 = vpop.f32.mrf.mxu0
      %v3265 = vadd.f32 0.0, %v3264
      %v3266 = vpop.f32.mrf.mxu0
      %v3267 = vadd.f32 0.0, %v3266
      %3268 = vmatmul.bf16.gmra.mxu0 %v2296
      %v3269 = vpop.f32.mrf.mxu0
      %v3270 = vadd.f32 0.0, %v3269
      %v3271 = vpop.f32.mrf.mxu0
      %v3272 = vadd.f32 0.0, %v3271
      %3273 = vmatmul.bf16.gmra.mxu0 %v2299
      %v3274 = vpop.f32.mrf.mxu0
      %v3275 = vadd.f32 0.0, %v3274
      %v3276 = vpop.f32.mrf.mxu0
      %v3277 = vadd.f32 0.0, %v3276
      %3278 = vmatmul.bf16.gmra.mxu0 %v2302
      %v3279 = vpop.f32.mrf.mxu0
      %v3280 = vadd.f32 0.0, %v3279
      %v3281 = vpop.f32.mrf.mxu0
      %v3282 = vadd.f32 0.0, %v3281
      %3283 = vmatmul.bf16.gmra.mxu0 %v2305
      %v3284 = vpop.f32.mrf.mxu0
      %v3285 = vadd.f32 0.0, %v3284
      %v3286 = vpop.f32.mrf.mxu0
      %v3287 = vadd.f32 0.0, %v3286
      %3288 = vmatmul.bf16.gmra.mxu0 %v2308
      %v3289 = vpop.f32.mrf.mxu0
      %v3290 = vadd.f32 0.0, %v3289
      %v3291 = vpop.f32.mrf.mxu0
      %v3292 = vadd.f32 0.0, %v3291
      %3293 = vmatmul.bf16.gmra.mxu0 %v2311
      %v3294 = vpop.f32.mrf.mxu0
      %v3295 = vadd.f32 0.0, %v3294
      %v3296 = vpop.f32.mrf.mxu0
      %v3297 = vadd.f32 0.0, %v3296
      %3298 = vmatmul.bf16.gmra.mxu0 %v2314
      %v3299 = vpop.f32.mrf.mxu0
      %v3300 = vadd.f32 0.0, %v3299
      %v3301 = vpop.f32.mrf.mxu0
      %v3302 = vadd.f32 0.0, %v3301
      %3303 = vmatmul.bf16.gmra.mxu0 %v2317
      %v3304 = vpop.f32.mrf.mxu0
      %v3305 = vadd.f32 0.0, %v3304
      %v3306 = vpop.f32.mrf.mxu0
      %v3307 = vadd.f32 0.0, %v3306
      %3308 = vmatmul.bf16.gmra.mxu0 %v2320
      %v3309 = vpop.f32.mrf.mxu0
      %v3310 = vadd.f32 0.0, %v3309
      %v3311 = vpop.f32.mrf.mxu0
      %v3312 = vadd.f32 0.0, %v3311
      %3313 = vmatmul.bf16.gmra.mxu0 %v2323
      %v3314 = vpop.f32.mrf.mxu0
      %v3315 = vadd.f32 0.0, %v3314
      %v3316 = vpop.f32.mrf.mxu0
      %v3317 = vadd.f32 0.0, %v3316
      %3318 = vmatmul.bf16.gmra.mxu0 %v2326
      %v3319 = vpop.f32.mrf.mxu0
      %v3320 = vadd.f32 0.0, %v3319
      %v3321 = vpop.f32.mrf.mxu0
      %v3322 = vadd.f32 0.0, %v3321
      %3323 = vmatmul.bf16.gmra.mxu0 %v2329
      %v3324 = vpop.f32.mrf.mxu0
      %v3325 = vadd.f32 0.0, %v3324
      %v3326 = vpop.f32.mrf.mxu0
      %v3327 = vadd.f32 0.0, %v3326
      %3328 = vmatmul.bf16.gmra.mxu0 %v2332
      %v3329 = vpop.f32.mrf.mxu0
      %v3330 = vadd.f32 0.0, %v3329
      %v3331 = vpop.f32.mrf.mxu0
      %v3332 = vadd.f32 0.0, %v3331
      %3333 = vmatmul.bf16.gmra.mxu0 %v2335
      %v3334 = vpop.f32.mrf.mxu0
      %v3335 = vadd.f32 0.0, %v3334
      %v3336 = vpop.f32.mrf.mxu0
      %v3337 = vadd.f32 0.0, %v3336
      %3338 = vmatmul.bf16.gmra.mxu0 %v2338
      %v3339 = vpop.f32.mrf.mxu0
      %v3340 = vadd.f32 0.0, %v3339
      %v3341 = vpop.f32.mrf.mxu0
      %v3342 = vadd.f32 0.0, %v3341
      %3343 = vmatmul.bf16.gmra.mxu0 %v2341
      %v3344 = vpop.f32.mrf.mxu0
      %v3345 = vadd.f32 0.0, %v3344
      %v3346 = vpop.f32.mrf.mxu0
      %v3347 = vadd.f32 0.0, %v3346
      %3348 = vmatmul.bf16.gmra.mxu0 %v2344
      %v3349 = vpop.f32.mrf.mxu0
      %v3350 = vadd.f32 0.0, %v3349
      %v3351 = vpop.f32.mrf.mxu0
      %v3352 = vadd.f32 0.0, %v3351
      %3353 = vmatmul.bf16.gmra.mxu0 %v2347
      %v3354 = vpop.f32.mrf.mxu0
      %v3355 = vadd.f32 0.0, %v3354
      %v3356 = vpop.f32.mrf.mxu0
      %v3357 = vadd.f32 0.0, %v3356
      %3358 = vmatmul.bf16.gmra.mxu0 %v2350
      %v3359 = vpop.f32.mrf.mxu0
      %v3360 = vadd.f32 0.0, %v3359
      %v3361 = vpop.f32.mrf.mxu0
      %v3362 = vadd.f32 0.0, %v3361
      %3363 = vmatmul.bf16.gmra.mxu0 %v2353
      %v3364 = vpop.f32.mrf.mxu0
      %v3365 = vadd.f32 0.0, %v3364
      %v3366 = vpop.f32.mrf.mxu0
      %v3367 = vadd.f32 0.0, %v3366
      %3368 = vmatmul.bf16.gmra.mxu0 %v2356
      %v3369 = vpop.f32.mrf.mxu0
      %v3370 = vadd.f32 0.0, %v3369
      %v3371 = vpop.f32.mrf.mxu0
      %v3372 = vadd.f32 0.0, %v3371
      %3373 = vmatmul.bf16.gmra.mxu0 %v2359
      %v3374 = vpop.f32.mrf.mxu0
      %v3375 = vadd.f32 0.0, %v3374
      %v3376 = vpop.f32.mrf.mxu0
      %v3377 = vadd.f32 0.0, %v3376
      %3378 = vmatmul.bf16.gmra.mxu0 %v2362
      %v3379 = vpop.f32.mrf.mxu0
      %v3380 = vadd.f32 0.0, %v3379
      %v3381 = vpop.f32.mrf.mxu0
      %v3382 = vadd.f32 0.0, %v3381
      %3383 = vmatmul.bf16.gmra.mxu0 %v2365
      %v3384 = vpop.f32.mrf.mxu0
      %v3385 = vadd.f32 0.0, %v3384
      %v3386 = vpop.f32.mrf.mxu0
      %v3387 = vadd.f32 0.0, %v3386
      %3388 = vmatmul.bf16.gmra.mxu0 %v2368
      %v3389 = vpop.f32.mrf.mxu0
      %v3390 = vadd.f32 0.0, %v3389
      %v3391 = vpop.f32.mrf.mxu0
      %v3392 = vadd.f32 0.0, %v3391
      %3393 = vmatmul.bf16.gmra.mxu0 %v2371
      %v3394 = vpop.f32.mrf.mxu0
      %v3395 = vadd.f32 0.0, %v3394
      %v3396 = vpop.f32.mrf.mxu0
      %v3397 = vadd.f32 0.0, %v3396
      %3398 = vmatmul.bf16.gmra.mxu0 %v2374
      %v3399 = vpop.f32.mrf.mxu0
      %v3400 = vadd.f32 0.0, %v3399
      %v3401 = vpop.f32.mrf.mxu0
      %v3402 = vadd.f32 0.0, %v3401
      %3403 = vmatmul.bf16.gmra.mxu0 %v2377
      %v3404 = vpop.f32.mrf.mxu0
      %v3405 = vadd.f32 0.0, %v3404
      %v3406 = vpop.f32.mrf.mxu0
      %v3407 = vadd.f32 0.0, %v3406
      %3408 = vmatmul.bf16.gmra.mxu0 %v2380
      %v3409 = vpop.f32.mrf.mxu0
      %v3410 = vadd.f32 0.0, %v3409
      %v3411 = vpop.f32.mrf.mxu0
      %v3412 = vadd.f32 0.0, %v3411
      %3413 = vmatmul.bf16.gmra.mxu0 %v2383
      %v3414 = vpop.f32.mrf.mxu0
      %v3415 = vadd.f32 0.0, %v3414
      %v3416 = vpop.f32.mrf.mxu0
      %v3417 = vadd.f32 0.0, %v3416
      %3418 = vmatmul.bf16.gmra.mxu0 %v2386
      %v3419 = vpop.f32.mrf.mxu0
      %v3420 = vadd.f32 0.0, %v3419
      %v3421 = vpop.f32.mrf.mxu0
      %v3422 = vadd.f32 0.0, %v3421
      %3423 = vmatmul.bf16.gmra.mxu0 %v2389
      %v3424 = vpop.f32.mrf.mxu0
      %v3425 = vadd.f32 0.0, %v3424
      %v3426 = vpop.f32.mrf.mxu0
      %v3427 = vadd.f32 0.0, %v3426
      %3428 = vmatmul.bf16.gmra.mxu0 %v2392
      %v3429 = vpop.f32.mrf.mxu0
      %v3430 = vadd.f32 0.0, %v3429
      %v3431 = vpop.f32.mrf.mxu0
      %v3432 = vadd.f32 0.0, %v3431
      %3433 = vmatmul.bf16.gmra.mxu0 %v2395
      %v3434 = vpop.f32.mrf.mxu0
      %v3435 = vadd.f32 0.0, %v3434
      %v3436 = vpop.f32.mrf.mxu0
      %v3437 = vadd.f32 0.0, %v3436
      %3438 = vmatmul.bf16.gmra.mxu0 %v2398
      %v3439 = vpop.f32.mrf.mxu0
      %v3440 = vadd.f32 0.0, %v3439
      %v3441 = vpop.f32.mrf.mxu0
      %v3442 = vadd.f32 0.0, %v3441
      %3443 = vmatmul.bf16.gmra.mxu0 %v2401
      %v3444 = vpop.f32.mrf.mxu0
      %v3445 = vadd.f32 0.0, %v3444
      %v3446 = vpop.f32.mrf.mxu0
      %v3447 = vadd.f32 0.0, %v3446
      %3448 = vmatmul.bf16.gmra.mxu0 %v2404
      %v3449 = vpop.f32.mrf.mxu0
      %v3450 = vadd.f32 0.0, %v3449
      %v3451 = vpop.f32.mrf.mxu0
      %v3452 = vadd.f32 0.0, %v3451
      %3453 = vmatmul.bf16.gmra.mxu0 %v2407
      %v3454 = vpop.f32.mrf.mxu0
      %v3455 = vadd.f32 0.0, %v3454
      %v3456 = vpop.f32.mrf.mxu0
      %v3457 = vadd.f32 0.0, %v3456
      %3458 = vmatmul.bf16.gmra.mxu0 %v2410
      %v3459 = vpop.f32.mrf.mxu0
      %v3460 = vadd.f32 0.0, %v3459
      %v3461 = vpop.f32.mrf.mxu0
      %v3462 = vadd.f32 0.0, %v3461
      %3463 = vmatmul.bf16.gmra.mxu0 %v2413
      %v3464 = vpop.f32.mrf.mxu0
      %v3465 = vadd.f32 0.0, %v3464
      %v3466 = vpop.f32.mrf.mxu0
      %v3467 = vadd.f32 0.0, %v3466
      %3468 = vmatmul.bf16.gmra.mxu0 %v2416
      %v3469 = vpop.f32.mrf.mxu0
      %v3470 = vadd.f32 0.0, %v3469
      %v3471 = vpop.f32.mrf.mxu0
      %v3472 = vadd.f32 0.0, %v3471
      %3473 = vmatmul.bf16.gmra.mxu0 %v2419
      %v3474 = vpop.f32.mrf.mxu0
      %v3475 = vadd.f32 0.0, %v3474
      %v3476 = vpop.f32.mrf.mxu0
      %v3477 = vadd.f32 0.0, %v3476
      %3478 = vmatmul.bf16.gmra.mxu0 %v2422
      %v3479 = vpop.f32.mrf.mxu0
      %v3480 = vadd.f32 0.0, %v3479
      %v3481 = vpop.f32.mrf.mxu0
      %v3482 = vadd.f32 0.0, %v3481
      %3483 = vmatmul.bf16.gmra.mxu0 %v2425
      %v3484 = vpop.f32.mrf.mxu0
      %v3485 = vadd.f32 0.0, %v3484
      %v3486 = vpop.f32.mrf.mxu0
      %v3487 = vadd.f32 0.0, %v3486
      %3488 = vmatmul.bf16.gmra.mxu0 %v2428
      %v3489 = vpop.f32.mrf.mxu0
      %v3490 = vadd.f32 0.0, %v3489
      %v3491 = vpop.f32.mrf.mxu0
      %v3492 = vadd.f32 0.0, %v3491
      %3493 = vmatmul.bf16.gmra.mxu0 %v2431
      %v3494 = vpop.f32.mrf.mxu0
      %v3495 = vadd.f32 0.0, %v3494
      %v3496 = vpop.f32.mrf.mxu0
      %v3497 = vadd.f32 0.0, %v3496
      %3498 = vmatmul.bf16.gmra.mxu0 %v2434
      %v3499 = vpop.f32.mrf.mxu0
      %v3500 = vadd.f32 0.0, %v3499
      %v3501 = vpop.f32.mrf.mxu0
      %v3502 = vadd.f32 0.0, %v3501
      %3503 = vmatmul.bf16.gmra.mxu0 %v2437
      %v3504 = vpop.f32.mrf.mxu0
      %v3505 = vadd.f32 0.0, %v3504
      %v3506 = vpop.f32.mrf.mxu0
      %v3507 = vadd.f32 0.0, %v3506
      %3508 = vmatmul.bf16.gmra.mxu0 %v2440
      %v3509 = vpop.f32.mrf.mxu0
      %v3510 = vadd.f32 0.0, %v3509
      %v3511 = vpop.f32.mrf.mxu0
      %v3512 = vadd.f32 0.0, %v3511
      %3513 = vmatmul.bf16.gmra.mxu0 %v2443
      %v3514 = vpop.f32.mrf.mxu0
      %v3515 = vadd.f32 0.0, %v3514
      %v3516 = vpop.f32.mrf.mxu0
      %v3517 = vadd.f32 0.0, %v3516
      %3518 = vmatmul.bf16.gmra.mxu0 %v2446
      %v3519 = vpop.f32.mrf.mxu0
      %v3520 = vadd.f32 0.0, %v3519
      %v3521 = vpop.f32.mrf.mxu0
      %v3522 = vadd.f32 0.0, %v3521
      %3523 = vmatmul.bf16.gmra.mxu0 %v2449
      %v3524 = vpop.f32.mrf.mxu0
      %v3525 = vadd.f32 0.0, %v3524
      %v3526 = vpop.f32.mrf.mxu0
      %v3527 = vadd.f32 0.0, %v3526
      %3528 = vmatmul.bf16.gmra.mxu0 %v2452
      %v3529 = vpop.f32.mrf.mxu0
      %v3530 = vadd.f32 0.0, %v3529
      %v3531 = vpop.f32.mrf.mxu0
      %v3532 = vadd.f32 0.0, %v3531
      %3533 = vmatmul.bf16.gmra.mxu0 %v2455
      %v3534 = vpop.f32.mrf.mxu0
      %v3535 = vadd.f32 0.0, %v3534
      %v3536 = vpop.f32.mrf.mxu0
      %v3537 = vadd.f32 0.0, %v3536
      %3538 = vmatmul.bf16.gmra.mxu0 %v2458
      %v3539 = vpop.f32.mrf.mxu0
      %v3540 = vadd.f32 0.0, %v3539
      %v3541 = vpop.f32.mrf.mxu0
      %v3542 = vadd.f32 0.0, %v3541
      %3543 = vmatmul.bf16.gmra.mxu0 %v2461
      %v3544 = vpop.f32.mrf.mxu0
      %v3545 = vadd.f32 0.0, %v3544
      %v3546 = vpop.f32.mrf.mxu0
      %v3547 = vadd.f32 0.0, %v3546
      %3548 = vmatmul.bf16.gmra.mxu0 %v2464
      %v3549 = vpop.f32.mrf.mxu0
      %v3550 = vadd.f32 0.0, %v3549
      %v3551 = vpop.f32.mrf.mxu0
      %v3552 = vadd.f32 0.0, %v3551
      %3553 = vmatmul.bf16.gmra.mxu0 %v2467
      %v3554 = vpop.f32.mrf.mxu0
      %v3555 = vadd.f32 0.0, %v3554
      %v3556 = vpop.f32.mrf.mxu0
      %v3557 = vadd.f32 0.0, %v3556
      %3558 = vmatmul.bf16.gmra.mxu0 %v2470
      %v3559 = vpop.f32.mrf.mxu0
      %v3560 = vadd.f32 0.0, %v3559
      %v3561 = vpop.f32.mrf.mxu0
      %v3562 = vadd.f32 0.0, %v3561
      %3563 = vmatmul.bf16.gmra.mxu0 %v2473
      %v3564 = vpop.f32.mrf.mxu0
      %v3565 = vadd.f32 0.0, %v3564
      %v3566 = vpop.f32.mrf.mxu0
      %v3567 = vadd.f32 0.0, %v3566
      %3568 = vmatmul.bf16.gmra.mxu0 %v2476
      %v3569 = vpop.f32.mrf.mxu0
      %v3570 = vadd.f32 0.0, %v3569
      %v3571 = vpop.f32.mrf.mxu0
      %v3572 = vadd.f32 0.0, %v3571
      %3573 = vmatmul.bf16.gmra.mxu0 %v2479
      %v3574 = vpop.f32.mrf.mxu0
      %v3575 = vadd.f32 0.0, %v3574
      %v3576 = vpop.f32.mrf.mxu0
      %v3577 = vadd.f32 0.0, %v3576
      %3578 = vmatmul.bf16.gmra.mxu0 %v2482
      %v3579 = vpop.f32.mrf.mxu0
      %v3580 = vadd.f32 0.0, %v3579
      %v3581 = vpop.f32.mrf.mxu0
      %v3582 = vadd.f32 0.0, %v3581
      %3583 = vmatmul.bf16.gmra.mxu0 %v2485
      %v3584 = vpop.f32.mrf.mxu0
      %v3585 = vadd.f32 0.0, %v3584
      %v3586 = vpop.f32.mrf.mxu0
      %v3587 = vadd.f32 0.0, %v3586
      %3588 = vmatmul.bf16.gmra.mxu0 %v2488
      %v3589 = vpop.f32.mrf.mxu0
      %v3590 = vadd.f32 0.0, %v3589
      %v3591 = vpop.f32.mrf.mxu0
      %v3592 = vadd.f32 0.0, %v3591
      %3593 = vmatmul.bf16.gmra.mxu0 %v2491
      %v3594 = vpop.f32.mrf.mxu0
      %v3595 = vadd.f32 0.0, %v3594
      %v3596 = vpop.f32.mrf.mxu0
      %v3597 = vadd.f32 0.0, %v3596
      %3598 = vmatmul.bf16.gmra.mxu0 %v2494
      %v3599 = vpop.f32.mrf.mxu0
      %v3600 = vadd.f32 0.0, %v3599
      %v3601 = vpop.f32.mrf.mxu0
      %v3602 = vadd.f32 0.0, %v3601
      %3603 = vmatmul.bf16.gmra.mxu0 %v2497
      %v3604 = vpop.f32.mrf.mxu0
      %v3605 = vadd.f32 0.0, %v3604
      %v3606 = vpop.f32.mrf.mxu0
      %v3607 = vadd.f32 0.0, %v3606
      %3608 = vmatmul.bf16.gmra.mxu0 %v2500
      %v3609 = vpop.f32.mrf.mxu0
      %v3610 = vadd.f32 0.0, %v3609
      %v3611 = vpop.f32.mrf.mxu0
      %v3612 = vadd.f32 0.0, %v3611
      %3613 = vmatmul.bf16.gmra.mxu0 %v2503
      %v3614 = vpop.f32.mrf.mxu0
      %v3615 = vadd.f32 0.0, %v3614
      %v3616 = vpop.f32.mrf.mxu0
      %v3617 = vadd.f32 0.0, %v3616
      %3618 = vmatmul.bf16.gmra.mxu0 %v2506
      %v3619 = vpop.f32.mrf.mxu0
      %v3620 = vadd.f32 0.0, %v3619
      %v3621 = vpop.f32.mrf.mxu0
      %v3622 = vadd.f32 0.0, %v3621
      %3623 = vmatmul.bf16.gmra.mxu0 %v2509
      %v3624 = vpop.f32.mrf.mxu0
      %v3625 = vadd.f32 0.0, %v3624
      %v3626 = vpop.f32.mrf.mxu0
      %v3627 = vadd.f32 0.0, %v3626
      %3628 = vmatmul.bf16.gmra.mxu0 %v2512
      %v3629 = vpop.f32.mrf.mxu0
      %v3630 = vadd.f32 0.0, %v3629
      %v3631 = vpop.f32.mrf.mxu0
      %v3632 = vadd.f32 0.0, %v3631
      %3633 = vmatmul.bf16.gmra.mxu0 %v2515
      %v3634 = vpop.f32.mrf.mxu0
      %v3635 = vadd.f32 0.0, %v3634
      %v3636 = vpop.f32.mrf.mxu0
      %v3637 = vadd.f32 0.0, %v3636
      %3638 = vmatmul.bf16.gmra.mxu0 %v2518
      %v3639 = vpop.f32.mrf.mxu0
      %v3640 = vadd.f32 0.0, %v3639
      %v3641 = vpop.f32.mrf.mxu0
      %v3642 = vadd.f32 0.0, %v3641
      %3643 = vmatmul.bf16.gmra.mxu0 %v2521
      %v3644 = vpop.f32.mrf.mxu0
      %v3645 = vadd.f32 0.0, %v3644
      %v3646 = vpop.f32.mrf.mxu0
      %v3647 = vadd.f32 0.0, %v3646
      %3648 = vmatmul.bf16.gmra.mxu0 %v2524
      %v3649 = vpop.f32.mrf.mxu0
      %v3650 = vadd.f32 0.0, %v3649
      %v3651 = vpop.f32.mrf.mxu0
      %v3652 = vadd.f32 0.0, %v3651
      %3653 = vmatmul.bf16.gmra.mxu0 %v2527
      %v3654 = vpop.f32.mrf.mxu0
      %v3655 = vadd.f32 0.0, %v3654
      %v3656 = vpop.f32.mrf.mxu0
      %v3657 = vadd.f32 0.0, %v3656
      %3658 = vmatmul.bf16.gmra.mxu0 %v2530
      %v3659 = vpop.f32.mrf.mxu0
      %v3660 = vadd.f32 0.0, %v3659
      %v3661 = vpop.f32.mrf.mxu0
      %v3662 = vadd.f32 0.0, %v3661
      %3663 = vmatmul.bf16.gmra.mxu0 %v2533
      %v3664 = vpop.f32.mrf.mxu0
      %v3665 = vadd.f32 0.0, %v3664
      %v3666 = vpop.f32.mrf.mxu0
      %v3667 = vadd.f32 0.0, %v3666
      %3668 = vmatmul.bf16.gmra.mxu0 %v2536
      %v3669 = vpop.f32.mrf.mxu0
      %v3670 = vadd.f32 0.0, %v3669
      %v3671 = vpop.f32.mrf.mxu0
      %v3672 = vadd.f32 0.0, %v3671
      %3673 = vmatmul.bf16.gmra.mxu0 %v2539
      %v3674 = vpop.f32.mrf.mxu0
      %v3675 = vadd.f32 0.0, %v3674
      %v3676 = vpop.f32.mrf.mxu0
      %v3677 = vadd.f32 0.0, %v3676
      %3678 = vmatmul.bf16.gmra.mxu0 %v2542
      %v3679 = vpop.f32.mrf.mxu0
      %v3680 = vadd.f32 0.0, %v3679
      %v3681 = vpop.f32.mrf.mxu0
      %v3682 = vadd.f32 0.0, %v3681
      %3683 = vmatmul.bf16.gmra.mxu0 %v2545
      %v3684 = vpop.f32.mrf.mxu0
      %v3685 = vadd.f32 0.0, %v3684
      %v3686 = vpop.f32.mrf.mxu0
      %v3687 = vadd.f32 0.0, %v3686
      %3688 = vmatmul.bf16.gmra.mxu0 %v2548
      %v3689 = vpop.f32.mrf.mxu0
      %v3690 = vadd.f32 0.0, %v3689
      %v3691 = vpop.f32.mrf.mxu0
      %v3692 = vadd.f32 0.0, %v3691
      %3693 = vmatmul.bf16.gmra.mxu0 %v2551
      %v3694 = vpop.f32.mrf.mxu0
      %v3695 = vadd.f32 0.0, %v3694
      %v3696 = vpop.f32.mrf.mxu0
      %v3697 = vadd.f32 0.0, %v3696
      %3698 = vmatmul.bf16.gmra.mxu0 %v2554
      %v3699 = vpop.f32.mrf.mxu0
      %v3700 = vadd.f32 0.0, %v3699
      %v3701 = vpop.f32.mrf.mxu0
      %v3702 = vadd.f32 0.0, %v3701
      %3703 = vmatmul.bf16.gmra.mxu0 %v2557
      %v3704 = vpop.f32.mrf.mxu0
      %v3705 = vadd.f32 0.0, %v3704
      %v3706 = vpop.f32.mrf.mxu0
      %v3707 = vadd.f32 0.0, %v3706
      %3708 = vmatmul.bf16.gmra.mxu0 %v2560
      %v3709 = vpop.f32.mrf.mxu0
      %v3710 = vadd.f32 0.0, %v3709
      %v3711 = vpop.f32.mrf.mxu0
      %v3712 = vadd.f32 0.0, %v3711
      %3713 = vmatmul.bf16.gmra.mxu0 %v2563
      %v3714 = vpop.f32.mrf.mxu0
      %v3715 = vadd.f32 0.0, %v3714
      %v3716 = vpop.f32.mrf.mxu0
      %v3717 = vadd.f32 0.0, %v3716
      %3718 = vmatmul.bf16.gmra.mxu0 %v2566
      %v3719 = vpop.f32.mrf.mxu0
      %v3720 = vadd.f32 0.0, %v3719
      %v3721 = vpop.f32.mrf.mxu0
      %v3722 = vadd.f32 0.0, %v3721
      %3723 = vmatmul.bf16.gmra.mxu0 %v2569
      %v3724 = vpop.f32.mrf.mxu0
      %v3725 = vadd.f32 0.0, %v3724
      %v3726 = vpop.f32.mrf.mxu0
      %v3727 = vadd.f32 0.0, %v3726
      %3728 = vmatmul.bf16.gmra.mxu0 %v2572
      %v3729 = vpop.f32.mrf.mxu0
      %v3730 = vadd.f32 0.0, %v3729
      %v3731 = vpop.f32.mrf.mxu0
      %v3732 = vadd.f32 0.0, %v3731
      %3733 = vmatmul.bf16.gmra.mxu0 %v2575
      %v3734 = vpop.f32.mrf.mxu0
      %v3735 = vadd.f32 0.0, %v3734
      %v3736 = vpop.f32.mrf.mxu0
      %v3737 = vadd.f32 0.0, %v3736
      %3738 = vmatmul.bf16.gmra.mxu0 %v2578
      %v3739 = vpop.f32.mrf.mxu0
      %v3740 = vadd.f32 0.0, %v3739
      %v3741 = vpop.f32.mrf.mxu0
      %v3742 = vadd.f32 0.0, %v3741
      %3743 = vmatmul.bf16.gmra.mxu0 %v2581
      %v3744 = vpop.f32.mrf.mxu0
      %v3745 = vadd.f32 0.0, %v3744
      %v3746 = vpop.f32.mrf.mxu0
      %v3747 = vadd.f32 0.0, %v3746
      %3748 = vmatmul.bf16.gmra.mxu0 %v2584
      %v3749 = vpop.f32.mrf.mxu0
      %v3750 = vadd.f32 0.0, %v3749
      %v3751 = vpop.f32.mrf.mxu0
      %v3752 = vadd.f32 0.0, %v3751
      %3753 = vmatmul.bf16.gmra.mxu0 %v2587
      %v3754 = vpop.f32.mrf.mxu0
      %v3755 = vadd.f32 0.0, %v3754
      %v3756 = vpop.f32.mrf.mxu0
      %v3757 = vadd.f32 0.0, %v3756
      %3758 = vmatmul.bf16.gmra.mxu0 %v2590
      %v3759 = vpop.f32.mrf.mxu0
      %v3760 = vadd.f32 0.0, %v3759
      %v3761 = vpop.f32.mrf.mxu0
      %v3762 = vadd.f32 0.0, %v3761
      %3763 = vmatmul.bf16.gmra.mxu0 %v2593
      %v3764 = vpop.f32.mrf.mxu0
      %v3765 = vadd.f32 0.0, %v3764
      %v3766 = vpop.f32.mrf.mxu0
      %v3767 = vadd.f32 0.0, %v3766
      %3768 = vmatmul.bf16.gmra.mxu0 %v2596
      %v3769 = vpop.f32.mrf.mxu0
      %v3770 = vadd.f32 0.0, %v3769
      %v3771 = vpop.f32.mrf.mxu0
      %v3772 = vadd.f32 0.0, %v3771
      %3773 = vmatmul.bf16.gmra.mxu0 %v2599
      %v3774 = vpop.f32.mrf.mxu0
      %v3775 = vadd.f32 0.0, %v3774
      %v3776 = vpop.f32.mrf.mxu0
      %v3777 = vadd.f32 0.0, %v3776
      %3778 = vmatmul.bf16.gmra.mxu0 %v2602
      %v3779 = vpop.f32.mrf.mxu0
      %v3780 = vadd.f32 0.0, %v3779
      %v3781 = vpop.f32.mrf.mxu0
      %v3782 = vadd.f32 0.0, %v3781
      %3783 = vmatmul.bf16.gmra.mxu0 %v2605
      %v3784 = vpop.f32.mrf.mxu0
      %v3785 = vadd.f32 0.0, %v3784
      %v3786 = vpop.f32.mrf.mxu0
      %v3787 = vadd.f32 0.0, %v3786
      %3788 = vmatmul.bf16.gmra.mxu0 %v2608
      %v3789 = vpop.f32.mrf.mxu0
      %v3790 = vadd.f32 0.0, %v3789
      %v3791 = vpop.f32.mrf.mxu0
      %v3792 = vadd.f32 0.0, %v3791
      %3793 = vmatmul.bf16.gmra.mxu0 %v2611
      %v3794 = vpop.f32.mrf.mxu0
      %v3795 = vadd.f32 0.0, %v3794
      %v3796 = vpop.f32.mrf.mxu0
      %v3797 = vadd.f32 0.0, %v3796
      %3798 = vmatmul.bf16.gmra.mxu0 %v2614
      %v3799 = vpop.f32.mrf.mxu0
      %v3800 = vadd.f32 0.0, %v3799
      %v3801 = vpop.f32.mrf.mxu0
      %v3802 = vadd.f32 0.0, %v3801
      %3803 = vmatmul.bf16.gmra.mxu0 %v2617
      %v3804 = vpop.f32.mrf.mxu0
      %v3805 = vadd.f32 0.0, %v3804
      %v3806 = vpop.f32.mrf.mxu0
      %v3807 = vadd.f32 0.0, %v3806
      %3808 = vmatmul.bf16.gmra.mxu0 %v2620
      %v3809 = vpop.f32.mrf.mxu0
      %v3810 = vadd.f32 0.0, %v3809
      %v3811 = vpop.f32.mrf.mxu0
      %v3812 = vadd.f32 0.0, %v3811
      %3813 = vmatmul.bf16.gmra.mxu0 %v2623
      %v3814 = vpop.f32.mrf.mxu0
      %v3815 = vadd.f32 0.0, %v3814
      %v3816 = vpop.f32.mrf.mxu0
      %v3817 = vadd.f32 0.0, %v3816
      %3818 = vmatmul.bf16.gmra.mxu0 %v2626
      %v3819 = vpop.f32.mrf.mxu0
      %v3820 = vadd.f32 0.0, %v3819
      %v3821 = vpop.f32.mrf.mxu0
      %v3822 = vadd.f32 0.0, %v3821
      %3823 = vmatmul.bf16.gmra.mxu0 %v2629
      %v3824 = vpop.f32.mrf.mxu0
      %v3825 = vadd.f32 0.0, %v3824
      %v3826 = vpop.f32.mrf.mxu0
      %v3827 = vadd.f32 0.0, %v3826
      %3828 = vmatmul.bf16.gmra.mxu0 %v2632
      %v3829 = vpop.f32.mrf.mxu0
      %v3830 = vadd.f32 0.0, %v3829
      %v3831 = vpop.f32.mrf.mxu0
      %v3832 = vadd.f32 0.0, %v3831
      %3833 = vmatmul.bf16.gmra.mxu0 %v2635
      %v3834 = vpop.f32.mrf.mxu0
      %v3835 = vadd.f32 0.0, %v3834
      %v3836 = vpop.f32.mrf.mxu0
      %v3837 = vadd.f32 0.0, %v3836
      %3838 = vmatmul.bf16.gmra.mxu0 %v2638
      %v3839 = vpop.f32.mrf.mxu0
      %v3840 = vadd.f32 0.0, %v3839
      %v3841 = vpop.f32.mrf.mxu0
      %v3842 = vadd.f32 0.0, %v3841
      %3843 = vmatmul.bf16.gmra.mxu0 %v2641
      %v3844 = vpop.f32.mrf.mxu0
      %v3845 = vadd.f32 0.0, %v3844
      %v3846 = vpop.f32.mrf.mxu0
      %v3847 = vadd.f32 0.0, %v3846
      %3848 = vmatmul.bf16.gmra.mxu0 %v2644
      %v3849 = vpop.f32.mrf.mxu0
      %v3850 = vadd.f32 0.0, %v3849
      %v3851 = vpop.f32.mrf.mxu0
      %v3852 = vadd.f32 0.0, %v3851
      %3853 = vmatmul.bf16.gmra.mxu0 %v2647
      %v3854 = vpop.f32.mrf.mxu0
      %v3855 = vadd.f32 0.0, %v3854
      %v3856 = vpop.f32.mrf.mxu0
      %v3857 = vadd.f32 0.0, %v3856
      %3858 = vmatmul.bf16.gmra.mxu0 %v2650
      %v3859 = vpop.f32.mrf.mxu0
      %v3860 = vadd.f32 0.0, %v3859
      %v3861 = vpop.f32.mrf.mxu0
      %v3862 = vadd.f32 0.0, %v3861
      %3863 = vmatmul.bf16.gmra.mxu0 %v2653
      %v3864 = vpop.f32.mrf.mxu0
      %v3865 = vadd.f32 0.0, %v3864
      %v3866 = vpop.f32.mrf.mxu0
      %v3867 = vadd.f32 0.0, %v3866
      %3868 = vmatmul.bf16.gmra.mxu0 %v2656
      %v3869 = vpop.f32.mrf.mxu0
      %v3870 = vadd.f32 0.0, %v3869
      %v3871 = vpop.f32.mrf.mxu0
      %v3872 = vadd.f32 0.0, %v3871
      %3873 = vmatmul.bf16.gmra.mxu0 %v2659
      %v3874 = vpop.f32.mrf.mxu0
      %v3875 = vadd.f32 0.0, %v3874
      %v3876 = vpop.f32.mrf.mxu0
      %v3877 = vadd.f32 0.0, %v3876
      %3878 = vmatmul.bf16.gmra.mxu0 %v2662
      %v3879 = vpop.f32.mrf.mxu0
      %v3880 = vadd.f32 0.0, %v3879
      %v3881 = vpop.f32.mrf.mxu0
      %v3882 = vadd.f32 0.0, %v3881
      %3883 = vmatmul.bf16.gmra.mxu0 %v2665
      %v3884 = vpop.f32.mrf.mxu0
      %v3885 = vadd.f32 0.0, %v3884
      %v3886 = vpop.f32.mrf.mxu0
      %v3887 = vadd.f32 0.0, %v3886
      %3888 = vmatmul.bf16.gmra.mxu0 %v2668
      %v3889 = vpop.f32.mrf.mxu0
      %v3890 = vadd.f32 0.0, %v3889
      %v3891 = vpop.f32.mrf.mxu0
      %v3892 = vadd.f32 0.0, %v3891
      %3893 = vmatmul.bf16.gmra.mxu0 %v2671
      %v3894 = vpop.f32.mrf.mxu0
      %v3895 = vadd.f32 0.0, %v3894
      %v3896 = vpop.f32.mrf.mxu0
      %v3897 = vadd.f32 0.0, %v3896
      %3898 = vmatmul.bf16.gmra.mxu0 %v2674
      %v3899 = vpop.f32.mrf.mxu0
      %v3900 = vadd.f32 0.0, %v3899
      %v3901 = vpop.f32.mrf.mxu0
      %v3902 = vadd.f32 0.0, %v3901
      %3903 = vmatmul.bf16.gmra.mxu0 %v2677
      %v3904 = vpop.f32.mrf.mxu0
      %v3905 = vadd.f32 0.0, %v3904
      %v3906 = vpop.f32.mrf.mxu0
      %v3907 = vadd.f32 0.0, %v3906
      %3908 = vmatmul.bf16.gmra.mxu0 %v2680
      %v3909 = vpop.f32.mrf.mxu0
      %v3910 = vadd.f32 0.0, %v3909
      %v3911 = vpop.f32.mrf.mxu0
      %v3912 = vadd.f32 0.0, %v3911
      %3913 = vmatmul.bf16.gmra.mxu0 %v2683
      %v3914 = vpop.f32.mrf.mxu0
      %v3915 = vadd.f32 0.0, %v3914
      %v3916 = vpop.f32.mrf.mxu0
      %v3917 = vadd.f32 0.0, %v3916
      %3918 = vmatmul.bf16.gmra.mxu0 %v2686
      %v3919 = vpop.f32.mrf.mxu0
      %v3920 = vadd.f32 0.0, %v3919
      %v3921 = vpop.f32.mrf.mxu0
      %v3922 = vadd.f32 0.0, %v3921
      %3923 = vmatmul.bf16.gmra.mxu0 %v2689
      %v3924 = vpop.f32.mrf.mxu0
      %v3925 = vadd.f32 0.0, %v3924
      %v3926 = vpop.f32.mrf.mxu0
      %v3927 = vadd.f32 0.0, %v3926
      %3928 = vmatmul.bf16.gmra.mxu0 %v2692
      %v3929 = vpop.f32.mrf.mxu0
      %v3930 = vadd.f32 0.0, %v3929
      %v3931 = vpop.f32.mrf.mxu0
      %v3932 = vadd.f32 0.0, %v3931
      %3933 = vmatmul.bf16.gmra.mxu0 %v2695
      %v3934 = vpop.f32.mrf.mxu0
      %v3935 = vadd.f32 0.0, %v3934
      %v3936 = vpop.f32.mrf.mxu0
      %v3937 = vadd.f32 0.0, %v3936
      %3938 = vmatmul.bf16.gmra.mxu0 %v2698
      %v3939 = vpop.f32.mrf.mxu0
      %v3940 = vadd.f32 0.0, %v3939
      %v3941 = vpop.f32.mrf.mxu0
      %v3942 = vadd.f32 0.0, %v3941
      %3943 = vmatmul.bf16.gmra.mxu0 %v2701
      %v3944 = vpop.f32.mrf.mxu0
      %v3945 = vadd.f32 0.0, %v3944
      %v3946 = vpop.f32.mrf.mxu0
      %v3947 = vadd.f32 0.0, %v3946
      %3948 = vmatmul.bf16.gmra.mxu0 %v2704
      %v3949 = vpop.f32.mrf.mxu0
      %v3950 = vadd.f32 0.0, %v3949
      %v3951 = vpop.f32.mrf.mxu0
      %v3952 = vadd.f32 0.0, %v3951
      %3953 = vmatmul.bf16.gmra.mxu0 %v2707
      %v3954 = vpop.f32.mrf.mxu0
      %v3955 = vadd.f32 0.0, %v3954
      %v3956 = vpop.f32.mrf.mxu0
      %v3957 = vadd.f32 0.0, %v3956
      %3958 = vmatmul.bf16.gmra.mxu0 %v2710
      %v3959 = vpop.f32.mrf.mxu0
      %v3960 = vadd.f32 0.0, %v3959
      %v3961 = vpop.f32.mrf.mxu0
      %v3962 = vadd.f32 0.0, %v3961
      %3963 = vmatmul.bf16.gmra.mxu0 %v2713
      %v3964 = vpop.f32.mrf.mxu0
      %v3965 = vadd.f32 0.0, %v3964
      %v3966 = vpop.f32.mrf.mxu0
      %v3967 = vadd.f32 0.0, %v3966
      %3968 = vmatmul.bf16.gmra.mxu0 %v2716
      %v3969 = vpop.f32.mrf.mxu0
      %v3970 = vadd.f32 0.0, %v3969
      %v3971 = vpop.f32.mrf.mxu0
      %v3972 = vadd.f32 0.0, %v3971
      %3973 = vmatmul.bf16.gmra.mxu0 %v2719
      %v3974 = vpop.f32.mrf.mxu0
      %v3975 = vadd.f32 0.0, %v3974
      %v3976 = vpop.f32.mrf.mxu0
      %v3977 = vadd.f32 0.0, %v3976
      %3978 = vmatmul.bf16.gmra.mxu0 %v2722
      %v3979 = vpop.f32.mrf.mxu0
      %v3980 = vadd.f32 0.0, %v3979
      %v3981 = vpop.f32.mrf.mxu0
      %v3982 = vadd.f32 0.0, %v3981
      %3983 = vmatmul.bf16.gmra.mxu0 %v2725
      %v3984 = vpop.f32.mrf.mxu0
      %v3985 = vadd.f32 0.0, %v3984
      %v3986 = vpop.f32.mrf.mxu0
      %v3987 = vadd.f32 0.0, %v3986
      %3988 = vmatmul.bf16.gmra.mxu0 %v2728
      %v3989 = vpop.f32.mrf.mxu0
      %v3990 = vadd.f32 0.0, %v3989
      %v3991 = vpop.f32.mrf.mxu0
      %v3992 = vadd.f32 0.0, %v3991
      %3993 = vmatmul.bf16.gmra.mxu0 %v2731
      %v3994 = vpop.f32.mrf.mxu0
      %v3995 = vadd.f32 0.0, %v3994
      %v3996 = vpop.f32.mrf.mxu0
      %v3997 = vadd.f32 0.0, %v3996
      %3998 = vmatmul.bf16.gmra.mxu0 %v2734
      %v3999 = vpop.f32.mrf.mxu0
      %v4000 = vadd.f32 0.0, %v3999
      %v4001 = vpop.f32.mrf.mxu0
      %v4002 = vadd.f32 0.0, %v4001
      %4003 = vmatmul.bf16.gmra.mxu0 %v2737
      %v4004 = vpop.f32.mrf.mxu0
      %v4005 = vadd.f32 0.0, %v4004
      %v4006 = vpop.f32.mrf.mxu0
      %v4007 = vadd.f32 0.0, %v4006
      %4008 = vmatmul.bf16.gmra.mxu0 %v2740
      %v4009 = vpop.f32.mrf.mxu0
      %v4010 = vadd.f32 0.0, %v4009
      %v4011 = vpop.f32.mrf.mxu0
      %v4012 = vadd.f32 0.0, %v4011
      %4013 = vmatmul.bf16.gmra.mxu0 %v2743
      %v4014 = vpop.f32.mrf.mxu0
      %v4015 = vadd.f32 0.0, %v4014
      %v4016 = vpop.f32.mrf.mxu0
      %v4017 = vadd.f32 0.0, %v4016
      %4018 = vmatmul.bf16.gmra.mxu0 %v2746
      %v4019 = vpop.f32.mrf.mxu0
      %v4020 = vadd.f32 0.0, %v4019
      %v4021 = vpop.f32.mrf.mxu0
      %v4022 = vadd.f32 0.0, %v4021
      %4023 = vmatmul.bf16.gmra.mxu0 %v2749
      %v4024 = vpop.f32.mrf.mxu0
      %v4025 = vadd.f32 0.0, %v4024
      %v4026 = vpop.f32.mrf.mxu0
      %v4027 = vadd.f32 0.0, %v4026
      %4028 = vmatmul.bf16.gmra.mxu0 %v2752
      %v4029 = vpop.f32.mrf.mxu0
      %v4030 = vadd.f32 0.0, %v4029
      %v4031 = vpop.f32.mrf.mxu0
      %v4032 = vadd.f32 0.0, %v4031
      %4033 = vmatmul.bf16.gmra.mxu0 %v2755
      %v4034 = vpop.f32.mrf.mxu0
      %v4035 = vadd.f32 0.0, %v4034
      %v4036 = vpop.f32.mrf.mxu0
      %v4037 = vadd.f32 0.0, %v4036
      %4038 = vmatmul.bf16.gmra.mxu0 %v2758
      %v4039 = vpop.f32.mrf.mxu0
      %v4040 = vadd.f32 0.0, %v4039
      %v4041 = vpop.f32.mrf.mxu0
      %v4042 = vadd.f32 0.0, %v4041
      %4043 = vmatmul.bf16.gmra.mxu0 %v2761
      %v4044 = vpop.f32.mrf.mxu0
      %v4045 = vadd.f32 0.0, %v4044
      %v4046 = vpop.f32.mrf.mxu0
      %v4047 = vadd.f32 0.0, %v4046
      %4048 = vmatmul.bf16.gmra.mxu0 %v2764
      %v4049 = vpop.f32.mrf.mxu0
      %v4050 = vadd.f32 0.0, %v4049
      %v4051 = vpop.f32.mrf.mxu0
      %v4052 = vadd.f32 0.0, %v4051
      %4053 = vmatmul.bf16.gmra.mxu0 %v2767
      %v4054 = vpop.f32.mrf.mxu0
      %v4055 = vadd.f32 0.0, %v4054
      %v4056 = vpop.f32.mrf.mxu0
      %v4057 = vadd.f32 0.0, %v4056
      %4058 = vmatmul.bf16.gmra.mxu0 %v2770
      %v4059 = vpop.f32.mrf.mxu0
      %v4060 = vadd.f32 0.0, %v4059
      %v4061 = vpop.f32.mrf.mxu0
      %v4062 = vadd.f32 0.0, %v4061
      %4063 = vmatmul.bf16.gmra.mxu0 %v2773
      %v4064 = vpop.f32.mrf.mxu0
      %v4065 = vadd.f32 0.0, %v4064
      %v4066 = vpop.f32.mrf.mxu0
      %v4067 = vadd.f32 0.0, %v4066
      %4068 = vmatmul.bf16.gmra.mxu0 %v2776
      %v4069 = vpop.f32.mrf.mxu0
      %v4070 = vadd.f32 0.0, %v4069
      %v4071 = vpop.f32.mrf.mxu0
      %v4072 = vadd.f32 0.0, %v4071
      %4073 = vdwg.mxu0
      %v4074 = vld [vmem:[%s2] sm:$0x1]
      %v4076 = vperm.slane %v4074, 0
      %v4078 = vmul.f32 %v2795, %v4076
      %v4079 = vmul.f32 %v2797, %v4076
      %v4080 = vmul.f32 %v2800, %v4076
      %v4081 = vmul.f32 %v2802, %v4076
      %v4082 = vmul.f32 %v2805, %v4076
      %v4083 = vmul.f32 %v2807, %v4076
      %v4084 = vmul.f32 %v2810, %v4076
      %v4085 = vmul.f32 %v2812, %v4076
      %v4086 = vmul.f32 %v2815, %v4076
      %v4087 = vmul.f32 %v2817, %v4076
      %v4088 = vmul.f32 %v2820, %v4076
      %v4089 = vmul.f32 %v2822, %v4076
      %v4090 = vmul.f32 %v2825, %v4076
      %v4091 = vmul.f32 %v2827, %v4076
      %v4092 = vmul.f32 %v2830, %v4076
      %v4093 = vmul.f32 %v2832, %v4076
      %v4094 = vmul.f32 %v2835, %v4076
      %v4095 = vmul.f32 %v2837, %v4076
      %v4096 = vmul.f32 %v2840, %v4076
      %v4097 = vmul.f32 %v2842, %v4076
      %v4098 = vmul.f32 %v2845, %v4076
      %v4099 = vmul.f32 %v2847, %v4076
      %v4100 = vmul.f32 %v2850, %v4076
      %v4101 = vmul.f32 %v2852, %v4076
      %v4102 = vmul.f32 %v2855, %v4076
      %v4103 = vmul.f32 %v2857, %v4076
      %v4104 = vmul.f32 %v2860, %v4076
      %v4105 = vmul.f32 %v2862, %v4076
      %v4106 = vmul.f32 %v2865, %v4076
      %v4107 = vmul.f32 %v2867, %v4076
      %v4108 = vmul.f32 %v2870, %v4076
      %v4109 = vmul.f32 %v2872, %v4076
      %v4110 = vmul.f32 %v2875, %v4076
      %v4111 = vmul.f32 %v2877, %v4076
      %v4112 = vmul.f32 %v2880, %v4076
      %v4113 = vmul.f32 %v2882, %v4076
      %v4114 = vmul.f32 %v2885, %v4076
      %v4115 = vmul.f32 %v2887, %v4076
      %v4116 = vmul.f32 %v2890, %v4076
      %v4117 = vmul.f32 %v2892, %v4076
      %v4118 = vmul.f32 %v2895, %v4076
      %v4119 = vmul.f32 %v2897, %v4076
      %v4120 = vmul.f32 %v2900, %v4076
      %v4121 = vmul.f32 %v2902, %v4076
      %v4122 = vmul.f32 %v2905, %v4076
      %v4123 = vmul.f32 %v2907, %v4076
      %v4124 = vmul.f32 %v2910, %v4076
      %v4125 = vmul.f32 %v2912, %v4076
      %v4126 = vmul.f32 %v2915, %v4076
      %v4127 = vmul.f32 %v2917, %v4076
      %v4128 = vmul.f32 %v2920, %v4076
      %v4129 = vmul.f32 %v2922, %v4076
      %v4130 = vmul.f32 %v2925, %v4076
      %v4131 = vmul.f32 %v2927, %v4076
      %v4132 = vmul.f32 %v2930, %v4076
      %v4133 = vmul.f32 %v2932, %v4076
      %v4134 = vmul.f32 %v2935, %v4076
      %v4135 = vmul.f32 %v2937, %v4076
      %v4136 = vmul.f32 %v2940, %v4076
      %v4137 = vmul.f32 %v2942, %v4076
      %v4138 = vmul.f32 %v2945, %v4076
      %v4139 = vmul.f32 %v2947, %v4076
      %v4140 = vmul.f32 %v2950, %v4076
      %v4141 = vmul.f32 %v2952, %v4076
      %v4142 = vmul.f32 %v2955, %v4076
      %v4143 = vmul.f32 %v2957, %v4076
      %v4144 = vmul.f32 %v2960, %v4076
      %v4145 = vmul.f32 %v2962, %v4076
      %v4146 = vmul.f32 %v2965, %v4076
      %v4147 = vmul.f32 %v2967, %v4076
      %v4148 = vmul.f32 %v2970, %v4076
      %v4149 = vmul.f32 %v2972, %v4076
      %v4150 = vmul.f32 %v2975, %v4076
      %v4151 = vmul.f32 %v2977, %v4076
      %v4152 = vmul.f32 %v2980, %v4076
      %v4153 = vmul.f32 %v2982, %v4076
      %v4154 = vmul.f32 %v2985, %v4076
      %v4155 = vmul.f32 %v2987, %v4076
      %v4156 = vmul.f32 %v2990, %v4076
      %v4157 = vmul.f32 %v2992, %v4076
      %v4158 = vmul.f32 %v2995, %v4076
      %v4159 = vmul.f32 %v2997, %v4076
      %v4160 = vmul.f32 %v3000, %v4076
      %v4161 = vmul.f32 %v3002, %v4076
      %v4162 = vmul.f32 %v3005, %v4076
      %v4163 = vmul.f32 %v3007, %v4076
      %v4164 = vmul.f32 %v3010, %v4076
      %v4165 = vmul.f32 %v3012, %v4076
      %v4166 = vmul.f32 %v3015, %v4076
      %v4167 = vmul.f32 %v3017, %v4076
      %v4168 = vmul.f32 %v3020, %v4076
      %v4169 = vmul.f32 %v3022, %v4076
      %v4170 = vmul.f32 %v3025, %v4076
      %v4171 = vmul.f32 %v3027, %v4076
      %v4172 = vmul.f32 %v3030, %v4076
      %v4173 = vmul.f32 %v3032, %v4076
      %v4174 = vmul.f32 %v3035, %v4076
      %v4175 = vmul.f32 %v3037, %v4076
      %v4176 = vmul.f32 %v3040, %v4076
      %v4177 = vmul.f32 %v3042, %v4076
      %v4178 = vmul.f32 %v3045, %v4076
      %v4179 = vmul.f32 %v3047, %v4076
      %v4180 = vmul.f32 %v3050, %v4076
      %v4181 = vmul.f32 %v3052, %v4076
      %v4182 = vmul.f32 %v3055, %v4076
      %v4183 = vmul.f32 %v3057, %v4076
      %v4184 = vmul.f32 %v3060, %v4076
      %v4185 = vmul.f32 %v3062, %v4076
      %v4186 = vmul.f32 %v3065, %v4076
      %v4187 = vmul.f32 %v3067, %v4076
      %v4188 = vmul.f32 %v3070, %v4076
      %v4189 = vmul.f32 %v3072, %v4076
      %v4190 = vmul.f32 %v3075, %v4076
      %v4191 = vmul.f32 %v3077, %v4076
      %v4192 = vmul.f32 %v3080, %v4076
      %v4193 = vmul.f32 %v3082, %v4076
      %v4194 = vmul.f32 %v3085, %v4076
      %v4195 = vmul.f32 %v3087, %v4076
      %v4196 = vmul.f32 %v3090, %v4076
      %v4197 = vmul.f32 %v3092, %v4076
      %v4198 = vmul.f32 %v3095, %v4076
      %v4199 = vmul.f32 %v3097, %v4076
      %v4200 = vmul.f32 %v3100, %v4076
      %v4201 = vmul.f32 %v3102, %v4076
      %v4202 = vmul.f32 %v3105, %v4076
      %v4203 = vmul.f32 %v3107, %v4076
      %v4204 = vmul.f32 %v3110, %v4076
      %v4205 = vmul.f32 %v3112, %v4076
      %v4206 = vmul.f32 %v3115, %v4076
      %v4207 = vmul.f32 %v3117, %v4076
      %v4208 = vmul.f32 %v3120, %v4076
      %v4209 = vmul.f32 %v3122, %v4076
      %v4210 = vmul.f32 %v3125, %v4076
      %v4211 = vmul.f32 %v3127, %v4076
      %v4212 = vmul.f32 %v3130, %v4076
      %v4213 = vmul.f32 %v3132, %v4076
      %v4214 = vmul.f32 %v3135, %v4076
      %v4215 = vmul.f32 %v3137, %v4076
      %v4216 = vmul.f32 %v3140, %v4076
      %v4217 = vmul.f32 %v3142, %v4076
      %v4218 = vmul.f32 %v3145, %v4076
      %v4219 = vmul.f32 %v3147, %v4076
      %v4220 = vmul.f32 %v3150, %v4076
      %v4221 = vmul.f32 %v3152, %v4076
      %v4222 = vmul.f32 %v3155, %v4076
      %v4223 = vmul.f32 %v3157, %v4076
      %v4224 = vmul.f32 %v3160, %v4076
      %v4225 = vmul.f32 %v3162, %v4076
      %v4226 = vmul.f32 %v3165, %v4076
      %v4227 = vmul.f32 %v3167, %v4076
      %v4228 = vmul.f32 %v3170, %v4076
      %v4229 = vmul.f32 %v3172, %v4076
      %v4230 = vmul.f32 %v3175, %v4076
      %v4231 = vmul.f32 %v3177, %v4076
      %v4232 = vmul.f32 %v3180, %v4076
      %v4233 = vmul.f32 %v3182, %v4076
      %v4234 = vmul.f32 %v3185, %v4076
      %v4235 = vmul.f32 %v3187, %v4076
      %v4236 = vmul.f32 %v3190, %v4076
      %v4237 = vmul.f32 %v3192, %v4076
      %v4238 = vmul.f32 %v3195, %v4076
      %v4239 = vmul.f32 %v3197, %v4076
      %v4240 = vmul.f32 %v3200, %v4076
      %v4241 = vmul.f32 %v3202, %v4076
      %v4242 = vmul.f32 %v3205, %v4076
      %v4243 = vmul.f32 %v3207, %v4076
      %v4244 = vmul.f32 %v3210, %v4076
      %v4245 = vmul.f32 %v3212, %v4076
      %v4246 = vmul.f32 %v3215, %v4076
      %v4247 = vmul.f32 %v3217, %v4076
      %v4248 = vmul.f32 %v3220, %v4076
      %v4249 = vmul.f32 %v3222, %v4076
      %v4250 = vmul.f32 %v3225, %v4076
      %v4251 = vmul.f32 %v3227, %v4076
      %v4252 = vmul.f32 %v3230, %v4076
      %v4253 = vmul.f32 %v3232, %v4076
      %v4254 = vmul.f32 %v3235, %v4076
      %v4255 = vmul.f32 %v3237, %v4076
      %v4256 = vmul.f32 %v3240, %v4076
      %v4257 = vmul.f32 %v3242, %v4076
      %v4258 = vmul.f32 %v3245, %v4076
      %v4259 = vmul.f32 %v3247, %v4076
      %v4260 = vmul.f32 %v3250, %v4076
      %v4261 = vmul.f32 %v3252, %v4076
      %v4262 = vmul.f32 %v3255, %v4076
      %v4263 = vmul.f32 %v3257, %v4076
      %v4264 = vmul.f32 %v3260, %v4076
      %v4265 = vmul.f32 %v3262, %v4076
      %v4266 = vmul.f32 %v3265, %v4076
      %v4267 = vmul.f32 %v3267, %v4076
      %v4268 = vmul.f32 %v3270, %v4076
      %v4269 = vmul.f32 %v3272, %v4076
      %v4270 = vmul.f32 %v3275, %v4076
      %v4271 = vmul.f32 %v3277, %v4076
      %v4272 = vmul.f32 %v3280, %v4076
      %v4273 = vmul.f32 %v3282, %v4076
      %v4274 = vmul.f32 %v3285, %v4076
      %v4275 = vmul.f32 %v3287, %v4076
      %v4276 = vmul.f32 %v3290, %v4076
      %v4277 = vmul.f32 %v3292, %v4076
      %v4278 = vmul.f32 %v3295, %v4076
      %v4279 = vmul.f32 %v3297, %v4076
      %v4280 = vmul.f32 %v3300, %v4076
      %v4281 = vmul.f32 %v3302, %v4076
      %v4282 = vmul.f32 %v3305, %v4076
      %v4283 = vmul.f32 %v3307, %v4076
      %v4284 = vmul.f32 %v3310, %v4076
      %v4285 = vmul.f32 %v3312, %v4076
      %v4286 = vmul.f32 %v3315, %v4076
      %v4287 = vmul.f32 %v3317, %v4076
      %v4288 = vmul.f32 %v3320, %v4076
      %v4289 = vmul.f32 %v3322, %v4076
      %v4290 = vmul.f32 %v3325, %v4076
      %v4291 = vmul.f32 %v3327, %v4076
      %v4292 = vmul.f32 %v3330, %v4076
      %v4293 = vmul.f32 %v3332, %v4076
      %v4294 = vmul.f32 %v3335, %v4076
      %v4295 = vmul.f32 %v3337, %v4076
      %v4296 = vmul.f32 %v3340, %v4076
      %v4297 = vmul.f32 %v3342, %v4076
      %v4298 = vmul.f32 %v3345, %v4076
      %v4299 = vmul.f32 %v3347, %v4076
      %v4300 = vmul.f32 %v3350, %v4076
      %v4301 = vmul.f32 %v3352, %v4076
      %v4302 = vmul.f32 %v3355, %v4076
      %v4303 = vmul.f32 %v3357, %v4076
      %v4304 = vmul.f32 %v3360, %v4076
      %v4305 = vmul.f32 %v3362, %v4076
      %v4306 = vmul.f32 %v3365, %v4076
      %v4307 = vmul.f32 %v3367, %v4076
      %v4308 = vmul.f32 %v3370, %v4076
      %v4309 = vmul.f32 %v3372, %v4076
      %v4310 = vmul.f32 %v3375, %v4076
      %v4311 = vmul.f32 %v3377, %v4076
      %v4312 = vmul.f32 %v3380, %v4076
      %v4313 = vmul.f32 %v3382, %v4076
      %v4314 = vmul.f32 %v3385, %v4076
      %v4315 = vmul.f32 %v3387, %v4076
      %v4316 = vmul.f32 %v3390, %v4076
      %v4317 = vmul.f32 %v3392, %v4076
      %v4318 = vmul.f32 %v3395, %v4076
      %v4319 = vmul.f32 %v3397, %v4076
      %v4320 = vmul.f32 %v3400, %v4076
      %v4321 = vmul.f32 %v3402, %v4076
      %v4322 = vmul.f32 %v3405, %v4076
      %v4323 = vmul.f32 %v3407, %v4076
      %v4324 = vmul.f32 %v3410, %v4076
      %v4325 = vmul.f32 %v3412, %v4076
      %v4326 = vmul.f32 %v3415, %v4076
      %v4327 = vmul.f32 %v3417, %v4076
      %v4328 = vmul.f32 %v3420, %v4076
      %v4329 = vmul.f32 %v3422, %v4076
      %v4330 = vmul.f32 %v3425, %v4076
      %v4331 = vmul.f32 %v3427, %v4076
      %v4332 = vmul.f32 %v3430, %v4076
      %v4333 = vmul.f32 %v3432, %v4076
      %v4334 = vmul.f32 %v3435, %v4076
      %v4335 = vmul.f32 %v3437, %v4076
      %v4336 = vmul.f32 %v3440, %v4076
      %v4337 = vmul.f32 %v3442, %v4076
      %v4338 = vmul.f32 %v3445, %v4076
      %v4339 = vmul.f32 %v3447, %v4076
      %v4340 = vmul.f32 %v3450, %v4076
      %v4341 = vmul.f32 %v3452, %v4076
      %v4342 = vmul.f32 %v3455, %v4076
      %v4343 = vmul.f32 %v3457, %v4076
      %v4344 = vmul.f32 %v3460, %v4076
      %v4345 = vmul.f32 %v3462, %v4076
      %v4346 = vmul.f32 %v3465, %v4076
      %v4347 = vmul.f32 %v3467, %v4076
      %v4348 = vmul.f32 %v3470, %v4076
      %v4349 = vmul.f32 %v3472, %v4076
      %v4350 = vmul.f32 %v3475, %v4076
      %v4351 = vmul.f32 %v3477, %v4076
      %v4352 = vmul.f32 %v3480, %v4076
      %v4353 = vmul.f32 %v3482, %v4076
      %v4354 = vmul.f32 %v3485, %v4076
      %v4355 = vmul.f32 %v3487, %v4076
      %v4356 = vmul.f32 %v3490, %v4076
      %v4357 = vmul.f32 %v3492, %v4076
      %v4358 = vmul.f32 %v3495, %v4076
      %v4359 = vmul.f32 %v3497, %v4076
      %v4360 = vmul.f32 %v3500, %v4076
      %v4361 = vmul.f32 %v3502, %v4076
      %v4362 = vmul.f32 %v3505, %v4076
      %v4363 = vmul.f32 %v3507, %v4076
      %v4364 = vmul.f32 %v3510, %v4076
      %v4365 = vmul.f32 %v3512, %v4076
      %v4366 = vmul.f32 %v3515, %v4076
      %v4367 = vmul.f32 %v3517, %v4076
      %v4368 = vmul.f32 %v3520, %v4076
      %v4369 = vmul.f32 %v3522, %v4076
      %v4370 = vmul.f32 %v3525, %v4076
      %v4371 = vmul.f32 %v3527, %v4076
      %v4372 = vmul.f32 %v3530, %v4076
      %v4373 = vmul.f32 %v3532, %v4076
      %v4374 = vmul.f32 %v3535, %v4076
      %v4375 = vmul.f32 %v3537, %v4076
      %v4376 = vmul.f32 %v3540, %v4076
      %v4377 = vmul.f32 %v3542, %v4076
      %v4378 = vmul.f32 %v3545, %v4076
      %v4379 = vmul.f32 %v3547, %v4076
      %v4380 = vmul.f32 %v3550, %v4076
      %v4381 = vmul.f32 %v3552, %v4076
      %v4382 = vmul.f32 %v3555, %v4076
      %v4383 = vmul.f32 %v3557, %v4076
      %v4384 = vmul.f32 %v3560, %v4076
      %v4385 = vmul.f32 %v3562, %v4076
      %v4386 = vmul.f32 %v3565, %v4076
      %v4387 = vmul.f32 %v3567, %v4076
      %v4388 = vmul.f32 %v3570, %v4076
      %v4389 = vmul.f32 %v3572, %v4076
      %v4390 = vmul.f32 %v3575, %v4076
      %v4391 = vmul.f32 %v3577, %v4076
      %v4392 = vmul.f32 %v3580, %v4076
      %v4393 = vmul.f32 %v3582, %v4076
      %v4394 = vmul.f32 %v3585, %v4076
      %v4395 = vmul.f32 %v3587, %v4076
      %v4396 = vmul.f32 %v3590, %v4076
      %v4397 = vmul.f32 %v3592, %v4076
      %v4398 = vmul.f32 %v3595, %v4076
      %v4399 = vmul.f32 %v3597, %v4076
      %v4400 = vmul.f32 %v3600, %v4076
      %v4401 = vmul.f32 %v3602, %v4076
      %v4402 = vmul.f32 %v3605, %v4076
      %v4403 = vmul.f32 %v3607, %v4076
      %v4404 = vmul.f32 %v3610, %v4076
      %v4405 = vmul.f32 %v3612, %v4076
      %v4406 = vmul.f32 %v3615, %v4076
      %v4407 = vmul.f32 %v3617, %v4076
      %v4408 = vmul.f32 %v3620, %v4076
      %v4409 = vmul.f32 %v3622, %v4076
      %v4410 = vmul.f32 %v3625, %v4076
      %v4411 = vmul.f32 %v3627, %v4076
      %v4412 = vmul.f32 %v3630, %v4076
      %v4413 = vmul.f32 %v3632, %v4076
      %v4414 = vmul.f32 %v3635, %v4076
      %v4415 = vmul.f32 %v3637, %v4076
      %v4416 = vmul.f32 %v3640, %v4076
      %v4417 = vmul.f32 %v3642, %v4076
      %v4418 = vmul.f32 %v3645, %v4076
      %v4419 = vmul.f32 %v3647, %v4076
      %v4420 = vmul.f32 %v3650, %v4076
      %v4421 = vmul.f32 %v3652, %v4076
      %v4422 = vmul.f32 %v3655, %v4076
      %v4423 = vmul.f32 %v3657, %v4076
      %v4424 = vmul.f32 %v3660, %v4076
      %v4425 = vmul.f32 %v3662, %v4076
      %v4426 = vmul.f32 %v3665, %v4076
      %v4427 = vmul.f32 %v3667, %v4076
      %v4428 = vmul.f32 %v3670, %v4076
      %v4429 = vmul.f32 %v3672, %v4076
      %v4430 = vmul.f32 %v3675, %v4076
      %v4431 = vmul.f32 %v3677, %v4076
      %v4432 = vmul.f32 %v3680, %v4076
      %v4433 = vmul.f32 %v3682, %v4076
      %v4434 = vmul.f32 %v3685, %v4076
      %v4435 = vmul.f32 %v3687, %v4076
      %v4436 = vmul.f32 %v3690, %v4076
      %v4437 = vmul.f32 %v3692, %v4076
      %v4438 = vmul.f32 %v3695, %v4076
      %v4439 = vmul.f32 %v3697, %v4076
      %v4440 = vmul.f32 %v3700, %v4076
      %v4441 = vmul.f32 %v3702, %v4076
      %v4442 = vmul.f32 %v3705, %v4076
      %v4443 = vmul.f32 %v3707, %v4076
      %v4444 = vmul.f32 %v3710, %v4076
      %v4445 = vmul.f32 %v3712, %v4076
      %v4446 = vmul.f32 %v3715, %v4076
      %v4447 = vmul.f32 %v3717, %v4076
      %v4448 = vmul.f32 %v3720, %v4076
      %v4449 = vmul.f32 %v3722, %v4076
      %v4450 = vmul.f32 %v3725, %v4076
      %v4451 = vmul.f32 %v3727, %v4076
      %v4452 = vmul.f32 %v3730, %v4076
      %v4453 = vmul.f32 %v3732, %v4076
      %v4454 = vmul.f32 %v3735, %v4076
      %v4455 = vmul.f32 %v3737, %v4076
      %v4456 = vmul.f32 %v3740, %v4076
      %v4457 = vmul.f32 %v3742, %v4076
      %v4458 = vmul.f32 %v3745, %v4076
      %v4459 = vmul.f32 %v3747, %v4076
      %v4460 = vmul.f32 %v3750, %v4076
      %v4461 = vmul.f32 %v3752, %v4076
      %v4462 = vmul.f32 %v3755, %v4076
      %v4463 = vmul.f32 %v3757, %v4076
      %v4464 = vmul.f32 %v3760, %v4076
      %v4465 = vmul.f32 %v3762, %v4076
      %v4466 = vmul.f32 %v3765, %v4076
      %v4467 = vmul.f32 %v3767, %v4076
      %v4468 = vmul.f32 %v3770, %v4076
      %v4469 = vmul.f32 %v3772, %v4076
      %v4470 = vmul.f32 %v3775, %v4076
      %v4471 = vmul.f32 %v3777, %v4076
      %v4472 = vmul.f32 %v3780, %v4076
      %v4473 = vmul.f32 %v3782, %v4076
      %v4474 = vmul.f32 %v3785, %v4076
      %v4475 = vmul.f32 %v3787, %v4076
      %v4476 = vmul.f32 %v3790, %v4076
      %v4477 = vmul.f32 %v3792, %v4076
      %v4478 = vmul.f32 %v3795, %v4076
      %v4479 = vmul.f32 %v3797, %v4076
      %v4480 = vmul.f32 %v3800, %v4076
      %v4481 = vmul.f32 %v3802, %v4076
      %v4482 = vmul.f32 %v3805, %v4076
      %v4483 = vmul.f32 %v3807, %v4076
      %v4484 = vmul.f32 %v3810, %v4076
      %v4485 = vmul.f32 %v3812, %v4076
      %v4486 = vmul.f32 %v3815, %v4076
      %v4487 = vmul.f32 %v3817, %v4076
      %v4488 = vmul.f32 %v3820, %v4076
      %v4489 = vmul.f32 %v3822, %v4076
      %v4490 = vmul.f32 %v3825, %v4076
      %v4491 = vmul.f32 %v3827, %v4076
      %v4492 = vmul.f32 %v3830, %v4076
      %v4493 = vmul.f32 %v3832, %v4076
      %v4494 = vmul.f32 %v3835, %v4076
      %v4495 = vmul.f32 %v3837, %v4076
      %v4496 = vmul.f32 %v3840, %v4076
      %v4497 = vmul.f32 %v3842, %v4076
      %v4498 = vmul.f32 %v3845, %v4076
      %v4499 = vmul.f32 %v3847, %v4076
      %v4500 = vmul.f32 %v3850, %v4076
      %v4501 = vmul.f32 %v3852, %v4076
      %v4502 = vmul.f32 %v3855, %v4076
      %v4503 = vmul.f32 %v3857, %v4076
      %v4504 = vmul.f32 %v3860, %v4076
      %v4505 = vmul.f32 %v3862, %v4076
      %v4506 = vmul.f32 %v3865, %v4076
      %v4507 = vmul.f32 %v3867, %v4076
      %v4508 = vmul.f32 %v3870, %v4076
      %v4509 = vmul.f32 %v3872, %v4076
      %v4510 = vmul.f32 %v3875, %v4076
      %v4511 = vmul.f32 %v3877, %v4076
      %v4512 = vmul.f32 %v3880, %v4076
      %v4513 = vmul.f32 %v3882, %v4076
      %v4514 = vmul.f32 %v3885, %v4076
      %v4515 = vmul.f32 %v3887, %v4076
      %v4516 = vmul.f32 %v3890, %v4076
      %v4517 = vmul.f32 %v3892, %v4076
      %v4518 = vmul.f32 %v3895, %v4076
      %v4519 = vmul.f32 %v3897, %v4076
      %v4520 = vmul.f32 %v3900, %v4076
      %v4521 = vmul.f32 %v3902, %v4076
      %v4522 = vmul.f32 %v3905, %v4076
      %v4523 = vmul.f32 %v3907, %v4076
      %v4524 = vmul.f32 %v3910, %v4076
      %v4525 = vmul.f32 %v3912, %v4076
      %v4526 = vmul.f32 %v3915, %v4076
      %v4527 = vmul.f32 %v3917, %v4076
      %v4528 = vmul.f32 %v3920, %v4076
      %v4529 = vmul.f32 %v3922, %v4076
      %v4530 = vmul.f32 %v3925, %v4076
      %v4531 = vmul.f32 %v3927, %v4076
      %v4532 = vmul.f32 %v3930, %v4076
      %v4533 = vmul.f32 %v3932, %v4076
      %v4534 = vmul.f32 %v3935, %v4076
      %v4535 = vmul.f32 %v3937, %v4076
      %v4536 = vmul.f32 %v3940, %v4076
      %v4537 = vmul.f32 %v3942, %v4076
      %v4538 = vmul.f32 %v3945, %v4076
      %v4539 = vmul.f32 %v3947, %v4076
      %v4540 = vmul.f32 %v3950, %v4076
      %v4541 = vmul.f32 %v3952, %v4076
      %v4542 = vmul.f32 %v3955, %v4076
      %v4543 = vmul.f32 %v3957, %v4076
      %v4544 = vmul.f32 %v3960, %v4076
      %v4545 = vmul.f32 %v3962, %v4076
      %v4546 = vmul.f32 %v3965, %v4076
      %v4547 = vmul.f32 %v3967, %v4076
      %v4548 = vmul.f32 %v3970, %v4076
      %v4549 = vmul.f32 %v3972, %v4076
      %v4550 = vmul.f32 %v3975, %v4076
      %v4551 = vmul.f32 %v3977, %v4076
      %v4552 = vmul.f32 %v3980, %v4076
      %v4553 = vmul.f32 %v3982, %v4076
      %v4554 = vmul.f32 %v3985, %v4076
      %v4555 = vmul.f32 %v3987, %v4076
      %v4556 = vmul.f32 %v3990, %v4076
      %v4557 = vmul.f32 %v3992, %v4076
      %v4558 = vmul.f32 %v3995, %v4076
      %v4559 = vmul.f32 %v3997, %v4076
      %v4560 = vmul.f32 %v4000, %v4076
      %v4561 = vmul.f32 %v4002, %v4076
      %v4562 = vmul.f32 %v4005, %v4076
      %v4563 = vmul.f32 %v4007, %v4076
      %v4564 = vmul.f32 %v4010, %v4076
      %v4565 = vmul.f32 %v4012, %v4076
      %v4566 = vmul.f32 %v4015, %v4076
      %v4567 = vmul.f32 %v4017, %v4076
      %v4568 = vmul.f32 %v4020, %v4076
      %v4569 = vmul.f32 %v4022, %v4076
      %v4570 = vmul.f32 %v4025, %v4076
      %v4571 = vmul.f32 %v4027, %v4076
      %v4572 = vmul.f32 %v4030, %v4076
      %v4573 = vmul.f32 %v4032, %v4076
      %v4574 = vmul.f32 %v4035, %v4076
      %v4575 = vmul.f32 %v4037, %v4076
      %v4576 = vmul.f32 %v4040, %v4076
      %v4577 = vmul.f32 %v4042, %v4076
      %v4578 = vmul.f32 %v4045, %v4076
      %v4579 = vmul.f32 %v4047, %v4076
      %v4580 = vmul.f32 %v4050, %v4076
      %v4581 = vmul.f32 %v4052, %v4076
      %v4582 = vmul.f32 %v4055, %v4076
      %v4583 = vmul.f32 %v4057, %v4076
      %v4584 = vmul.f32 %v4060, %v4076
      %v4585 = vmul.f32 %v4062, %v4076
      %v4586 = vmul.f32 %v4065, %v4076
      %v4587 = vmul.f32 %v4067, %v4076
      %v4588 = vmul.f32 %v4070, %v4076
      %v4589 = vmul.f32 %v4072, %v4076
      %v4590 = vld [vmem:[%s3] sm:$0x1]
      %v4592 = vperm.slane %v4590, 0
      %v4594 = vadd.f32 %v4078, %v4592
      %v4595 = vadd.f32 %v4079, %v4592
      %v4596 = vadd.f32 %v4080, %v4592
      %v4597 = vadd.f32 %v4081, %v4592
      %v4598 = vadd.f32 %v4082, %v4592
      %v4599 = vadd.f32 %v4083, %v4592
      %v4600 = vadd.f32 %v4084, %v4592
      %v4601 = vadd.f32 %v4085, %v4592
      %v4602 = vadd.f32 %v4086, %v4592
      %v4603 = vadd.f32 %v4087, %v4592
      %v4604 = vadd.f32 %v4088, %v4592
      %v4605 = vadd.f32 %v4089, %v4592
      %v4606 = vadd.f32 %v4090, %v4592
      %v4607 = vadd.f32 %v4091, %v4592
      %v4608 = vadd.f32 %v4092, %v4592
      %v4609 = vadd.f32 %v4093, %v4592
      %v4610 = vadd.f32 %v4094, %v4592
      %v4611 = vadd.f32 %v4095, %v4592
      %v4612 = vadd.f32 %v4096, %v4592
      %v4613 = vadd.f32 %v4097, %v4592
      %v4614 = vadd.f32 %v4098, %v4592
      %v4615 = vadd.f32 %v4099, %v4592
      %v4616 = vadd.f32 %v4100, %v4592
      %v4617 = vadd.f32 %v4101, %v4592
      %v4618 = vadd.f32 %v4102, %v4592
      %v4619 = vadd.f32 %v4103, %v4592
      %v4620 = vadd.f32 %v4104, %v4592
      %v4621 = vadd.f32 %v4105, %v4592
      %v4622 = vadd.f32 %v4106, %v4592
      %v4623 = vadd.f32 %v4107, %v4592
      %v4624 = vadd.f32 %v4108, %v4592
      %v4625 = vadd.f32 %v4109, %v4592
      %v4626 = vadd.f32 %v4110, %v4592
      %v4627 = vadd.f32 %v4111, %v4592
      %v4628 = vadd.f32 %v4112, %v4592
      %v4629 = vadd.f32 %v4113, %v4592
      %v4630 = vadd.f32 %v4114, %v4592
      %v4631 = vadd.f32 %v4115, %v4592
      %v4632 = vadd.f32 %v4116, %v4592
      %v4633 = vadd.f32 %v4117, %v4592
      %v4634 = vadd.f32 %v4118, %v4592
      %v4635 = vadd.f32 %v4119, %v4592
      %v4636 = vadd.f32 %v4120, %v4592
      %v4637 = vadd.f32 %v4121, %v4592
      %v4638 = vadd.f32 %v4122, %v4592
      %v4639 = vadd.f32 %v4123, %v4592
      %v4640 = vadd.f32 %v4124, %v4592
      %v4641 = vadd.f32 %v4125, %v4592
      %v4642 = vadd.f32 %v4126, %v4592
      %v4643 = vadd.f32 %v4127, %v4592
      %v4644 = vadd.f32 %v4128, %v4592
      %v4645 = vadd.f32 %v4129, %v4592
      %v4646 = vadd.f32 %v4130, %v4592
      %v4647 = vadd.f32 %v4131, %v4592
      %v4648 = vadd.f32 %v4132, %v4592
      %v4649 = vadd.f32 %v4133, %v4592
      %v4650 = vadd.f32 %v4134, %v4592
      %v4651 = vadd.f32 %v4135, %v4592
      %v4652 = vadd.f32 %v4136, %v4592
      %v4653 = vadd.f32 %v4137, %v4592
      %v4654 = vadd.f32 %v4138, %v4592
      %v4655 = vadd.f32 %v4139, %v4592
      %v4656 = vadd.f32 %v4140, %v4592
      %v4657 = vadd.f32 %v4141, %v4592
      %v4658 = vadd.f32 %v4142, %v4592
      %v4659 = vadd.f32 %v4143, %v4592
      %v4660 = vadd.f32 %v4144, %v4592
      %v4661 = vadd.f32 %v4145, %v4592
      %v4662 = vadd.f32 %v4146, %v4592
      %v4663 = vadd.f32 %v4147, %v4592
      %v4664 = vadd.f32 %v4148, %v4592
      %v4665 = vadd.f32 %v4149, %v4592
      %v4666 = vadd.f32 %v4150, %v4592
      %v4667 = vadd.f32 %v4151, %v4592
      %v4668 = vadd.f32 %v4152, %v4592
      %v4669 = vadd.f32 %v4153, %v4592
      %v4670 = vadd.f32 %v4154, %v4592
      %v4671 = vadd.f32 %v4155, %v4592
      %v4672 = vadd.f32 %v4156, %v4592
      %v4673 = vadd.f32 %v4157, %v4592
      %v4674 = vadd.f32 %v4158, %v4592
      %v4675 = vadd.f32 %v4159, %v4592
      %v4676 = vadd.f32 %v4160, %v4592
      %v4677 = vadd.f32 %v4161, %v4592
      %v4678 = vadd.f32 %v4162, %v4592
      %v4679 = vadd.f32 %v4163, %v4592
      %v4680 = vadd.f32 %v4164, %v4592
      %v4681 = vadd.f32 %v4165, %v4592
      %v4682 = vadd.f32 %v4166, %v4592
      %v4683 = vadd.f32 %v4167, %v4592
      %v4684 = vadd.f32 %v4168, %v4592
      %v4685 = vadd.f32 %v4169, %v4592
      %v4686 = vadd.f32 %v4170, %v4592
      %v4687 = vadd.f32 %v4171, %v4592
      %v4688 = vadd.f32 %v4172, %v4592
      %v4689 = vadd.f32 %v4173, %v4592
      %v4690 = vadd.f32 %v4174, %v4592
      %v4691 = vadd.f32 %v4175, %v4592
      %v4692 = vadd.f32 %v4176, %v4592
      %v4693 = vadd.f32 %v4177, %v4592
      %v4694 = vadd.f32 %v4178, %v4592
      %v4695 = vadd.f32 %v4179, %v4592
      %v4696 = vadd.f32 %v4180, %v4592
      %v4697 = vadd.f32 %v4181, %v4592
      %v4698 = vadd.f32 %v4182, %v4592
      %v4699 = vadd.f32 %v4183, %v4592
      %v4700 = vadd.f32 %v4184, %v4592
      %v4701 = vadd.f32 %v4185, %v4592
      %v4702 = vadd.f32 %v4186, %v4592
      %v4703 = vadd.f32 %v4187, %v4592
      %v4704 = vadd.f32 %v4188, %v4592
      %v4705 = vadd.f32 %v4189, %v4592
      %v4706 = vadd.f32 %v4190, %v4592
      %v4707 = vadd.f32 %v4191, %v4592
      %v4708 = vadd.f32 %v4192, %v4592
      %v4709 = vadd.f32 %v4193, %v4592
      %v4710 = vadd.f32 %v4194, %v4592
      %v4711 = vadd.f32 %v4195, %v4592
      %v4712 = vadd.f32 %v4196, %v4592
      %v4713 = vadd.f32 %v4197, %v4592
      %v4714 = vadd.f32 %v4198, %v4592
      %v4715 = vadd.f32 %v4199, %v4592
      %v4716 = vadd.f32 %v4200, %v4592
      %v4717 = vadd.f32 %v4201, %v4592
      %v4718 = vadd.f32 %v4202, %v4592
      %v4719 = vadd.f32 %v4203, %v4592
      %v4720 = vadd.f32 %v4204, %v4592
      %v4721 = vadd.f32 %v4205, %v4592
      %v4722 = vadd.f32 %v4206, %v4592
      %v4723 = vadd.f32 %v4207, %v4592
      %v4724 = vadd.f32 %v4208, %v4592
      %v4725 = vadd.f32 %v4209, %v4592
      %v4726 = vadd.f32 %v4210, %v4592
      %v4727 = vadd.f32 %v4211, %v4592
      %v4728 = vadd.f32 %v4212, %v4592
      %v4729 = vadd.f32 %v4213, %v4592
      %v4730 = vadd.f32 %v4214, %v4592
      %v4731 = vadd.f32 %v4215, %v4592
      %v4732 = vadd.f32 %v4216, %v4592
      %v4733 = vadd.f32 %v4217, %v4592
      %v4734 = vadd.f32 %v4218, %v4592
      %v4735 = vadd.f32 %v4219, %v4592
      %v4736 = vadd.f32 %v4220, %v4592
      %v4737 = vadd.f32 %v4221, %v4592
      %v4738 = vadd.f32 %v4222, %v4592
      %v4739 = vadd.f32 %v4223, %v4592
      %v4740 = vadd.f32 %v4224, %v4592
      %v4741 = vadd.f32 %v4225, %v4592
      %v4742 = vadd.f32 %v4226, %v4592
      %v4743 = vadd.f32 %v4227, %v4592
      %v4744 = vadd.f32 %v4228, %v4592
      %v4745 = vadd.f32 %v4229, %v4592
      %v4746 = vadd.f32 %v4230, %v4592
      %v4747 = vadd.f32 %v4231, %v4592
      %v4748 = vadd.f32 %v4232, %v4592
      %v4749 = vadd.f32 %v4233, %v4592
      %v4750 = vadd.f32 %v4234, %v4592
      %v4751 = vadd.f32 %v4235, %v4592
      %v4752 = vadd.f32 %v4236, %v4592
      %v4753 = vadd.f32 %v4237, %v4592
      %v4754 = vadd.f32 %v4238, %v4592
      %v4755 = vadd.f32 %v4239, %v4592
      %v4756 = vadd.f32 %v4240, %v4592
      %v4757 = vadd.f32 %v4241, %v4592
      %v4758 = vadd.f32 %v4242, %v4592
      %v4759 = vadd.f32 %v4243, %v4592
      %v4760 = vadd.f32 %v4244, %v4592
      %v4761 = vadd.f32 %v4245, %v4592
      %v4762 = vadd.f32 %v4246, %v4592
      %v4763 = vadd.f32 %v4247, %v4592
      %v4764 = vadd.f32 %v4248, %v4592
      %v4765 = vadd.f32 %v4249, %v4592
      %v4766 = vadd.f32 %v4250, %v4592
      %v4767 = vadd.f32 %v4251, %v4592
      %v4768 = vadd.f32 %v4252, %v4592
      %v4769 = vadd.f32 %v4253, %v4592
      %v4770 = vadd.f32 %v4254, %v4592
      %v4771 = vadd.f32 %v4255, %v4592
      %v4772 = vadd.f32 %v4256, %v4592
      %v4773 = vadd.f32 %v4257, %v4592
      %v4774 = vadd.f32 %v4258, %v4592
      %v4775 = vadd.f32 %v4259, %v4592
      %v4776 = vadd.f32 %v4260, %v4592
      %v4777 = vadd.f32 %v4261, %v4592
      %v4778 = vadd.f32 %v4262, %v4592
      %v4779 = vadd.f32 %v4263, %v4592
      %v4780 = vadd.f32 %v4264, %v4592
      %v4781 = vadd.f32 %v4265, %v4592
      %v4782 = vadd.f32 %v4266, %v4592
      %v4783 = vadd.f32 %v4267, %v4592
      %v4784 = vadd.f32 %v4268, %v4592
      %v4785 = vadd.f32 %v4269, %v4592
      %v4786 = vadd.f32 %v4270, %v4592
      %v4787 = vadd.f32 %v4271, %v4592
      %v4788 = vadd.f32 %v4272, %v4592
      %v4789 = vadd.f32 %v4273, %v4592
      %v4790 = vadd.f32 %v4274, %v4592
      %v4791 = vadd.f32 %v4275, %v4592
      %v4792 = vadd.f32 %v4276, %v4592
      %v4793 = vadd.f32 %v4277, %v4592
      %v4794 = vadd.f32 %v4278, %v4592
      %v4795 = vadd.f32 %v4279, %v4592
      %v4796 = vadd.f32 %v4280, %v4592
      %v4797 = vadd.f32 %v4281, %v4592
      %v4798 = vadd.f32 %v4282, %v4592
      %v4799 = vadd.f32 %v4283, %v4592
      %v4800 = vadd.f32 %v4284, %v4592
      %v4801 = vadd.f32 %v4285, %v4592
      %v4802 = vadd.f32 %v4286, %v4592
      %v4803 = vadd.f32 %v4287, %v4592
      %v4804 = vadd.f32 %v4288, %v4592
      %v4805 = vadd.f32 %v4289, %v4592
      %v4806 = vadd.f32 %v4290, %v4592
      %v4807 = vadd.f32 %v4291, %v4592
      %v4808 = vadd.f32 %v4292, %v4592
      %v4809 = vadd.f32 %v4293, %v4592
      %v4810 = vadd.f32 %v4294, %v4592
      %v4811 = vadd.f32 %v4295, %v4592
      %v4812 = vadd.f32 %v4296, %v4592
      %v4813 = vadd.f32 %v4297, %v4592
      %v4814 = vadd.f32 %v4298, %v4592
      %v4815 = vadd.f32 %v4299, %v4592
      %v4816 = vadd.f32 %v4300, %v4592
      %v4817 = vadd.f32 %v4301, %v4592
      %v4818 = vadd.f32 %v4302, %v4592
      %v4819 = vadd.f32 %v4303, %v4592
      %v4820 = vadd.f32 %v4304, %v4592
      %v4821 = vadd.f32 %v4305, %v4592
      %v4822 = vadd.f32 %v4306, %v4592
      %v4823 = vadd.f32 %v4307, %v4592
      %v4824 = vadd.f32 %v4308, %v4592
      %v4825 = vadd.f32 %v4309, %v4592
      %v4826 = vadd.f32 %v4310, %v4592
      %v4827 = vadd.f32 %v4311, %v4592
      %v4828 = vadd.f32 %v4312, %v4592
      %v4829 = vadd.f32 %v4313, %v4592
      %v4830 = vadd.f32 %v4314, %v4592
      %v4831 = vadd.f32 %v4315, %v4592
      %v4832 = vadd.f32 %v4316, %v4592
      %v4833 = vadd.f32 %v4317, %v4592
      %v4834 = vadd.f32 %v4318, %v4592
      %v4835 = vadd.f32 %v4319, %v4592
      %v4836 = vadd.f32 %v4320, %v4592
      %v4837 = vadd.f32 %v4321, %v4592
      %v4838 = vadd.f32 %v4322, %v4592
      %v4839 = vadd.f32 %v4323, %v4592
      %v4840 = vadd.f32 %v4324, %v4592
      %v4841 = vadd.f32 %v4325, %v4592
      %v4842 = vadd.f32 %v4326, %v4592
      %v4843 = vadd.f32 %v4327, %v4592
      %v4844 = vadd.f32 %v4328, %v4592
      %v4845 = vadd.f32 %v4329, %v4592
      %v4846 = vadd.f32 %v4330, %v4592
      %v4847 = vadd.f32 %v4331, %v4592
      %v4848 = vadd.f32 %v4332, %v4592
      %v4849 = vadd.f32 %v4333, %v4592
      %v4850 = vadd.f32 %v4334, %v4592
      %v4851 = vadd.f32 %v4335, %v4592
      %v4852 = vadd.f32 %v4336, %v4592
      %v4853 = vadd.f32 %v4337, %v4592
      %v4854 = vadd.f32 %v4338, %v4592
      %v4855 = vadd.f32 %v4339, %v4592
      %v4856 = vadd.f32 %v4340, %v4592
      %v4857 = vadd.f32 %v4341, %v4592
      %v4858 = vadd.f32 %v4342, %v4592
      %v4859 = vadd.f32 %v4343, %v4592
      %v4860 = vadd.f32 %v4344, %v4592
      %v4861 = vadd.f32 %v4345, %v4592
      %v4862 = vadd.f32 %v4346, %v4592
      %v4863 = vadd.f32 %v4347, %v4592
      %v4864 = vadd.f32 %v4348, %v4592
      %v4865 = vadd.f32 %v4349, %v4592
      %v4866 = vadd.f32 %v4350, %v4592
      %v4867 = vadd.f32 %v4351, %v4592
      %v4868 = vadd.f32 %v4352, %v4592
      %v4869 = vadd.f32 %v4353, %v4592
      %v4870 = vadd.f32 %v4354, %v4592
      %v4871 = vadd.f32 %v4355, %v4592
      %v4872 = vadd.f32 %v4356, %v4592
      %v4873 = vadd.f32 %v4357, %v4592
      %v4874 = vadd.f32 %v4358, %v4592
      %v4875 = vadd.f32 %v4359, %v4592
      %v4876 = vadd.f32 %v4360, %v4592
      %v4877 = vadd.f32 %v4361, %v4592
      %v4878 = vadd.f32 %v4362, %v4592
      %v4879 = vadd.f32 %v4363, %v4592
      %v4880 = vadd.f32 %v4364, %v4592
      %v4881 = vadd.f32 %v4365, %v4592
      %v4882 = vadd.f32 %v4366, %v4592
      %v4883 = vadd.f32 %v4367, %v4592
      %v4884 = vadd.f32 %v4368, %v4592
      %v4885 = vadd.f32 %v4369, %v4592
      %v4886 = vadd.f32 %v4370, %v4592
      %v4887 = vadd.f32 %v4371, %v4592
      %v4888 = vadd.f32 %v4372, %v4592
      %v4889 = vadd.f32 %v4373, %v4592
      %v4890 = vadd.f32 %v4374, %v4592
      %v4891 = vadd.f32 %v4375, %v4592
      %v4892 = vadd.f32 %v4376, %v4592
      %v4893 = vadd.f32 %v4377, %v4592
      %v4894 = vadd.f32 %v4378, %v4592
      %v4895 = vadd.f32 %v4379, %v4592
      %v4896 = vadd.f32 %v4380, %v4592
      %v4897 = vadd.f32 %v4381, %v4592
      %v4898 = vadd.f32 %v4382, %v4592
      %v4899 = vadd.f32 %v4383, %v4592
      %v4900 = vadd.f32 %v4384, %v4592
      %v4901 = vadd.f32 %v4385, %v4592
      %v4902 = vadd.f32 %v4386, %v4592
      %v4903 = vadd.f32 %v4387, %v4592
      %v4904 = vadd.f32 %v4388, %v4592
      %v4905 = vadd.f32 %v4389, %v4592
      %v4906 = vadd.f32 %v4390, %v4592
      %v4907 = vadd.f32 %v4391, %v4592
      %v4908 = vadd.f32 %v4392, %v4592
      %v4909 = vadd.f32 %v4393, %v4592
      %v4910 = vadd.f32 %v4394, %v4592
      %v4911 = vadd.f32 %v4395, %v4592
      %v4912 = vadd.f32 %v4396, %v4592
      %v4913 = vadd.f32 %v4397, %v4592
      %v4914 = vadd.f32 %v4398, %v4592
      %v4915 = vadd.f32 %v4399, %v4592
      %v4916 = vadd.f32 %v4400, %v4592
      %v4917 = vadd.f32 %v4401, %v4592
      %v4918 = vadd.f32 %v4402, %v4592
      %v4919 = vadd.f32 %v4403, %v4592
      %v4920 = vadd.f32 %v4404, %v4592
      %v4921 = vadd.f32 %v4405, %v4592
      %v4922 = vadd.f32 %v4406, %v4592
      %v4923 = vadd.f32 %v4407, %v4592
      %v4924 = vadd.f32 %v4408, %v4592
      %v4925 = vadd.f32 %v4409, %v4592
      %v4926 = vadd.f32 %v4410, %v4592
      %v4927 = vadd.f32 %v4411, %v4592
      %v4928 = vadd.f32 %v4412, %v4592
      %v4929 = vadd.f32 %v4413, %v4592
      %v4930 = vadd.f32 %v4414, %v4592
      %v4931 = vadd.f32 %v4415, %v4592
      %v4932 = vadd.f32 %v4416, %v4592
      %v4933 = vadd.f32 %v4417, %v4592
      %v4934 = vadd.f32 %v4418, %v4592
      %v4935 = vadd.f32 %v4419, %v4592
      %v4936 = vadd.f32 %v4420, %v4592
      %v4937 = vadd.f32 %v4421, %v4592
      %v4938 = vadd.f32 %v4422, %v4592
      %v4939 = vadd.f32 %v4423, %v4592
      %v4940 = vadd.f32 %v4424, %v4592
      %v4941 = vadd.f32 %v4425, %v4592
      %v4942 = vadd.f32 %v4426, %v4592
      %v4943 = vadd.f32 %v4427, %v4592
      %v4944 = vadd.f32 %v4428, %v4592
      %v4945 = vadd.f32 %v4429, %v4592
      %v4946 = vadd.f32 %v4430, %v4592
      %v4947 = vadd.f32 %v4431, %v4592
      %v4948 = vadd.f32 %v4432, %v4592
      %v4949 = vadd.f32 %v4433, %v4592
      %v4950 = vadd.f32 %v4434, %v4592
      %v4951 = vadd.f32 %v4435, %v4592
      %v4952 = vadd.f32 %v4436, %v4592
      %v4953 = vadd.f32 %v4437, %v4592
      %v4954 = vadd.f32 %v4438, %v4592
      %v4955 = vadd.f32 %v4439, %v4592
      %v4956 = vadd.f32 %v4440, %v4592
      %v4957 = vadd.f32 %v4441, %v4592
      %v4958 = vadd.f32 %v4442, %v4592
      %v4959 = vadd.f32 %v4443, %v4592
      %v4960 = vadd.f32 %v4444, %v4592
      %v4961 = vadd.f32 %v4445, %v4592
      %v4962 = vadd.f32 %v4446, %v4592
      %v4963 = vadd.f32 %v4447, %v4592
      %v4964 = vadd.f32 %v4448, %v4592
      %v4965 = vadd.f32 %v4449, %v4592
      %v4966 = vadd.f32 %v4450, %v4592
      %v4967 = vadd.f32 %v4451, %v4592
      %v4968 = vadd.f32 %v4452, %v4592
      %v4969 = vadd.f32 %v4453, %v4592
      %v4970 = vadd.f32 %v4454, %v4592
      %v4971 = vadd.f32 %v4455, %v4592
      %v4972 = vadd.f32 %v4456, %v4592
      %v4973 = vadd.f32 %v4457, %v4592
      %v4974 = vadd.f32 %v4458, %v4592
      %v4975 = vadd.f32 %v4459, %v4592
      %v4976 = vadd.f32 %v4460, %v4592
      %v4977 = vadd.f32 %v4461, %v4592
      %v4978 = vadd.f32 %v4462, %v4592
      %v4979 = vadd.f32 %v4463, %v4592
      %v4980 = vadd.f32 %v4464, %v4592
      %v4981 = vadd.f32 %v4465, %v4592
      %v4982 = vadd.f32 %v4466, %v4592
      %v4983 = vadd.f32 %v4467, %v4592
      %v4984 = vadd.f32 %v4468, %v4592
      %v4985 = vadd.f32 %v4469, %v4592
      %v4986 = vadd.f32 %v4470, %v4592
      %v4987 = vadd.f32 %v4471, %v4592
      %v4988 = vadd.f32 %v4472, %v4592
      %v4989 = vadd.f32 %v4473, %v4592
      %v4990 = vadd.f32 %v4474, %v4592
      %v4991 = vadd.f32 %v4475, %v4592
      %v4992 = vadd.f32 %v4476, %v4592
      %v4993 = vadd.f32 %v4477, %v4592
      %v4994 = vadd.f32 %v4478, %v4592
      %v4995 = vadd.f32 %v4479, %v4592
      %v4996 = vadd.f32 %v4480, %v4592
      %v4997 = vadd.f32 %v4481, %v4592
      %v4998 = vadd.f32 %v4482, %v4592
      %v4999 = vadd.f32 %v4483, %v4592
      %v5000 = vadd.f32 %v4484, %v4592
      %v5001 = vadd.f32 %v4485, %v4592
      %v5002 = vadd.f32 %v4486, %v4592
      %v5003 = vadd.f32 %v4487, %v4592
      %v5004 = vadd.f32 %v4488, %v4592
      %v5005 = vadd.f32 %v4489, %v4592
      %v5006 = vadd.f32 %v4490, %v4592
      %v5007 = vadd.f32 %v4491, %v4592
      %v5008 = vadd.f32 %v4492, %v4592
      %v5009 = vadd.f32 %v4493, %v4592
      %v5010 = vadd.f32 %v4494, %v4592
      %v5011 = vadd.f32 %v4495, %v4592
      %v5012 = vadd.f32 %v4496, %v4592
      %v5013 = vadd.f32 %v4497, %v4592
      %v5014 = vadd.f32 %v4498, %v4592
      %v5015 = vadd.f32 %v4499, %v4592
      %v5016 = vadd.f32 %v4500, %v4592
      %v5017 = vadd.f32 %v4501, %v4592
      %v5018 = vadd.f32 %v4502, %v4592
      %v5019 = vadd.f32 %v4503, %v4592
      %v5020 = vadd.f32 %v4504, %v4592
      %v5021 = vadd.f32 %v4505, %v4592
      %v5022 = vadd.f32 %v4506, %v4592
      %v5023 = vadd.f32 %v4507, %v4592
      %v5024 = vadd.f32 %v4508, %v4592
      %v5025 = vadd.f32 %v4509, %v4592
      %v5026 = vadd.f32 %v4510, %v4592
      %v5027 = vadd.f32 %v4511, %v4592
      %v5028 = vadd.f32 %v4512, %v4592
      %v5029 = vadd.f32 %v4513, %v4592
      %v5030 = vadd.f32 %v4514, %v4592
      %v5031 = vadd.f32 %v4515, %v4592
      %v5032 = vadd.f32 %v4516, %v4592
      %v5033 = vadd.f32 %v4517, %v4592
      %v5034 = vadd.f32 %v4518, %v4592
      %v5035 = vadd.f32 %v4519, %v4592
      %v5036 = vadd.f32 %v4520, %v4592
      %v5037 = vadd.f32 %v4521, %v4592
      %v5038 = vadd.f32 %v4522, %v4592
      %v5039 = vadd.f32 %v4523, %v4592
      %v5040 = vadd.f32 %v4524, %v4592
      %v5041 = vadd.f32 %v4525, %v4592
      %v5042 = vadd.f32 %v4526, %v4592
      %v5043 = vadd.f32 %v4527, %v4592
      %v5044 = vadd.f32 %v4528, %v4592
      %v5045 = vadd.f32 %v4529, %v4592
      %v5046 = vadd.f32 %v4530, %v4592
      %v5047 = vadd.f32 %v4531, %v4592
      %v5048 = vadd.f32 %v4532, %v4592
      %v5049 = vadd.f32 %v4533, %v4592
      %v5050 = vadd.f32 %v4534, %v4592
      %v5051 = vadd.f32 %v4535, %v4592
      %v5052 = vadd.f32 %v4536, %v4592
      %v5053 = vadd.f32 %v4537, %v4592
      %v5054 = vadd.f32 %v4538, %v4592
      %v5055 = vadd.f32 %v4539, %v4592
      %v5056 = vadd.f32 %v4540, %v4592
      %v5057 = vadd.f32 %v4541, %v4592
      %v5058 = vadd.f32 %v4542, %v4592
      %v5059 = vadd.f32 %v4543, %v4592
      %v5060 = vadd.f32 %v4544, %v4592
      %v5061 = vadd.f32 %v4545, %v4592
      %v5062 = vadd.f32 %v4546, %v4592
      %v5063 = vadd.f32 %v4547, %v4592
      %v5064 = vadd.f32 %v4548, %v4592
      %v5065 = vadd.f32 %v4549, %v4592
      %v5066 = vadd.f32 %v4550, %v4592
      %v5067 = vadd.f32 %v4551, %v4592
      %v5068 = vadd.f32 %v4552, %v4592
      %v5069 = vadd.f32 %v4553, %v4592
      %v5070 = vadd.f32 %v4554, %v4592
      %v5071 = vadd.f32 %v4555, %v4592
      %v5072 = vadd.f32 %v4556, %v4592
      %v5073 = vadd.f32 %v4557, %v4592
      %v5074 = vadd.f32 %v4558, %v4592
      %v5075 = vadd.f32 %v4559, %v4592
      %v5076 = vadd.f32 %v4560, %v4592
      %v5077 = vadd.f32 %v4561, %v4592
      %v5078 = vadd.f32 %v4562, %v4592
      %v5079 = vadd.f32 %v4563, %v4592
      %v5080 = vadd.f32 %v4564, %v4592
      %v5081 = vadd.f32 %v4565, %v4592
      %v5082 = vadd.f32 %v4566, %v4592
      %v5083 = vadd.f32 %v4567, %v4592
      %v5084 = vadd.f32 %v4568, %v4592
      %v5085 = vadd.f32 %v4569, %v4592
      %v5086 = vadd.f32 %v4570, %v4592
      %v5087 = vadd.f32 %v4571, %v4592
      %v5088 = vadd.f32 %v4572, %v4592
      %v5089 = vadd.f32 %v4573, %v4592
      %v5090 = vadd.f32 %v4574, %v4592
      %v5091 = vadd.f32 %v4575, %v4592
      %v5092 = vadd.f32 %v4576, %v4592
      %v5093 = vadd.f32 %v4577, %v4592
      %v5094 = vadd.f32 %v4578, %v4592
      %v5095 = vadd.f32 %v4579, %v4592
      %v5096 = vadd.f32 %v4580, %v4592
      %v5097 = vadd.f32 %v4581, %v4592
      %v5098 = vadd.f32 %v4582, %v4592
      %v5099 = vadd.f32 %v4583, %v4592
      %v5100 = vadd.f32 %v4584, %v4592
      %v5101 = vadd.f32 %v4585, %v4592
      %v5102 = vadd.f32 %v4586, %v4592
      %v5103 = vadd.f32 %v4587, %v4592
      %v5104 = vadd.f32 %v4588, %v4592
      %v5105 = vadd.f32 %v4589, %v4592
      %v5106 = vmax.f32 %v4594, 0.0
      %v5107 = vmax.f32 %v4595, 0.0
      %v5108 = vmax.f32 %v4596, 0.0
      %v5109 = vmax.f32 %v4597, 0.0
      %v5110 = vmax.f32 %v4598, 0.0
      %v5111 = vmax.f32 %v4599, 0.0
      %v5112 = vmax.f32 %v4600, 0.0
      %v5113 = vmax.f32 %v4601, 0.0
      %v5114 = vmax.f32 %v4602, 0.0
      %v5115 = vmax.f32 %v4603, 0.0
      %v5116 = vmax.f32 %v4604, 0.0
      %v5117 = vmax.f32 %v4605, 0.0
      %v5118 = vmax.f32 %v4606, 0.0
      %v5119 = vmax.f32 %v4607, 0.0
      %v5120 = vmax.f32 %v4608, 0.0
      %v5121 = vmax.f32 %v4609, 0.0
      %v5122 = vmax.f32 %v4610, 0.0
      %v5123 = vmax.f32 %v4611, 0.0
      %v5124 = vmax.f32 %v4612, 0.0
      %v5125 = vmax.f32 %v4613, 0.0
      %v5126 = vmax.f32 %v4614, 0.0
      %v5127 = vmax.f32 %v4615, 0.0
      %v5128 = vmax.f32 %v4616, 0.0
      %v5129 = vmax.f32 %v4617, 0.0
      %v5130 = vmax.f32 %v4618, 0.0
      %v5131 = vmax.f32 %v4619, 0.0
      %v5132 = vmax.f32 %v4620, 0.0
      %v5133 = vmax.f32 %v4621, 0.0
      %v5134 = vmax.f32 %v4622, 0.0
      %v5135 = vmax.f32 %v4623, 0.0
      %v5136 = vmax.f32 %v4624, 0.0
      %v5137 = vmax.f32 %v4625, 0.0
      %v5138 = vmax.f32 %v4626, 0.0
      %v5139 = vmax.f32 %v4627, 0.0
      %v5140 = vmax.f32 %v4628, 0.0
      %v5141 = vmax.f32 %v4629, 0.0
      %v5142 = vmax.f32 %v4630, 0.0
      %v5143 = vmax.f32 %v4631, 0.0
      %v5144 = vmax.f32 %v4632, 0.0
      %v5145 = vmax.f32 %v4633, 0.0
      %v5146 = vmax.f32 %v4634, 0.0
      %v5147 = vmax.f32 %v4635, 0.0
      %v5148 = vmax.f32 %v4636, 0.0
      %v5149 = vmax.f32 %v4637, 0.0
      %v5150 = vmax.f32 %v4638, 0.0
      %v5151 = vmax.f32 %v4639, 0.0
      %v5152 = vmax.f32 %v4640, 0.0
      %v5153 = vmax.f32 %v4641, 0.0
      %v5154 = vmax.f32 %v4642, 0.0
      %v5155 = vmax.f32 %v4643, 0.0
      %v5156 = vmax.f32 %v4644, 0.0
      %v5157 = vmax.f32 %v4645, 0.0
      %v5158 = vmax.f32 %v4646, 0.0
      %v5159 = vmax.f32 %v4647, 0.0
      %v5160 = vmax.f32 %v4648, 0.0
      %v5161 = vmax.f32 %v4649, 0.0
      %v5162 = vmax.f32 %v4650, 0.0
      %v5163 = vmax.f32 %v4651, 0.0
      %v5164 = vmax.f32 %v4652, 0.0
      %v5165 = vmax.f32 %v4653, 0.0
      %v5166 = vmax.f32 %v4654, 0.0
      %v5167 = vmax.f32 %v4655, 0.0
      %v5168 = vmax.f32 %v4656, 0.0
      %v5169 = vmax.f32 %v4657, 0.0
      %v5170 = vmax.f32 %v4658, 0.0
      %v5171 = vmax.f32 %v4659, 0.0
      %v5172 = vmax.f32 %v4660, 0.0
      %v5173 = vmax.f32 %v4661, 0.0
      %v5174 = vmax.f32 %v4662, 0.0
      %v5175 = vmax.f32 %v4663, 0.0
      %v5176 = vmax.f32 %v4664, 0.0
      %v5177 = vmax.f32 %v4665, 0.0
      %v5178 = vmax.f32 %v4666, 0.0
      %v5179 = vmax.f32 %v4667, 0.0
      %v5180 = vmax.f32 %v4668, 0.0
      %v5181 = vmax.f32 %v4669, 0.0
      %v5182 = vmax.f32 %v4670, 0.0
      %v5183 = vmax.f32 %v4671, 0.0
      %v5184 = vmax.f32 %v4672, 0.0
      %v5185 = vmax.f32 %v4673, 0.0
      %v5186 = vmax.f32 %v4674, 0.0
      %v5187 = vmax.f32 %v4675, 0.0
      %v5188 = vmax.f32 %v4676, 0.0
      %v5189 = vmax.f32 %v4677, 0.0
      %v5190 = vmax.f32 %v4678, 0.0
      %v5191 = vmax.f32 %v4679, 0.0
      %v5192 = vmax.f32 %v4680, 0.0
      %v5193 = vmax.f32 %v4681, 0.0
      %v5194 = vmax.f32 %v4682, 0.0
      %v5195 = vmax.f32 %v4683, 0.0
      %v5196 = vmax.f32 %v4684, 0.0
      %v5197 = vmax.f32 %v4685, 0.0
      %v5198 = vmax.f32 %v4686, 0.0
      %v5199 = vmax.f32 %v4687, 0.0
      %v5200 = vmax.f32 %v4688, 0.0
      %v5201 = vmax.f32 %v4689, 0.0
      %v5202 = vmax.f32 %v4690, 0.0
      %v5203 = vmax.f32 %v4691, 0.0
      %v5204 = vmax.f32 %v4692, 0.0
      %v5205 = vmax.f32 %v4693, 0.0
      %v5206 = vmax.f32 %v4694, 0.0
      %v5207 = vmax.f32 %v4695, 0.0
      %v5208 = vmax.f32 %v4696, 0.0
      %v5209 = vmax.f32 %v4697, 0.0
      %v5210 = vmax.f32 %v4698, 0.0
      %v5211 = vmax.f32 %v4699, 0.0
      %v5212 = vmax.f32 %v4700, 0.0
      %v5213 = vmax.f32 %v4701, 0.0
      %v5214 = vmax.f32 %v4702, 0.0
      %v5215 = vmax.f32 %v4703, 0.0
      %v5216 = vmax.f32 %v4704, 0.0
      %v5217 = vmax.f32 %v4705, 0.0
      %v5218 = vmax.f32 %v4706, 0.0
      %v5219 = vmax.f32 %v4707, 0.0
      %v5220 = vmax.f32 %v4708, 0.0
      %v5221 = vmax.f32 %v4709, 0.0
      %v5222 = vmax.f32 %v4710, 0.0
      %v5223 = vmax.f32 %v4711, 0.0
      %v5224 = vmax.f32 %v4712, 0.0
      %v5225 = vmax.f32 %v4713, 0.0
      %v5226 = vmax.f32 %v4714, 0.0
      %v5227 = vmax.f32 %v4715, 0.0
      %v5228 = vmax.f32 %v4716, 0.0
      %v5229 = vmax.f32 %v4717, 0.0
      %v5230 = vmax.f32 %v4718, 0.0
      %v5231 = vmax.f32 %v4719, 0.0
      %v5232 = vmax.f32 %v4720, 0.0
      %v5233 = vmax.f32 %v4721, 0.0
      %v5234 = vmax.f32 %v4722, 0.0
      %v5235 = vmax.f32 %v4723, 0.0
      %v5236 = vmax.f32 %v4724, 0.0
      %v5237 = vmax.f32 %v4725, 0.0
      %v5238 = vmax.f32 %v4726, 0.0
      %v5239 = vmax.f32 %v4727, 0.0
      %v5240 = vmax.f32 %v4728, 0.0
      %v5241 = vmax.f32 %v4729, 0.0
      %v5242 = vmax.f32 %v4730, 0.0
      %v5243 = vmax.f32 %v4731, 0.0
      %v5244 = vmax.f32 %v4732, 0.0
      %v5245 = vmax.f32 %v4733, 0.0
      %v5246 = vmax.f32 %v4734, 0.0
      %v5247 = vmax.f32 %v4735, 0.0
      %v5248 = vmax.f32 %v4736, 0.0
      %v5249 = vmax.f32 %v4737, 0.0
      %v5250 = vmax.f32 %v4738, 0.0
      %v5251 = vmax.f32 %v4739, 0.0
      %v5252 = vmax.f32 %v4740, 0.0
      %v5253 = vmax.f32 %v4741, 0.0
      %v5254 = vmax.f32 %v4742, 0.0
      %v5255 = vmax.f32 %v4743, 0.0
      %v5256 = vmax.f32 %v4744, 0.0
      %v5257 = vmax.f32 %v4745, 0.0
      %v5258 = vmax.f32 %v4746, 0.0
      %v5259 = vmax.f32 %v4747, 0.0
      %v5260 = vmax.f32 %v4748, 0.0
      %v5261 = vmax.f32 %v4749, 0.0
      %v5262 = vmax.f32 %v4750, 0.0
      %v5263 = vmax.f32 %v4751, 0.0
      %v5264 = vmax.f32 %v4752, 0.0
      %v5265 = vmax.f32 %v4753, 0.0
      %v5266 = vmax.f32 %v4754, 0.0
      %v5267 = vmax.f32 %v4755, 0.0
      %v5268 = vmax.f32 %v4756, 0.0
      %v5269 = vmax.f32 %v4757, 0.0
      %v5270 = vmax.f32 %v4758, 0.0
      %v5271 = vmax.f32 %v4759, 0.0
      %v5272 = vmax.f32 %v4760, 0.0
      %v5273 = vmax.f32 %v4761, 0.0
      %v5274 = vmax.f32 %v4762, 0.0
      %v5275 = vmax.f32 %v4763, 0.0
      %v5276 = vmax.f32 %v4764, 0.0
      %v5277 = vmax.f32 %v4765, 0.0
      %v5278 = vmax.f32 %v4766, 0.0
      %v5279 = vmax.f32 %v4767, 0.0
      %v5280 = vmax.f32 %v4768, 0.0
      %v5281 = vmax.f32 %v4769, 0.0
      %v5282 = vmax.f32 %v4770, 0.0
      %v5283 = vmax.f32 %v4771, 0.0
      %v5284 = vmax.f32 %v4772, 0.0
      %v5285 = vmax.f32 %v4773, 0.0
      %v5286 = vmax.f32 %v4774, 0.0
      %v5287 = vmax.f32 %v4775, 0.0
      %v5288 = vmax.f32 %v4776, 0.0
      %v5289 = vmax.f32 %v4777, 0.0
      %v5290 = vmax.f32 %v4778, 0.0
      %v5291 = vmax.f32 %v4779, 0.0
      %v5292 = vmax.f32 %v4780, 0.0
      %v5293 = vmax.f32 %v4781, 0.0
      %v5294 = vmax.f32 %v4782, 0.0
      %v5295 = vmax.f32 %v4783, 0.0
      %v5296 = vmax.f32 %v4784, 0.0
      %v5297 = vmax.f32 %v4785, 0.0
      %v5298 = vmax.f32 %v4786, 0.0
      %v5299 = vmax.f32 %v4787, 0.0
      %v5300 = vmax.f32 %v4788, 0.0
      %v5301 = vmax.f32 %v4789, 0.0
      %v5302 = vmax.f32 %v4790, 0.0
      %v5303 = vmax.f32 %v4791, 0.0
      %v5304 = vmax.f32 %v4792, 0.0
      %v5305 = vmax.f32 %v4793, 0.0
      %v5306 = vmax.f32 %v4794, 0.0
      %v5307 = vmax.f32 %v4795, 0.0
      %v5308 = vmax.f32 %v4796, 0.0
      %v5309 = vmax.f32 %v4797, 0.0
      %v5310 = vmax.f32 %v4798, 0.0
      %v5311 = vmax.f32 %v4799, 0.0
      %v5312 = vmax.f32 %v4800, 0.0
      %v5313 = vmax.f32 %v4801, 0.0
      %v5314 = vmax.f32 %v4802, 0.0
      %v5315 = vmax.f32 %v4803, 0.0
      %v5316 = vmax.f32 %v4804, 0.0
      %v5317 = vmax.f32 %v4805, 0.0
      %v5318 = vmax.f32 %v4806, 0.0
      %v5319 = vmax.f32 %v4807, 0.0
      %v5320 = vmax.f32 %v4808, 0.0
      %v5321 = vmax.f32 %v4809, 0.0
      %v5322 = vmax.f32 %v4810, 0.0
      %v5323 = vmax.f32 %v4811, 0.0
      %v5324 = vmax.f32 %v4812, 0.0
      %v5325 = vmax.f32 %v4813, 0.0
      %v5326 = vmax.f32 %v4814, 0.0
      %v5327 = vmax.f32 %v4815, 0.0
      %v5328 = vmax.f32 %v4816, 0.0
      %v5329 = vmax.f32 %v4817, 0.0
      %v5330 = vmax.f32 %v4818, 0.0
      %v5331 = vmax.f32 %v4819, 0.0
      %v5332 = vmax.f32 %v4820, 0.0
      %v5333 = vmax.f32 %v4821, 0.0
      %v5334 = vmax.f32 %v4822, 0.0
      %v5335 = vmax.f32 %v4823, 0.0
      %v5336 = vmax.f32 %v4824, 0.0
      %v5337 = vmax.f32 %v4825, 0.0
      %v5338 = vmax.f32 %v4826, 0.0
      %v5339 = vmax.f32 %v4827, 0.0
      %v5340 = vmax.f32 %v4828, 0.0
      %v5341 = vmax.f32 %v4829, 0.0
      %v5342 = vmax.f32 %v4830, 0.0
      %v5343 = vmax.f32 %v4831, 0.0
      %v5344 = vmax.f32 %v4832, 0.0
      %v5345 = vmax.f32 %v4833, 0.0
      %v5346 = vmax.f32 %v4834, 0.0
      %v5347 = vmax.f32 %v4835, 0.0
      %v5348 = vmax.f32 %v4836, 0.0
      %v5349 = vmax.f32 %v4837, 0.0
      %v5350 = vmax.f32 %v4838, 0.0
      %v5351 = vmax.f32 %v4839, 0.0
      %v5352 = vmax.f32 %v4840, 0.0
      %v5353 = vmax.f32 %v4841, 0.0
      %v5354 = vmax.f32 %v4842, 0.0
      %v5355 = vmax.f32 %v4843, 0.0
      %v5356 = vmax.f32 %v4844, 0.0
      %v5357 = vmax.f32 %v4845, 0.0
      %v5358 = vmax.f32 %v4846, 0.0
      %v5359 = vmax.f32 %v4847, 0.0
      %v5360 = vmax.f32 %v4848, 0.0
      %v5361 = vmax.f32 %v4849, 0.0
      %v5362 = vmax.f32 %v4850, 0.0
      %v5363 = vmax.f32 %v4851, 0.0
      %v5364 = vmax.f32 %v4852, 0.0
      %v5365 = vmax.f32 %v4853, 0.0
      %v5366 = vmax.f32 %v4854, 0.0
      %v5367 = vmax.f32 %v4855, 0.0
      %v5368 = vmax.f32 %v4856, 0.0
      %v5369 = vmax.f32 %v4857, 0.0
      %v5370 = vmax.f32 %v4858, 0.0
      %v5371 = vmax.f32 %v4859, 0.0
      %v5372 = vmax.f32 %v4860, 0.0
      %v5373 = vmax.f32 %v4861, 0.0
      %v5374 = vmax.f32 %v4862, 0.0
      %v5375 = vmax.f32 %v4863, 0.0
      %v5376 = vmax.f32 %v4864, 0.0
      %v5377 = vmax.f32 %v4865, 0.0
      %v5378 = vmax.f32 %v4866, 0.0
      %v5379 = vmax.f32 %v4867, 0.0
      %v5380 = vmax.f32 %v4868, 0.0
      %v5381 = vmax.f32 %v4869, 0.0
      %v5382 = vmax.f32 %v4870, 0.0
      %v5383 = vmax.f32 %v4871, 0.0
      %v5384 = vmax.f32 %v4872, 0.0
      %v5385 = vmax.f32 %v4873, 0.0
      %v5386 = vmax.f32 %v4874, 0.0
      %v5387 = vmax.f32 %v4875, 0.0
      %v5388 = vmax.f32 %v4876, 0.0
      %v5389 = vmax.f32 %v4877, 0.0
      %v5390 = vmax.f32 %v4878, 0.0
      %v5391 = vmax.f32 %v4879, 0.0
      %v5392 = vmax.f32 %v4880, 0.0
      %v5393 = vmax.f32 %v4881, 0.0
      %v5394 = vmax.f32 %v4882, 0.0
      %v5395 = vmax.f32 %v4883, 0.0
      %v5396 = vmax.f32 %v4884, 0.0
      %v5397 = vmax.f32 %v4885, 0.0
      %v5398 = vmax.f32 %v4886, 0.0
      %v5399 = vmax.f32 %v4887, 0.0
      %v5400 = vmax.f32 %v4888, 0.0
      %v5401 = vmax.f32 %v4889, 0.0
      %v5402 = vmax.f32 %v4890, 0.0
      %v5403 = vmax.f32 %v4891, 0.0
      %v5404 = vmax.f32 %v4892, 0.0
      %v5405 = vmax.f32 %v4893, 0.0
      %v5406 = vmax.f32 %v4894, 0.0
      %v5407 = vmax.f32 %v4895, 0.0
      %v5408 = vmax.f32 %v4896, 0.0
      %v5409 = vmax.f32 %v4897, 0.0
      %v5410 = vmax.f32 %v4898, 0.0
      %v5411 = vmax.f32 %v4899, 0.0
      %v5412 = vmax.f32 %v4900, 0.0
      %v5413 = vmax.f32 %v4901, 0.0
      %v5414 = vmax.f32 %v4902, 0.0
      %v5415 = vmax.f32 %v4903, 0.0
      %v5416 = vmax.f32 %v4904, 0.0
      %v5417 = vmax.f32 %v4905, 0.0
      %v5418 = vmax.f32 %v4906, 0.0
      %v5419 = vmax.f32 %v4907, 0.0
      %v5420 = vmax.f32 %v4908, 0.0
      %v5421 = vmax.f32 %v4909, 0.0
      %v5422 = vmax.f32 %v4910, 0.0
      %v5423 = vmax.f32 %v4911, 0.0
      %v5424 = vmax.f32 %v4912, 0.0
      %v5425 = vmax.f32 %v4913, 0.0
      %v5426 = vmax.f32 %v4914, 0.0
      %v5427 = vmax.f32 %v4915, 0.0
      %v5428 = vmax.f32 %v4916, 0.0
      %v5429 = vmax.f32 %v4917, 0.0
      %v5430 = vmax.f32 %v4918, 0.0
      %v5431 = vmax.f32 %v4919, 0.0
      %v5432 = vmax.f32 %v4920, 0.0
      %v5433 = vmax.f32 %v4921, 0.0
      %v5434 = vmax.f32 %v4922, 0.0
      %v5435 = vmax.f32 %v4923, 0.0
      %v5436 = vmax.f32 %v4924, 0.0
      %v5437 = vmax.f32 %v4925, 0.0
      %v5438 = vmax.f32 %v4926, 0.0
      %v5439 = vmax.f32 %v4927, 0.0
      %v5440 = vmax.f32 %v4928, 0.0
      %v5441 = vmax.f32 %v4929, 0.0
      %v5442 = vmax.f32 %v4930, 0.0
      %v5443 = vmax.f32 %v4931, 0.0
      %v5444 = vmax.f32 %v4932, 0.0
      %v5445 = vmax.f32 %v4933, 0.0
      %v5446 = vmax.f32 %v4934, 0.0
      %v5447 = vmax.f32 %v4935, 0.0
      %v5448 = vmax.f32 %v4936, 0.0
      %v5449 = vmax.f32 %v4937, 0.0
      %v5450 = vmax.f32 %v4938, 0.0
      %v5451 = vmax.f32 %v4939, 0.0
      %v5452 = vmax.f32 %v4940, 0.0
      %v5453 = vmax.f32 %v4941, 0.0
      %v5454 = vmax.f32 %v4942, 0.0
      %v5455 = vmax.f32 %v4943, 0.0
      %v5456 = vmax.f32 %v4944, 0.0
      %v5457 = vmax.f32 %v4945, 0.0
      %v5458 = vmax.f32 %v4946, 0.0
      %v5459 = vmax.f32 %v4947, 0.0
      %v5460 = vmax.f32 %v4948, 0.0
      %v5461 = vmax.f32 %v4949, 0.0
      %v5462 = vmax.f32 %v4950, 0.0
      %v5463 = vmax.f32 %v4951, 0.0
      %v5464 = vmax.f32 %v4952, 0.0
      %v5465 = vmax.f32 %v4953, 0.0
      %v5466 = vmax.f32 %v4954, 0.0
      %v5467 = vmax.f32 %v4955, 0.0
      %v5468 = vmax.f32 %v4956, 0.0
      %v5469 = vmax.f32 %v4957, 0.0
      %v5470 = vmax.f32 %v4958, 0.0
      %v5471 = vmax.f32 %v4959, 0.0
      %v5472 = vmax.f32 %v4960, 0.0
      %v5473 = vmax.f32 %v4961, 0.0
      %v5474 = vmax.f32 %v4962, 0.0
      %v5475 = vmax.f32 %v4963, 0.0
      %v5476 = vmax.f32 %v4964, 0.0
      %v5477 = vmax.f32 %v4965, 0.0
      %v5478 = vmax.f32 %v4966, 0.0
      %v5479 = vmax.f32 %v4967, 0.0
      %v5480 = vmax.f32 %v4968, 0.0
      %v5481 = vmax.f32 %v4969, 0.0
      %v5482 = vmax.f32 %v4970, 0.0
      %v5483 = vmax.f32 %v4971, 0.0
      %v5484 = vmax.f32 %v4972, 0.0
      %v5485 = vmax.f32 %v4973, 0.0
      %v5486 = vmax.f32 %v4974, 0.0
      %v5487 = vmax.f32 %v4975, 0.0
      %v5488 = vmax.f32 %v4976, 0.0
      %v5489 = vmax.f32 %v4977, 0.0
      %v5490 = vmax.f32 %v4978, 0.0
      %v5491 = vmax.f32 %v4979, 0.0
      %v5492 = vmax.f32 %v4980, 0.0
      %v5493 = vmax.f32 %v4981, 0.0
      %v5494 = vmax.f32 %v4982, 0.0
      %v5495 = vmax.f32 %v4983, 0.0
      %v5496 = vmax.f32 %v4984, 0.0
      %v5497 = vmax.f32 %v4985, 0.0
      %v5498 = vmax.f32 %v4986, 0.0
      %v5499 = vmax.f32 %v4987, 0.0
      %v5500 = vmax.f32 %v4988, 0.0
      %v5501 = vmax.f32 %v4989, 0.0
      %v5502 = vmax.f32 %v4990, 0.0
      %v5503 = vmax.f32 %v4991, 0.0
      %v5504 = vmax.f32 %v4992, 0.0
      %v5505 = vmax.f32 %v4993, 0.0
      %v5506 = vmax.f32 %v4994, 0.0
      %v5507 = vmax.f32 %v4995, 0.0
      %v5508 = vmax.f32 %v4996, 0.0
      %v5509 = vmax.f32 %v4997, 0.0
      %v5510 = vmax.f32 %v4998, 0.0
      %v5511 = vmax.f32 %v4999, 0.0
      %v5512 = vmax.f32 %v5000, 0.0
      %v5513 = vmax.f32 %v5001, 0.0
      %v5514 = vmax.f32 %v5002, 0.0
      %v5515 = vmax.f32 %v5003, 0.0
      %v5516 = vmax.f32 %v5004, 0.0
      %v5517 = vmax.f32 %v5005, 0.0
      %v5518 = vmax.f32 %v5006, 0.0
      %v5519 = vmax.f32 %v5007, 0.0
      %v5520 = vmax.f32 %v5008, 0.0
      %v5521 = vmax.f32 %v5009, 0.0
      %v5522 = vmax.f32 %v5010, 0.0
      %v5523 = vmax.f32 %v5011, 0.0
      %v5524 = vmax.f32 %v5012, 0.0
      %v5525 = vmax.f32 %v5013, 0.0
      %v5526 = vmax.f32 %v5014, 0.0
      %v5527 = vmax.f32 %v5015, 0.0
      %v5528 = vmax.f32 %v5016, 0.0
      %v5529 = vmax.f32 %v5017, 0.0
      %v5530 = vmax.f32 %v5018, 0.0
      %v5531 = vmax.f32 %v5019, 0.0
      %v5532 = vmax.f32 %v5020, 0.0
      %v5533 = vmax.f32 %v5021, 0.0
      %v5534 = vmax.f32 %v5022, 0.0
      %v5535 = vmax.f32 %v5023, 0.0
      %v5536 = vmax.f32 %v5024, 0.0
      %v5537 = vmax.f32 %v5025, 0.0
      %v5538 = vmax.f32 %v5026, 0.0
      %v5539 = vmax.f32 %v5027, 0.0
      %v5540 = vmax.f32 %v5028, 0.0
      %v5541 = vmax.f32 %v5029, 0.0
      %v5542 = vmax.f32 %v5030, 0.0
      %v5543 = vmax.f32 %v5031, 0.0
      %v5544 = vmax.f32 %v5032, 0.0
      %v5545 = vmax.f32 %v5033, 0.0
      %v5546 = vmax.f32 %v5034, 0.0
      %v5547 = vmax.f32 %v5035, 0.0
      %v5548 = vmax.f32 %v5036, 0.0
      %v5549 = vmax.f32 %v5037, 0.0
      %v5550 = vmax.f32 %v5038, 0.0
      %v5551 = vmax.f32 %v5039, 0.0
      %v5552 = vmax.f32 %v5040, 0.0
      %v5553 = vmax.f32 %v5041, 0.0
      %v5554 = vmax.f32 %v5042, 0.0
      %v5555 = vmax.f32 %v5043, 0.0
      %v5556 = vmax.f32 %v5044, 0.0
      %v5557 = vmax.f32 %v5045, 0.0
      %v5558 = vmax.f32 %v5046, 0.0
      %v5559 = vmax.f32 %v5047, 0.0
      %v5560 = vmax.f32 %v5048, 0.0
      %v5561 = vmax.f32 %v5049, 0.0
      %v5562 = vmax.f32 %v5050, 0.0
      %v5563 = vmax.f32 %v5051, 0.0
      %v5564 = vmax.f32 %v5052, 0.0
      %v5565 = vmax.f32 %v5053, 0.0
      %v5566 = vmax.f32 %v5054, 0.0
      %v5567 = vmax.f32 %v5055, 0.0
      %v5568 = vmax.f32 %v5056, 0.0
      %v5569 = vmax.f32 %v5057, 0.0
      %v5570 = vmax.f32 %v5058, 0.0
      %v5571 = vmax.f32 %v5059, 0.0
      %v5572 = vmax.f32 %v5060, 0.0
      %v5573 = vmax.f32 %v5061, 0.0
      %v5574 = vmax.f32 %v5062, 0.0
      %v5575 = vmax.f32 %v5063, 0.0
      %v5576 = vmax.f32 %v5064, 0.0
      %v5577 = vmax.f32 %v5065, 0.0
      %v5578 = vmax.f32 %v5066, 0.0
      %v5579 = vmax.f32 %v5067, 0.0
      %v5580 = vmax.f32 %v5068, 0.0
      %v5581 = vmax.f32 %v5069, 0.0
      %v5582 = vmax.f32 %v5070, 0.0
      %v5583 = vmax.f32 %v5071, 0.0
      %v5584 = vmax.f32 %v5072, 0.0
      %v5585 = vmax.f32 %v5073, 0.0
      %v5586 = vmax.f32 %v5074, 0.0
      %v5587 = vmax.f32 %v5075, 0.0
      %v5588 = vmax.f32 %v5076, 0.0
      %v5589 = vmax.f32 %v5077, 0.0
      %v5590 = vmax.f32 %v5078, 0.0
      %v5591 = vmax.f32 %v5079, 0.0
      %v5592 = vmax.f32 %v5080, 0.0
      %v5593 = vmax.f32 %v5081, 0.0
      %v5594 = vmax.f32 %v5082, 0.0
      %v5595 = vmax.f32 %v5083, 0.0
      %v5596 = vmax.f32 %v5084, 0.0
      %v5597 = vmax.f32 %v5085, 0.0
      %v5598 = vmax.f32 %v5086, 0.0
      %v5599 = vmax.f32 %v5087, 0.0
      %v5600 = vmax.f32 %v5088, 0.0
      %v5601 = vmax.f32 %v5089, 0.0
      %v5602 = vmax.f32 %v5090, 0.0
      %v5603 = vmax.f32 %v5091, 0.0
      %v5604 = vmax.f32 %v5092, 0.0
      %v5605 = vmax.f32 %v5093, 0.0
      %v5606 = vmax.f32 %v5094, 0.0
      %v5607 = vmax.f32 %v5095, 0.0
      %v5608 = vmax.f32 %v5096, 0.0
      %v5609 = vmax.f32 %v5097, 0.0
      %v5610 = vmax.f32 %v5098, 0.0
      %v5611 = vmax.f32 %v5099, 0.0
      %v5612 = vmax.f32 %v5100, 0.0
      %v5613 = vmax.f32 %v5101, 0.0
      %v5614 = vmax.f32 %v5102, 0.0
      %v5615 = vmax.f32 %v5103, 0.0
      %v5616 = vmax.f32 %v5104, 0.0
      %v5617 = vmax.f32 %v5105, 0.0
      %v5618 = vpack.c.bf16 %v5106, %v5106
      %v5619 = vpack.c.bf16 %v5107, %v5107
      %v5620 = vpack.c.bf16 %v5108, %v5108
      %v5621 = vpack.c.bf16 %v5109, %v5109
      %v5622 = vpack.c.bf16 %v5110, %v5110
      %v5623 = vpack.c.bf16 %v5111, %v5111
      %v5624 = vpack.c.bf16 %v5112, %v5112
      %v5625 = vpack.c.bf16 %v5113, %v5113
      %v5626 = vpack.c.bf16 %v5114, %v5114
      %v5627 = vpack.c.bf16 %v5115, %v5115
      %v5628 = vpack.c.bf16 %v5116, %v5116
      %v5629 = vpack.c.bf16 %v5117, %v5117
      %v5630 = vpack.c.bf16 %v5118, %v5118
      %v5631 = vpack.c.bf16 %v5119, %v5119
      %v5632 = vpack.c.bf16 %v5120, %v5120
      %v5633 = vpack.c.bf16 %v5121, %v5121
      %v5634 = vpack.c.bf16 %v5122, %v5122
      %v5635 = vpack.c.bf16 %v5123, %v5123
      %v5636 = vpack.c.bf16 %v5124, %v5124
      %v5637 = vpack.c.bf16 %v5125, %v5125
      %v5638 = vpack.c.bf16 %v5126, %v5126
      %v5639 = vpack.c.bf16 %v5127, %v5127
      %v5640 = vpack.c.bf16 %v5128, %v5128
      %v5641 = vpack.c.bf16 %v5129, %v5129
      %v5642 = vpack.c.bf16 %v5130, %v5130
      %v5643 = vpack.c.bf16 %v5131, %v5131
      %v5644 = vpack.c.bf16 %v5132, %v5132
      %v5645 = vpack.c.bf16 %v5133, %v5133
      %v5646 = vpack.c.bf16 %v5134, %v5134
      %v5647 = vpack.c.bf16 %v5135, %v5135
      %v5648 = vpack.c.bf16 %v5136, %v5136
      %v5649 = vpack.c.bf16 %v5137, %v5137
      %v5650 = vpack.c.bf16 %v5138, %v5138
      %v5651 = vpack.c.bf16 %v5139, %v5139
      %v5652 = vpack.c.bf16 %v5140, %v5140
      %v5653 = vpack.c.bf16 %v5141, %v5141
      %v5654 = vpack.c.bf16 %v5142, %v5142
      %v5655 = vpack.c.bf16 %v5143, %v5143
      %v5656 = vpack.c.bf16 %v5144, %v5144
      %v5657 = vpack.c.bf16 %v5145, %v5145
      %v5658 = vpack.c.bf16 %v5146, %v5146
      %v5659 = vpack.c.bf16 %v5147, %v5147
      %v5660 = vpack.c.bf16 %v5148, %v5148
      %v5661 = vpack.c.bf16 %v5149, %v5149
      %v5662 = vpack.c.bf16 %v5150, %v5150
      %v5663 = vpack.c.bf16 %v5151, %v5151
      %v5664 = vpack.c.bf16 %v5152, %v5152
      %v5665 = vpack.c.bf16 %v5153, %v5153
      %v5666 = vpack.c.bf16 %v5154, %v5154
      %v5667 = vpack.c.bf16 %v5155, %v5155
      %v5668 = vpack.c.bf16 %v5156, %v5156
      %v5669 = vpack.c.bf16 %v5157, %v5157
      %v5670 = vpack.c.bf16 %v5158, %v5158
      %v5671 = vpack.c.bf16 %v5159, %v5159
      %v5672 = vpack.c.bf16 %v5160, %v5160
      %v5673 = vpack.c.bf16 %v5161, %v5161
      %v5674 = vpack.c.bf16 %v5162, %v5162
      %v5675 = vpack.c.bf16 %v5163, %v5163
      %v5676 = vpack.c.bf16 %v5164, %v5164
      %v5677 = vpack.c.bf16 %v5165, %v5165
      %v5678 = vpack.c.bf16 %v5166, %v5166
      %v5679 = vpack.c.bf16 %v5167, %v5167
      %v5680 = vpack.c.bf16 %v5168, %v5168
      %v5681 = vpack.c.bf16 %v5169, %v5169
      %v5682 = vpack.c.bf16 %v5170, %v5170
      %v5683 = vpack.c.bf16 %v5171, %v5171
      %v5684 = vpack.c.bf16 %v5172, %v5172
      %v5685 = vpack.c.bf16 %v5173, %v5173
      %v5686 = vpack.c.bf16 %v5174, %v5174
      %v5687 = vpack.c.bf16 %v5175, %v5175
      %v5688 = vpack.c.bf16 %v5176, %v5176
      %v5689 = vpack.c.bf16 %v5177, %v5177
      %v5690 = vpack.c.bf16 %v5178, %v5178
      %v5691 = vpack.c.bf16 %v5179, %v5179
      %v5692 = vpack.c.bf16 %v5180, %v5180
      %v5693 = vpack.c.bf16 %v5181, %v5181
      %v5694 = vpack.c.bf16 %v5182, %v5182
      %v5695 = vpack.c.bf16 %v5183, %v5183
      %v5696 = vpack.c.bf16 %v5184, %v5184
      %v5697 = vpack.c.bf16 %v5185, %v5185
      %v5698 = vpack.c.bf16 %v5186, %v5186
      %v5699 = vpack.c.bf16 %v5187, %v5187
      %v5700 = vpack.c.bf16 %v5188, %v5188
      %v5701 = vpack.c.bf16 %v5189, %v5189
      %v5702 = vpack.c.bf16 %v5190, %v5190
      %v5703 = vpack.c.bf16 %v5191, %v5191
      %v5704 = vpack.c.bf16 %v5192, %v5192
      %v5705 = vpack.c.bf16 %v5193, %v5193
      %v5706 = vpack.c.bf16 %v5194, %v5194
      %v5707 = vpack.c.bf16 %v5195, %v5195
      %v5708 = vpack.c.bf16 %v5196, %v5196
      %v5709 = vpack.c.bf16 %v5197, %v5197
      %v5710 = vpack.c.bf16 %v5198, %v5198
      %v5711 = vpack.c.bf16 %v5199, %v5199
      %v5712 = vpack.c.bf16 %v5200, %v5200
      %v5713 = vpack.c.bf16 %v5201, %v5201
      %v5714 = vpack.c.bf16 %v5202, %v5202
      %v5715 = vpack.c.bf16 %v5203, %v5203
      %v5716 = vpack.c.bf16 %v5204, %v5204
      %v5717 = vpack.c.bf16 %v5205, %v5205
      %v5718 = vpack.c.bf16 %v5206, %v5206
      %v5719 = vpack.c.bf16 %v5207, %v5207
      %v5720 = vpack.c.bf16 %v5208, %v5208
      %v5721 = vpack.c.bf16 %v5209, %v5209
      %v5722 = vpack.c.bf16 %v5210, %v5210
      %v5723 = vpack.c.bf16 %v5211, %v5211
      %v5724 = vpack.c.bf16 %v5212, %v5212
      %v5725 = vpack.c.bf16 %v5213, %v5213
      %v5726 = vpack.c.bf16 %v5214, %v5214
      %v5727 = vpack.c.bf16 %v5215, %v5215
      %v5728 = vpack.c.bf16 %v5216, %v5216
      %v5729 = vpack.c.bf16 %v5217, %v5217
      %v5730 = vpack.c.bf16 %v5218, %v5218
      %v5731 = vpack.c.bf16 %v5219, %v5219
      %v5732 = vpack.c.bf16 %v5220, %v5220
      %v5733 = vpack.c.bf16 %v5221, %v5221
      %v5734 = vpack.c.bf16 %v5222, %v5222
      %v5735 = vpack.c.bf16 %v5223, %v5223
      %v5736 = vpack.c.bf16 %v5224, %v5224
      %v5737 = vpack.c.bf16 %v5225, %v5225
      %v5738 = vpack.c.bf16 %v5226, %v5226
      %v5739 = vpack.c.bf16 %v5227, %v5227
      %v5740 = vpack.c.bf16 %v5228, %v5228
      %v5741 = vpack.c.bf16 %v5229, %v5229
      %v5742 = vpack.c.bf16 %v5230, %v5230
      %v5743 = vpack.c.bf16 %v5231, %v5231
      %v5744 = vpack.c.bf16 %v5232, %v5232
      %v5745 = vpack.c.bf16 %v5233, %v5233
      %v5746 = vpack.c.bf16 %v5234, %v5234
      %v5747 = vpack.c.bf16 %v5235, %v5235
      %v5748 = vpack.c.bf16 %v5236, %v5236
      %v5749 = vpack.c.bf16 %v5237, %v5237
      %v5750 = vpack.c.bf16 %v5238, %v5238
      %v5751 = vpack.c.bf16 %v5239, %v5239
      %v5752 = vpack.c.bf16 %v5240, %v5240
      %v5753 = vpack.c.bf16 %v5241, %v5241
      %v5754 = vpack.c.bf16 %v5242, %v5242
      %v5755 = vpack.c.bf16 %v5243, %v5243
      %v5756 = vpack.c.bf16 %v5244, %v5244
      %v5757 = vpack.c.bf16 %v5245, %v5245
      %v5758 = vpack.c.bf16 %v5246, %v5246
      %v5759 = vpack.c.bf16 %v5247, %v5247
      %v5760 = vpack.c.bf16 %v5248, %v5248
      %v5761 = vpack.c.bf16 %v5249, %v5249
      %v5762 = vpack.c.bf16 %v5250, %v5250
      %v5763 = vpack.c.bf16 %v5251, %v5251
      %v5764 = vpack.c.bf16 %v5252, %v5252
      %v5765 = vpack.c.bf16 %v5253, %v5253
      %v5766 = vpack.c.bf16 %v5254, %v5254
      %v5767 = vpack.c.bf16 %v5255, %v5255
      %v5768 = vpack.c.bf16 %v5256, %v5256
      %v5769 = vpack.c.bf16 %v5257, %v5257
      %v5770 = vpack.c.bf16 %v5258, %v5258
      %v5771 = vpack.c.bf16 %v5259, %v5259
      %v5772 = vpack.c.bf16 %v5260, %v5260
      %v5773 = vpack.c.bf16 %v5261, %v5261
      %v5774 = vpack.c.bf16 %v5262, %v5262
      %v5775 = vpack.c.bf16 %v5263, %v5263
      %v5776 = vpack.c.bf16 %v5264, %v5264
      %v5777 = vpack.c.bf16 %v5265, %v5265
      %v5778 = vpack.c.bf16 %v5266, %v5266
      %v5779 = vpack.c.bf16 %v5267, %v5267
      %v5780 = vpack.c.bf16 %v5268, %v5268
      %v5781 = vpack.c.bf16 %v5269, %v5269
      %v5782 = vpack.c.bf16 %v5270, %v5270
      %v5783 = vpack.c.bf16 %v5271, %v5271
      %v5784 = vpack.c.bf16 %v5272, %v5272
      %v5785 = vpack.c.bf16 %v5273, %v5273
      %v5786 = vpack.c.bf16 %v5274, %v5274
      %v5787 = vpack.c.bf16 %v5275, %v5275
      %v5788 = vpack.c.bf16 %v5276, %v5276
      %v5789 = vpack.c.bf16 %v5277, %v5277
      %v5790 = vpack.c.bf16 %v5278, %v5278
      %v5791 = vpack.c.bf16 %v5279, %v5279
      %v5792 = vpack.c.bf16 %v5280, %v5280
      %v5793 = vpack.c.bf16 %v5281, %v5281
      %v5794 = vpack.c.bf16 %v5282, %v5282
      %v5795 = vpack.c.bf16 %v5283, %v5283
      %v5796 = vpack.c.bf16 %v5284, %v5284
      %v5797 = vpack.c.bf16 %v5285, %v5285
      %v5798 = vpack.c.bf16 %v5286, %v5286
      %v5799 = vpack.c.bf16 %v5287, %v5287
      %v5800 = vpack.c.bf16 %v5288, %v5288
      %v5801 = vpack.c.bf16 %v5289, %v5289
      %v5802 = vpack.c.bf16 %v5290, %v5290
      %v5803 = vpack.c.bf16 %v5291, %v5291
      %v5804 = vpack.c.bf16 %v5292, %v5292
      %v5805 = vpack.c.bf16 %v5293, %v5293
      %v5806 = vpack.c.bf16 %v5294, %v5294
      %v5807 = vpack.c.bf16 %v5295, %v5295
      %v5808 = vpack.c.bf16 %v5296, %v5296
      %v5809 = vpack.c.bf16 %v5297, %v5297
      %v5810 = vpack.c.bf16 %v5298, %v5298
      %v5811 = vpack.c.bf16 %v5299, %v5299
      %v5812 = vpack.c.bf16 %v5300, %v5300
      %v5813 = vpack.c.bf16 %v5301, %v5301
      %v5814 = vpack.c.bf16 %v5302, %v5302
      %v5815 = vpack.c.bf16 %v5303, %v5303
      %v5816 = vpack.c.bf16 %v5304, %v5304
      %v5817 = vpack.c.bf16 %v5305, %v5305
      %v5818 = vpack.c.bf16 %v5306, %v5306
      %v5819 = vpack.c.bf16 %v5307, %v5307
      %v5820 = vpack.c.bf16 %v5308, %v5308
      %v5821 = vpack.c.bf16 %v5309, %v5309
      %v5822 = vpack.c.bf16 %v5310, %v5310
      %v5823 = vpack.c.bf16 %v5311, %v5311
      %v5824 = vpack.c.bf16 %v5312, %v5312
      %v5825 = vpack.c.bf16 %v5313, %v5313
      %v5826 = vpack.c.bf16 %v5314, %v5314
      %v5827 = vpack.c.bf16 %v5315, %v5315
      %v5828 = vpack.c.bf16 %v5316, %v5316
      %v5829 = vpack.c.bf16 %v5317, %v5317
      %v5830 = vpack.c.bf16 %v5318, %v5318
      %v5831 = vpack.c.bf16 %v5319, %v5319
      %v5832 = vpack.c.bf16 %v5320, %v5320
      %v5833 = vpack.c.bf16 %v5321, %v5321
      %v5834 = vpack.c.bf16 %v5322, %v5322
      %v5835 = vpack.c.bf16 %v5323, %v5323
      %v5836 = vpack.c.bf16 %v5324, %v5324
      %v5837 = vpack.c.bf16 %v5325, %v5325
      %v5838 = vpack.c.bf16 %v5326, %v5326
      %v5839 = vpack.c.bf16 %v5327, %v5327
      %v5840 = vpack.c.bf16 %v5328, %v5328
      %v5841 = vpack.c.bf16 %v5329, %v5329
      %v5842 = vpack.c.bf16 %v5330, %v5330
      %v5843 = vpack.c.bf16 %v5331, %v5331
      %v5844 = vpack.c.bf16 %v5332, %v5332
      %v5845 = vpack.c.bf16 %v5333, %v5333
      %v5846 = vpack.c.bf16 %v5334, %v5334
      %v5847 = vpack.c.bf16 %v5335, %v5335
      %v5848 = vpack.c.bf16 %v5336, %v5336
      %v5849 = vpack.c.bf16 %v5337, %v5337
      %v5850 = vpack.c.bf16 %v5338, %v5338
      %v5851 = vpack.c.bf16 %v5339, %v5339
      %v5852 = vpack.c.bf16 %v5340, %v5340
      %v5853 = vpack.c.bf16 %v5341, %v5341
      %v5854 = vpack.c.bf16 %v5342, %v5342
      %v5855 = vpack.c.bf16 %v5343, %v5343
      %v5856 = vpack.c.bf16 %v5344, %v5344
      %v5857 = vpack.c.bf16 %v5345, %v5345
      %v5858 = vpack.c.bf16 %v5346, %v5346
      %v5859 = vpack.c.bf16 %v5347, %v5347
      %v5860 = vpack.c.bf16 %v5348, %v5348
      %v5861 = vpack.c.bf16 %v5349, %v5349
      %v5862 = vpack.c.bf16 %v5350, %v5350
      %v5863 = vpack.c.bf16 %v5351, %v5351
      %v5864 = vpack.c.bf16 %v5352, %v5352
      %v5865 = vpack.c.bf16 %v5353, %v5353
      %v5866 = vpack.c.bf16 %v5354, %v5354
      %v5867 = vpack.c.bf16 %v5355, %v5355
      %v5868 = vpack.c.bf16 %v5356, %v5356
      %v5869 = vpack.c.bf16 %v5357, %v5357
      %v5870 = vpack.c.bf16 %v5358, %v5358
      %v5871 = vpack.c.bf16 %v5359, %v5359
      %v5872 = vpack.c.bf16 %v5360, %v5360
      %v5873 = vpack.c.bf16 %v5361, %v5361
      %v5874 = vpack.c.bf16 %v5362, %v5362
      %v5875 = vpack.c.bf16 %v5363, %v5363
      %v5876 = vpack.c.bf16 %v5364, %v5364
      %v5877 = vpack.c.bf16 %v5365, %v5365
      %v5878 = vpack.c.bf16 %v5366, %v5366
      %v5879 = vpack.c.bf16 %v5367, %v5367
      %v5880 = vpack.c.bf16 %v5368, %v5368
      %v5881 = vpack.c.bf16 %v5369, %v5369
      %v5882 = vpack.c.bf16 %v5370, %v5370
      %v5883 = vpack.c.bf16 %v5371, %v5371
      %v5884 = vpack.c.bf16 %v5372, %v5372
      %v5885 = vpack.c.bf16 %v5373, %v5373
      %v5886 = vpack.c.bf16 %v5374, %v5374
      %v5887 = vpack.c.bf16 %v5375, %v5375
      %v5888 = vpack.c.bf16 %v5376, %v5376
      %v5889 = vpack.c.bf16 %v5377, %v5377
      %v5890 = vpack.c.bf16 %v5378, %v5378
      %v5891 = vpack.c.bf16 %v5379, %v5379
      %v5892 = vpack.c.bf16 %v5380, %v5380
      %v5893 = vpack.c.bf16 %v5381, %v5381
      %v5894 = vpack.c.bf16 %v5382, %v5382
      %v5895 = vpack.c.bf16 %v5383, %v5383
      %v5896 = vpack.c.bf16 %v5384, %v5384
      %v5897 = vpack.c.bf16 %v5385, %v5385
      %v5898 = vpack.c.bf16 %v5386, %v5386
      %v5899 = vpack.c.bf16 %v5387, %v5387
      %v5900 = vpack.c.bf16 %v5388, %v5388
      %v5901 = vpack.c.bf16 %v5389, %v5389
      %v5902 = vpack.c.bf16 %v5390, %v5390
      %v5903 = vpack.c.bf16 %v5391, %v5391
      %v5904 = vpack.c.bf16 %v5392, %v5392
      %v5905 = vpack.c.bf16 %v5393, %v5393
      %v5906 = vpack.c.bf16 %v5394, %v5394
      %v5907 = vpack.c.bf16 %v5395, %v5395
      %v5908 = vpack.c.bf16 %v5396, %v5396
      %v5909 = vpack.c.bf16 %v5397, %v5397
      %v5910 = vpack.c.bf16 %v5398, %v5398
      %v5911 = vpack.c.bf16 %v5399, %v5399
      %v5912 = vpack.c.bf16 %v5400, %v5400
      %v5913 = vpack.c.bf16 %v5401, %v5401
      %v5914 = vpack.c.bf16 %v5402, %v5402
      %v5915 = vpack.c.bf16 %v5403, %v5403
      %v5916 = vpack.c.bf16 %v5404, %v5404
      %v5917 = vpack.c.bf16 %v5405, %v5405
      %v5918 = vpack.c.bf16 %v5406, %v5406
      %v5919 = vpack.c.bf16 %v5407, %v5407
      %v5920 = vpack.c.bf16 %v5408, %v5408
      %v5921 = vpack.c.bf16 %v5409, %v5409
      %v5922 = vpack.c.bf16 %v5410, %v5410
      %v5923 = vpack.c.bf16 %v5411, %v5411
      %v5924 = vpack.c.bf16 %v5412, %v5412
      %v5925 = vpack.c.bf16 %v5413, %v5413
      %v5926 = vpack.c.bf16 %v5414, %v5414
      %v5927 = vpack.c.bf16 %v5415, %v5415
      %v5928 = vpack.c.bf16 %v5416, %v5416
      %v5929 = vpack.c.bf16 %v5417, %v5417
      %v5930 = vpack.c.bf16 %v5418, %v5418
      %v5931 = vpack.c.bf16 %v5419, %v5419
      %v5932 = vpack.c.bf16 %v5420, %v5420
      %v5933 = vpack.c.bf16 %v5421, %v5421
      %v5934 = vpack.c.bf16 %v5422, %v5422
      %v5935 = vpack.c.bf16 %v5423, %v5423
      %v5936 = vpack.c.bf16 %v5424, %v5424
      %v5937 = vpack.c.bf16 %v5425, %v5425
      %v5938 = vpack.c.bf16 %v5426, %v5426
      %v5939 = vpack.c.bf16 %v5427, %v5427
      %v5940 = vpack.c.bf16 %v5428, %v5428
      %v5941 = vpack.c.bf16 %v5429, %v5429
      %v5942 = vpack.c.bf16 %v5430, %v5430
      %v5943 = vpack.c.bf16 %v5431, %v5431
      %v5944 = vpack.c.bf16 %v5432, %v5432
      %v5945 = vpack.c.bf16 %v5433, %v5433
      %v5946 = vpack.c.bf16 %v5434, %v5434
      %v5947 = vpack.c.bf16 %v5435, %v5435
      %v5948 = vpack.c.bf16 %v5436, %v5436
      %v5949 = vpack.c.bf16 %v5437, %v5437
      %v5950 = vpack.c.bf16 %v5438, %v5438
      %v5951 = vpack.c.bf16 %v5439, %v5439
      %v5952 = vpack.c.bf16 %v5440, %v5440
      %v5953 = vpack.c.bf16 %v5441, %v5441
      %v5954 = vpack.c.bf16 %v5442, %v5442
      %v5955 = vpack.c.bf16 %v5443, %v5443
      %v5956 = vpack.c.bf16 %v5444, %v5444
      %v5957 = vpack.c.bf16 %v5445, %v5445
      %v5958 = vpack.c.bf16 %v5446, %v5446
      %v5959 = vpack.c.bf16 %v5447, %v5447
      %v5960 = vpack.c.bf16 %v5448, %v5448
      %v5961 = vpack.c.bf16 %v5449, %v5449
      %v5962 = vpack.c.bf16 %v5450, %v5450
      %v5963 = vpack.c.bf16 %v5451, %v5451
      %v5964 = vpack.c.bf16 %v5452, %v5452
      %v5965 = vpack.c.bf16 %v5453, %v5453
      %v5966 = vpack.c.bf16 %v5454, %v5454
      %v5967 = vpack.c.bf16 %v5455, %v5455
      %v5968 = vpack.c.bf16 %v5456, %v5456
      %v5969 = vpack.c.bf16 %v5457, %v5457
      %v5970 = vpack.c.bf16 %v5458, %v5458
      %v5971 = vpack.c.bf16 %v5459, %v5459
      %v5972 = vpack.c.bf16 %v5460, %v5460
      %v5973 = vpack.c.bf16 %v5461, %v5461
      %v5974 = vpack.c.bf16 %v5462, %v5462
      %v5975 = vpack.c.bf16 %v5463, %v5463
      %v5976 = vpack.c.bf16 %v5464, %v5464
      %v5977 = vpack.c.bf16 %v5465, %v5465
      %v5978 = vpack.c.bf16 %v5466, %v5466
      %v5979 = vpack.c.bf16 %v5467, %v5467
      %v5980 = vpack.c.bf16 %v5468, %v5468
      %v5981 = vpack.c.bf16 %v5469, %v5469
      %v5982 = vpack.c.bf16 %v5470, %v5470
      %v5983 = vpack.c.bf16 %v5471, %v5471
      %v5984 = vpack.c.bf16 %v5472, %v5472
      %v5985 = vpack.c.bf16 %v5473, %v5473
      %v5986 = vpack.c.bf16 %v5474, %v5474
      %v5987 = vpack.c.bf16 %v5475, %v5475
      %v5988 = vpack.c.bf16 %v5476, %v5476
      %v5989 = vpack.c.bf16 %v5477, %v5477
      %v5990 = vpack.c.bf16 %v5478, %v5478
      %v5991 = vpack.c.bf16 %v5479, %v5479
      %v5992 = vpack.c.bf16 %v5480, %v5480
      %v5993 = vpack.c.bf16 %v5481, %v5481
      %v5994 = vpack.c.bf16 %v5482, %v5482
      %v5995 = vpack.c.bf16 %v5483, %v5483
      %v5996 = vpack.c.bf16 %v5484, %v5484
      %v5997 = vpack.c.bf16 %v5485, %v5485
      %v5998 = vpack.c.bf16 %v5486, %v5486
      %v5999 = vpack.c.bf16 %v5487, %v5487
      %v6000 = vpack.c.bf16 %v5488, %v5488
      %v6001 = vpack.c.bf16 %v5489, %v5489
      %v6002 = vpack.c.bf16 %v5490, %v5490
      %v6003 = vpack.c.bf16 %v5491, %v5491
      %v6004 = vpack.c.bf16 %v5492, %v5492
      %v6005 = vpack.c.bf16 %v5493, %v5493
      %v6006 = vpack.c.bf16 %v5494, %v5494
      %v6007 = vpack.c.bf16 %v5495, %v5495
      %v6008 = vpack.c.bf16 %v5496, %v5496
      %v6009 = vpack.c.bf16 %v5497, %v5497
      %v6010 = vpack.c.bf16 %v5498, %v5498
      %v6011 = vpack.c.bf16 %v5499, %v5499
      %v6012 = vpack.c.bf16 %v5500, %v5500
      %v6013 = vpack.c.bf16 %v5501, %v5501
      %v6014 = vpack.c.bf16 %v5502, %v5502
      %v6015 = vpack.c.bf16 %v5503, %v5503
      %v6016 = vpack.c.bf16 %v5504, %v5504
      %v6017 = vpack.c.bf16 %v5505, %v5505
      %v6018 = vpack.c.bf16 %v5506, %v5506
      %v6019 = vpack.c.bf16 %v5507, %v5507
      %v6020 = vpack.c.bf16 %v5508, %v5508
      %v6021 = vpack.c.bf16 %v5509, %v5509
      %v6022 = vpack.c.bf16 %v5510, %v5510
      %v6023 = vpack.c.bf16 %v5511, %v5511
      %v6024 = vpack.c.bf16 %v5512, %v5512
      %v6025 = vpack.c.bf16 %v5513, %v5513
      %v6026 = vpack.c.bf16 %v5514, %v5514
      %v6027 = vpack.c.bf16 %v5515, %v5515
      %v6028 = vpack.c.bf16 %v5516, %v5516
      %v6029 = vpack.c.bf16 %v5517, %v5517
      %v6030 = vpack.c.bf16 %v5518, %v5518
      %v6031 = vpack.c.bf16 %v5519, %v5519
      %v6032 = vpack.c.bf16 %v5520, %v5520
      %v6033 = vpack.c.bf16 %v5521, %v5521
      %v6034 = vpack.c.bf16 %v5522, %v5522
      %v6035 = vpack.c.bf16 %v5523, %v5523
      %v6036 = vpack.c.bf16 %v5524, %v5524
      %v6037 = vpack.c.bf16 %v5525, %v5525
      %v6038 = vpack.c.bf16 %v5526, %v5526
      %v6039 = vpack.c.bf16 %v5527, %v5527
      %v6040 = vpack.c.bf16 %v5528, %v5528
      %v6041 = vpack.c.bf16 %v5529, %v5529
      %v6042 = vpack.c.bf16 %v5530, %v5530
      %v6043 = vpack.c.bf16 %v5531, %v5531
      %v6044 = vpack.c.bf16 %v5532, %v5532
      %v6045 = vpack.c.bf16 %v5533, %v5533
      %v6046 = vpack.c.bf16 %v5534, %v5534
      %v6047 = vpack.c.bf16 %v5535, %v5535
      %v6048 = vpack.c.bf16 %v5536, %v5536
      %v6049 = vpack.c.bf16 %v5537, %v5537
      %v6050 = vpack.c.bf16 %v5538, %v5538
      %v6051 = vpack.c.bf16 %v5539, %v5539
      %v6052 = vpack.c.bf16 %v5540, %v5540
      %v6053 = vpack.c.bf16 %v5541, %v5541
      %v6054 = vpack.c.bf16 %v5542, %v5542
      %v6055 = vpack.c.bf16 %v5543, %v5543
      %v6056 = vpack.c.bf16 %v5544, %v5544
      %v6057 = vpack.c.bf16 %v5545, %v5545
      %v6058 = vpack.c.bf16 %v5546, %v5546
      %v6059 = vpack.c.bf16 %v5547, %v5547
      %v6060 = vpack.c.bf16 %v5548, %v5548
      %v6061 = vpack.c.bf16 %v5549, %v5549
      %v6062 = vpack.c.bf16 %v5550, %v5550
      %v6063 = vpack.c.bf16 %v5551, %v5551
      %v6064 = vpack.c.bf16 %v5552, %v5552
      %v6065 = vpack.c.bf16 %v5553, %v5553
      %v6066 = vpack.c.bf16 %v5554, %v5554
      %v6067 = vpack.c.bf16 %v5555, %v5555
      %v6068 = vpack.c.bf16 %v5556, %v5556
      %v6069 = vpack.c.bf16 %v5557, %v5557
      %v6070 = vpack.c.bf16 %v5558, %v5558
      %v6071 = vpack.c.bf16 %v5559, %v5559
      %v6072 = vpack.c.bf16 %v5560, %v5560
      %v6073 = vpack.c.bf16 %v5561, %v5561
      %v6074 = vpack.c.bf16 %v5562, %v5562
      %v6075 = vpack.c.bf16 %v5563, %v5563
      %v6076 = vpack.c.bf16 %v5564, %v5564
      %v6077 = vpack.c.bf16 %v5565, %v5565
      %v6078 = vpack.c.bf16 %v5566, %v5566
      %v6079 = vpack.c.bf16 %v5567, %v5567
      %v6080 = vpack.c.bf16 %v5568, %v5568
      %v6081 = vpack.c.bf16 %v5569, %v5569
      %v6082 = vpack.c.bf16 %v5570, %v5570
      %v6083 = vpack.c.bf16 %v5571, %v5571
      %v6084 = vpack.c.bf16 %v5572, %v5572
      %v6085 = vpack.c.bf16 %v5573, %v5573
      %v6086 = vpack.c.bf16 %v5574, %v5574
      %v6087 = vpack.c.bf16 %v5575, %v5575
      %v6088 = vpack.c.bf16 %v5576, %v5576
      %v6089 = vpack.c.bf16 %v5577, %v5577
      %v6090 = vpack.c.bf16 %v5578, %v5578
      %v6091 = vpack.c.bf16 %v5579, %v5579
      %v6092 = vpack.c.bf16 %v5580, %v5580
      %v6093 = vpack.c.bf16 %v5581, %v5581
      %v6094 = vpack.c.bf16 %v5582, %v5582
      %v6095 = vpack.c.bf16 %v5583, %v5583
      %v6096 = vpack.c.bf16 %v5584, %v5584
      %v6097 = vpack.c.bf16 %v5585, %v5585
      %v6098 = vpack.c.bf16 %v5586, %v5586
      %v6099 = vpack.c.bf16 %v5587, %v5587
      %v6100 = vpack.c.bf16 %v5588, %v5588
      %v6101 = vpack.c.bf16 %v5589, %v5589
      %v6102 = vpack.c.bf16 %v5590, %v5590
      %v6103 = vpack.c.bf16 %v5591, %v5591
      %v6104 = vpack.c.bf16 %v5592, %v5592
      %v6105 = vpack.c.bf16 %v5593, %v5593
      %v6106 = vpack.c.bf16 %v5594, %v5594
      %v6107 = vpack.c.bf16 %v5595, %v5595
      %v6108 = vpack.c.bf16 %v5596, %v5596
      %v6109 = vpack.c.bf16 %v5597, %v5597
      %v6110 = vpack.c.bf16 %v5598, %v5598
      %v6111 = vpack.c.bf16 %v5599, %v5599
      %v6112 = vpack.c.bf16 %v5600, %v5600
      %v6113 = vpack.c.bf16 %v5601, %v5601
      %v6114 = vpack.c.bf16 %v5602, %v5602
      %v6115 = vpack.c.bf16 %v5603, %v5603
      %v6116 = vpack.c.bf16 %v5604, %v5604
      %v6117 = vpack.c.bf16 %v5605, %v5605
      %v6118 = vpack.c.bf16 %v5606, %v5606
      %v6119 = vpack.c.bf16 %v5607, %v5607
      %v6120 = vpack.c.bf16 %v5608, %v5608
      %v6121 = vpack.c.bf16 %v5609, %v5609
      %v6122 = vpack.c.bf16 %v5610, %v5610
      %v6123 = vpack.c.bf16 %v5611, %v5611
      %v6124 = vpack.c.bf16 %v5612, %v5612
      %v6125 = vpack.c.bf16 %v5613, %v5613
      %v6126 = vpack.c.bf16 %v5614, %v5614
      %v6127 = vpack.c.bf16 %v5615, %v5615
      %v6128 = vpack.c.bf16 %v5616, %v5616
      %v6129 = vpack.c.bf16 %v5617, %v5617
      %vm6130 = vcmask 257024
      %6131 = vst.msk [vmem:[%s199] sm:$0xf] %vm6130, %v5618
      %6132 = vst.msk [vmem:[%s199 + $0x4] sm:$0xf] %vm6130, %v5619
      %6133 = vst.msk [vmem:[%s199 + $0x8] sm:$0xf] %vm6130, %v5620
      %6134 = vst.msk [vmem:[%s199 + $0xc] sm:$0xf] %vm6130, %v5621
      %6135 = vst.msk [vmem:[%s199 + $0x10] sm:$0xf] %vm6130, %v5622
      %6136 = vst.msk [vmem:[%s199 + $0x14] sm:$0xf] %vm6130, %v5623
      %6137 = vst.msk [vmem:[%s199 + $0x18] sm:$0xf] %vm6130, %v5624
      %6138 = vst.msk [vmem:[%s199 + $0x1c] sm:$0xf] %vm6130, %v5625
      %6139 = vst.msk [vmem:[%s199 + $0x20] sm:$0xf] %vm6130, %v5626
      %6140 = vst.msk [vmem:[%s199 + $0x24] sm:$0xf] %vm6130, %v5627
      %6141 = vst.msk [vmem:[%s199 + $0x28] sm:$0xf] %vm6130, %v5628
      %6142 = vst.msk [vmem:[%s199 + $0x2c] sm:$0xf] %vm6130, %v5629
      %6143 = vst.msk [vmem:[%s199 + $0x30] sm:$0xf] %vm6130, %v5630
      %6144 = vst.msk [vmem:[%s199 + $0x34] sm:$0xf] %vm6130, %v5631
      %6145 = vst.msk [vmem:[%s199 + $0x38] sm:$0xf] %vm6130, %v5632
      %6146 = vst.msk [vmem:[%s199 + $0x3c] sm:$0xf] %vm6130, %v5633
      %6147 = vst.msk [vmem:[%s199 + $0x40] sm:$0xf] %vm6130, %v5634
      %6148 = vst.msk [vmem:[%s199 + $0x44] sm:$0xf] %vm6130, %v5635
      %6149 = vst.msk [vmem:[%s199 + $0x48] sm:$0xf] %vm6130, %v5636
      %6150 = vst.msk [vmem:[%s199 + $0x4c] sm:$0xf] %vm6130, %v5637
      %6151 = vst.msk [vmem:[%s199 + $0x50] sm:$0xf] %vm6130, %v5638
      %6152 = vst.msk [vmem:[%s199 + $0x54] sm:$0xf] %vm6130, %v5639
      %6153 = vst.msk [vmem:[%s199 + $0x58] sm:$0xf] %vm6130, %v5640
      %6154 = vst.msk [vmem:[%s199 + $0x5c] sm:$0xf] %vm6130, %v5641
      %6155 = vst.msk [vmem:[%s199 + $0x60] sm:$0xf] %vm6130, %v5642
      %6156 = vst.msk [vmem:[%s199 + $0x64] sm:$0xf] %vm6130, %v5643
      %6157 = vst.msk [vmem:[%s199 + $0x68] sm:$0xf] %vm6130, %v5644
      %6158 = vst.msk [vmem:[%s199 + $0x6c] sm:$0xf] %vm6130, %v5645
      %6159 = vst.msk [vmem:[%s199 + $0x70] sm:$0xf] %vm6130, %v5646
      %6160 = vst.msk [vmem:[%s199 + $0x74] sm:$0xf] %vm6130, %v5647
      %6161 = vst.msk [vmem:[%s199 + $0x78] sm:$0xf] %vm6130, %v5648
      %6162 = vst.msk [vmem:[%s199 + $0x7c] sm:$0xf] %vm6130, %v5649
      %6163 = vst.msk [vmem:[%s199 + $0x80] sm:$0xf] %vm6130, %v5650
      %6164 = vst.msk [vmem:[%s199 + $0x84] sm:$0xf] %vm6130, %v5651
      %6165 = vst.msk [vmem:[%s199 + $0x88] sm:$0xf] %vm6130, %v5652
      %6166 = vst.msk [vmem:[%s199 + $0x8c] sm:$0xf] %vm6130, %v5653
      %6167 = vst.msk [vmem:[%s199 + $0x90] sm:$0xf] %vm6130, %v5654
      %6168 = vst.msk [vmem:[%s199 + $0x94] sm:$0xf] %vm6130, %v5655
      %6169 = vst.msk [vmem:[%s199 + $0x98] sm:$0xf] %vm6130, %v5656
      %6170 = vst.msk [vmem:[%s199 + $0x9c] sm:$0xf] %vm6130, %v5657
      %6171 = vst.msk [vmem:[%s199 + $0xa0] sm:$0xf] %vm6130, %v5658
      %6172 = vst.msk [vmem:[%s199 + $0xa4] sm:$0xf] %vm6130, %v5659
      %6173 = vst.msk [vmem:[%s199 + $0xa8] sm:$0xf] %vm6130, %v5660
      %6174 = vst.msk [vmem:[%s199 + $0xac] sm:$0xf] %vm6130, %v5661
      %6175 = vst.msk [vmem:[%s199 + $0xb0] sm:$0xf] %vm6130, %v5662
      %6176 = vst.msk [vmem:[%s199 + $0xb4] sm:$0xf] %vm6130, %v5663
      %6177 = vst.msk [vmem:[%s199 + $0xb8] sm:$0xf] %vm6130, %v5664
      %6178 = vst.msk [vmem:[%s199 + $0xbc] sm:$0xf] %vm6130, %v5665
      %6179 = vst.msk [vmem:[%s199 + $0xc0] sm:$0xf] %vm6130, %v5666
      %6180 = vst.msk [vmem:[%s199 + $0xc4] sm:$0xf] %vm6130, %v5667
      %6181 = vst.msk [vmem:[%s199 + $0xc8] sm:$0xf] %vm6130, %v5668
      %6182 = vst.msk [vmem:[%s199 + $0xcc] sm:$0xf] %vm6130, %v5669
      %6183 = vst.msk [vmem:[%s199 + $0xd0] sm:$0xf] %vm6130, %v5670
      %6184 = vst.msk [vmem:[%s199 + $0xd4] sm:$0xf] %vm6130, %v5671
      %6185 = vst.msk [vmem:[%s199 + $0xd8] sm:$0xf] %vm6130, %v5672
      %6186 = vst.msk [vmem:[%s199 + $0xdc] sm:$0xf] %vm6130, %v5673
      %6187 = vst.msk [vmem:[%s199 + $0xe0] sm:$0xf] %vm6130, %v5674
      %6188 = vst.msk [vmem:[%s199 + $0xe4] sm:$0xf] %vm6130, %v5675
      %6189 = vst.msk [vmem:[%s199 + $0xe8] sm:$0xf] %vm6130, %v5676
      %6190 = vst.msk [vmem:[%s199 + $0xec] sm:$0xf] %vm6130, %v5677
      %6191 = vst.msk [vmem:[%s199 + $0xf0] sm:$0xf] %vm6130, %v5678
      %6192 = vst.msk [vmem:[%s199 + $0xf4] sm:$0xf] %vm6130, %v5679
      %6193 = vst.msk [vmem:[%s199 + $0xf8] sm:$0xf] %vm6130, %v5680
      %6194 = vst.msk [vmem:[%s199 + $0xfc] sm:$0xf] %vm6130, %v5681
      %6195 = vst.msk [vmem:[%s199 + $0x100] sm:$0xf] %vm6130, %v5682
      %6196 = vst.msk [vmem:[%s199 + $0x104] sm:$0xf] %vm6130, %v5683
      %6197 = vst.msk [vmem:[%s199 + $0x108] sm:$0xf] %vm6130, %v5684
      %6198 = vst.msk [vmem:[%s199 + $0x10c] sm:$0xf] %vm6130, %v5685
      %6199 = vst.msk [vmem:[%s199 + $0x110] sm:$0xf] %vm6130, %v5686
      %6200 = vst.msk [vmem:[%s199 + $0x114] sm:$0xf] %vm6130, %v5687
      %6201 = vst.msk [vmem:[%s199 + $0x118] sm:$0xf] %vm6130, %v5688
      %6202 = vst.msk [vmem:[%s199 + $0x11c] sm:$0xf] %vm6130, %v5689
      %6203 = vst.msk [vmem:[%s199 + $0x120] sm:$0xf] %vm6130, %v5690
      %6204 = vst.msk [vmem:[%s199 + $0x124] sm:$0xf] %vm6130, %v5691
      %6205 = vst.msk [vmem:[%s199 + $0x128] sm:$0xf] %vm6130, %v5692
      %6206 = vst.msk [vmem:[%s199 + $0x12c] sm:$0xf] %vm6130, %v5693
      %6207 = vst.msk [vmem:[%s199 + $0x130] sm:$0xf] %vm6130, %v5694
      %6208 = vst.msk [vmem:[%s199 + $0x134] sm:$0xf] %vm6130, %v5695
      %6209 = vst.msk [vmem:[%s199 + $0x138] sm:$0xf] %vm6130, %v5696
      %6210 = vst.msk [vmem:[%s199 + $0x13c] sm:$0xf] %vm6130, %v5697
      %6211 = vst.msk [vmem:[%s199 + $0x140] sm:$0xf] %vm6130, %v5698
      %6212 = vst.msk [vmem:[%s199 + $0x144] sm:$0xf] %vm6130, %v5699
      %6213 = vst.msk [vmem:[%s199 + $0x148] sm:$0xf] %vm6130, %v5700
      %6214 = vst.msk [vmem:[%s199 + $0x14c] sm:$0xf] %vm6130, %v5701
      %6215 = vst.msk [vmem:[%s199 + $0x150] sm:$0xf] %vm6130, %v5702
      %6216 = vst.msk [vmem:[%s199 + $0x154] sm:$0xf] %vm6130, %v5703
      %6217 = vst.msk [vmem:[%s199 + $0x158] sm:$0xf] %vm6130, %v5704
      %6218 = vst.msk [vmem:[%s199 + $0x15c] sm:$0xf] %vm6130, %v5705
      %6219 = vst.msk [vmem:[%s199 + $0x160] sm:$0xf] %vm6130, %v5706
      %6220 = vst.msk [vmem:[%s199 + $0x164] sm:$0xf] %vm6130, %v5707
      %6221 = vst.msk [vmem:[%s199 + $0x168] sm:$0xf] %vm6130, %v5708
      %6222 = vst.msk [vmem:[%s199 + $0x16c] sm:$0xf] %vm6130, %v5709
      %6223 = vst.msk [vmem:[%s199 + $0x170] sm:$0xf] %vm6130, %v5710
      %6224 = vst.msk [vmem:[%s199 + $0x174] sm:$0xf] %vm6130, %v5711
      %6225 = vst.msk [vmem:[%s199 + $0x178] sm:$0xf] %vm6130, %v5712
      %6226 = vst.msk [vmem:[%s199 + $0x17c] sm:$0xf] %vm6130, %v5713
      %6227 = vst.msk [vmem:[%s199 + $0x180] sm:$0xf] %vm6130, %v5714
      %6228 = vst.msk [vmem:[%s199 + $0x184] sm:$0xf] %vm6130, %v5715
      %6229 = vst.msk [vmem:[%s199 + $0x188] sm:$0xf] %vm6130, %v5716
      %6230 = vst.msk [vmem:[%s199 + $0x18c] sm:$0xf] %vm6130, %v5717
      %6231 = vst.msk [vmem:[%s199 + $0x190] sm:$0xf] %vm6130, %v5718
      %6232 = vst.msk [vmem:[%s199 + $0x194] sm:$0xf] %vm6130, %v5719
      %6233 = vst.msk [vmem:[%s199 + $0x198] sm:$0xf] %vm6130, %v5720
      %6234 = vst.msk [vmem:[%s199 + $0x19c] sm:$0xf] %vm6130, %v5721
      %6235 = vst.msk [vmem:[%s199 + $0x1a0] sm:$0xf] %vm6130, %v5722
      %6236 = vst.msk [vmem:[%s199 + $0x1a4] sm:$0xf] %vm6130, %v5723
      %6237 = vst.msk [vmem:[%s199 + $0x1a8] sm:$0xf] %vm6130, %v5724
      %6238 = vst.msk [vmem:[%s199 + $0x1ac] sm:$0xf] %vm6130, %v5725
      %6239 = vst.msk [vmem:[%s199 + $0x1b0] sm:$0xf] %vm6130, %v5726
      %6240 = vst.msk [vmem:[%s199 + $0x1b4] sm:$0xf] %vm6130, %v5727
      %6241 = vst.msk [vmem:[%s199 + $0x1b8] sm:$0xf] %vm6130, %v5728
      %6242 = vst.msk [vmem:[%s199 + $0x1bc] sm:$0xf] %vm6130, %v5729
      %6243 = vst.msk [vmem:[%s199 + $0x1c0] sm:$0xf] %vm6130, %v5730
      %6244 = vst.msk [vmem:[%s199 + $0x1c4] sm:$0xf] %vm6130, %v5731
      %6245 = vst.msk [vmem:[%s199 + $0x1c8] sm:$0xf] %vm6130, %v5732
      %6246 = vst.msk [vmem:[%s199 + $0x1cc] sm:$0xf] %vm6130, %v5733
      %6247 = vst.msk [vmem:[%s199 + $0x1d0] sm:$0xf] %vm6130, %v5734
      %6248 = vst.msk [vmem:[%s199 + $0x1d4] sm:$0xf] %vm6130, %v5735
      %6249 = vst.msk [vmem:[%s199 + $0x1d8] sm:$0xf] %vm6130, %v5736
      %6250 = vst.msk [vmem:[%s199 + $0x1dc] sm:$0xf] %vm6130, %v5737
      %6251 = vst.msk [vmem:[%s199 + $0x1e0] sm:$0xf] %vm6130, %v5738
      %6252 = vst.msk [vmem:[%s199 + $0x1e4] sm:$0xf] %vm6130, %v5739
      %6253 = vst.msk [vmem:[%s199 + $0x1e8] sm:$0xf] %vm6130, %v5740
      %6254 = vst.msk [vmem:[%s199 + $0x1ec] sm:$0xf] %vm6130, %v5741
      %6255 = vst.msk [vmem:[%s199 + $0x1f0] sm:$0xf] %vm6130, %v5742
      %6256 = vst.msk [vmem:[%s199 + $0x1f4] sm:$0xf] %vm6130, %v5743
      %6257 = vst.msk [vmem:[%s199 + $0x1f8] sm:$0xf] %vm6130, %v5744
      %6258 = vst.msk [vmem:[%s199 + $0x1fc] sm:$0xf] %vm6130, %v5745
      %6259 = vst.msk [vmem:[%s199 + $0x200] sm:$0xf] %vm6130, %v5746
      %6260 = vst.msk [vmem:[%s199 + $0x204] sm:$0xf] %vm6130, %v5747
      %6261 = vst.msk [vmem:[%s199 + $0x208] sm:$0xf] %vm6130, %v5748
      %6262 = vst.msk [vmem:[%s199 + $0x20c] sm:$0xf] %vm6130, %v5749
      %6263 = vst.msk [vmem:[%s199 + $0x210] sm:$0xf] %vm6130, %v5750
      %6264 = vst.msk [vmem:[%s199 + $0x214] sm:$0xf] %vm6130, %v5751
      %6265 = vst.msk [vmem:[%s199 + $0x218] sm:$0xf] %vm6130, %v5752
      %6266 = vst.msk [vmem:[%s199 + $0x21c] sm:$0xf] %vm6130, %v5753
      %6267 = vst.msk [vmem:[%s199 + $0x220] sm:$0xf] %vm6130, %v5754
      %6268 = vst.msk [vmem:[%s199 + $0x224] sm:$0xf] %vm6130, %v5755
      %6269 = vst.msk [vmem:[%s199 + $0x228] sm:$0xf] %vm6130, %v5756
      %6270 = vst.msk [vmem:[%s199 + $0x22c] sm:$0xf] %vm6130, %v5757
      %6271 = vst.msk [vmem:[%s199 + $0x230] sm:$0xf] %vm6130, %v5758
      %6272 = vst.msk [vmem:[%s199 + $0x234] sm:$0xf] %vm6130, %v5759
      %6273 = vst.msk [vmem:[%s199 + $0x238] sm:$0xf] %vm6130, %v5760
      %6274 = vst.msk [vmem:[%s199 + $0x23c] sm:$0xf] %vm6130, %v5761
      %6275 = vst.msk [vmem:[%s199 + $0x240] sm:$0xf] %vm6130, %v5762
      %6276 = vst.msk [vmem:[%s199 + $0x244] sm:$0xf] %vm6130, %v5763
      %6277 = vst.msk [vmem:[%s199 + $0x248] sm:$0xf] %vm6130, %v5764
      %6278 = vst.msk [vmem:[%s199 + $0x24c] sm:$0xf] %vm6130, %v5765
      %6279 = vst.msk [vmem:[%s199 + $0x250] sm:$0xf] %vm6130, %v5766
      %6280 = vst.msk [vmem:[%s199 + $0x254] sm:$0xf] %vm6130, %v5767
      %6281 = vst.msk [vmem:[%s199 + $0x258] sm:$0xf] %vm6130, %v5768
      %6282 = vst.msk [vmem:[%s199 + $0x25c] sm:$0xf] %vm6130, %v5769
      %6283 = vst.msk [vmem:[%s199 + $0x260] sm:$0xf] %vm6130, %v5770
      %6284 = vst.msk [vmem:[%s199 + $0x264] sm:$0xf] %vm6130, %v5771
      %6285 = vst.msk [vmem:[%s199 + $0x268] sm:$0xf] %vm6130, %v5772
      %6286 = vst.msk [vmem:[%s199 + $0x26c] sm:$0xf] %vm6130, %v5773
      %6287 = vst.msk [vmem:[%s199 + $0x270] sm:$0xf] %vm6130, %v5774
      %6288 = vst.msk [vmem:[%s199 + $0x274] sm:$0xf] %vm6130, %v5775
      %6289 = vst.msk [vmem:[%s199 + $0x278] sm:$0xf] %vm6130, %v5776
      %6290 = vst.msk [vmem:[%s199 + $0x27c] sm:$0xf] %vm6130, %v5777
      %6291 = vst.msk [vmem:[%s199 + $0x280] sm:$0xf] %vm6130, %v5778
      %6292 = vst.msk [vmem:[%s199 + $0x284] sm:$0xf] %vm6130, %v5779
      %6293 = vst.msk [vmem:[%s199 + $0x288] sm:$0xf] %vm6130, %v5780
      %6294 = vst.msk [vmem:[%s199 + $0x28c] sm:$0xf] %vm6130, %v5781
      %6295 = vst.msk [vmem:[%s199 + $0x290] sm:$0xf] %vm6130, %v5782
      %6296 = vst.msk [vmem:[%s199 + $0x294] sm:$0xf] %vm6130, %v5783
      %6297 = vst.msk [vmem:[%s199 + $0x298] sm:$0xf] %vm6130, %v5784
      %6298 = vst.msk [vmem:[%s199 + $0x29c] sm:$0xf] %vm6130, %v5785
      %6299 = vst.msk [vmem:[%s199 + $0x2a0] sm:$0xf] %vm6130, %v5786
      %6300 = vst.msk [vmem:[%s199 + $0x2a4] sm:$0xf] %vm6130, %v5787
      %6301 = vst.msk [vmem:[%s199 + $0x2a8] sm:$0xf] %vm6130, %v5788
      %6302 = vst.msk [vmem:[%s199 + $0x2ac] sm:$0xf] %vm6130, %v5789
      %6303 = vst.msk [vmem:[%s199 + $0x2b0] sm:$0xf] %vm6130, %v5790
      %6304 = vst.msk [vmem:[%s199 + $0x2b4] sm:$0xf] %vm6130, %v5791
      %6305 = vst.msk [vmem:[%s199 + $0x2b8] sm:$0xf] %vm6130, %v5792
      %6306 = vst.msk [vmem:[%s199 + $0x2bc] sm:$0xf] %vm6130, %v5793
      %6307 = vst.msk [vmem:[%s199 + $0x2c0] sm:$0xf] %vm6130, %v5794
      %6308 = vst.msk [vmem:[%s199 + $0x2c4] sm:$0xf] %vm6130, %v5795
      %6309 = vst.msk [vmem:[%s199 + $0x2c8] sm:$0xf] %vm6130, %v5796
      %6310 = vst.msk [vmem:[%s199 + $0x2cc] sm:$0xf] %vm6130, %v5797
      %6311 = vst.msk [vmem:[%s199 + $0x2d0] sm:$0xf] %vm6130, %v5798
      %6312 = vst.msk [vmem:[%s199 + $0x2d4] sm:$0xf] %vm6130, %v5799
      %6313 = vst.msk [vmem:[%s199 + $0x2d8] sm:$0xf] %vm6130, %v5800
      %6314 = vst.msk [vmem:[%s199 + $0x2dc] sm:$0xf] %vm6130, %v5801
      %6315 = vst.msk [vmem:[%s199 + $0x2e0] sm:$0xf] %vm6130, %v5802
      %6316 = vst.msk [vmem:[%s199 + $0x2e4] sm:$0xf] %vm6130, %v5803
      %6317 = vst.msk [vmem:[%s199 + $0x2e8] sm:$0xf] %vm6130, %v5804
      %6318 = vst.msk [vmem:[%s199 + $0x2ec] sm:$0xf] %vm6130, %v5805
      %6319 = vst.msk [vmem:[%s199 + $0x2f0] sm:$0xf] %vm6130, %v5806
      %6320 = vst.msk [vmem:[%s199 + $0x2f4] sm:$0xf] %vm6130, %v5807
      %6321 = vst.msk [vmem:[%s199 + $0x2f8] sm:$0xf] %vm6130, %v5808
      %6322 = vst.msk [vmem:[%s199 + $0x2fc] sm:$0xf] %vm6130, %v5809
      %6323 = vst.msk [vmem:[%s199 + $0x300] sm:$0xf] %vm6130, %v5810
      %6324 = vst.msk [vmem:[%s199 + $0x304] sm:$0xf] %vm6130, %v5811
      %6325 = vst.msk [vmem:[%s199 + $0x308] sm:$0xf] %vm6130, %v5812
      %6326 = vst.msk [vmem:[%s199 + $0x30c] sm:$0xf] %vm6130, %v5813
      %6327 = vst.msk [vmem:[%s199 + $0x310] sm:$0xf] %vm6130, %v5814
      %6328 = vst.msk [vmem:[%s199 + $0x314] sm:$0xf] %vm6130, %v5815
      %6329 = vst.msk [vmem:[%s199 + $0x318] sm:$0xf] %vm6130, %v5816
      %6330 = vst.msk [vmem:[%s199 + $0x31c] sm:$0xf] %vm6130, %v5817
      %6331 = vst.msk [vmem:[%s199 + $0x320] sm:$0xf] %vm6130, %v5818
      %6332 = vst.msk [vmem:[%s199 + $0x324] sm:$0xf] %vm6130, %v5819
      %6333 = vst.msk [vmem:[%s199 + $0x328] sm:$0xf] %vm6130, %v5820
      %6334 = vst.msk [vmem:[%s199 + $0x32c] sm:$0xf] %vm6130, %v5821
      %6335 = vst.msk [vmem:[%s199 + $0x330] sm:$0xf] %vm6130, %v5822
      %6336 = vst.msk [vmem:[%s199 + $0x334] sm:$0xf] %vm6130, %v5823
      %6337 = vst.msk [vmem:[%s199 + $0x338] sm:$0xf] %vm6130, %v5824
      %6338 = vst.msk [vmem:[%s199 + $0x33c] sm:$0xf] %vm6130, %v5825
      %6339 = vst.msk [vmem:[%s199 + $0x340] sm:$0xf] %vm6130, %v5826
      %6340 = vst.msk [vmem:[%s199 + $0x344] sm:$0xf] %vm6130, %v5827
      %6341 = vst.msk [vmem:[%s199 + $0x348] sm:$0xf] %vm6130, %v5828
      %6342 = vst.msk [vmem:[%s199 + $0x34c] sm:$0xf] %vm6130, %v5829
      %6343 = vst.msk [vmem:[%s199 + $0x350] sm:$0xf] %vm6130, %v5830
      %6344 = vst.msk [vmem:[%s199 + $0x354] sm:$0xf] %vm6130, %v5831
      %6345 = vst.msk [vmem:[%s199 + $0x358] sm:$0xf] %vm6130, %v5832
      %6346 = vst.msk [vmem:[%s199 + $0x35c] sm:$0xf] %vm6130, %v5833
      %6347 = vst.msk [vmem:[%s199 + $0x360] sm:$0xf] %vm6130, %v5834
      %6348 = vst.msk [vmem:[%s199 + $0x364] sm:$0xf] %vm6130, %v5835
      %6349 = vst.msk [vmem:[%s199 + $0x368] sm:$0xf] %vm6130, %v5836
      %6350 = vst.msk [vmem:[%s199 + $0x36c] sm:$0xf] %vm6130, %v5837
      %6351 = vst.msk [vmem:[%s199 + $0x370] sm:$0xf] %vm6130, %v5838
      %6352 = vst.msk [vmem:[%s199 + $0x374] sm:$0xf] %vm6130, %v5839
      %6353 = vst.msk [vmem:[%s199 + $0x378] sm:$0xf] %vm6130, %v5840
      %6354 = vst.msk [vmem:[%s199 + $0x37c] sm:$0xf] %vm6130, %v5841
      %6355 = vst.msk [vmem:[%s199 + $0x380] sm:$0xf] %vm6130, %v5842
      %6356 = vst.msk [vmem:[%s199 + $0x384] sm:$0xf] %vm6130, %v5843
      %6357 = vst.msk [vmem:[%s199 + $0x388] sm:$0xf] %vm6130, %v5844
      %6358 = vst.msk [vmem:[%s199 + $0x38c] sm:$0xf] %vm6130, %v5845
      %6359 = vst.msk [vmem:[%s199 + $0x390] sm:$0xf] %vm6130, %v5846
      %6360 = vst.msk [vmem:[%s199 + $0x394] sm:$0xf] %vm6130, %v5847
      %6361 = vst.msk [vmem:[%s199 + $0x398] sm:$0xf] %vm6130, %v5848
      %6362 = vst.msk [vmem:[%s199 + $0x39c] sm:$0xf] %vm6130, %v5849
      %6363 = vst.msk [vmem:[%s199 + $0x3a0] sm:$0xf] %vm6130, %v5850
      %6364 = vst.msk [vmem:[%s199 + $0x3a4] sm:$0xf] %vm6130, %v5851
      %6365 = vst.msk [vmem:[%s199 + $0x3a8] sm:$0xf] %vm6130, %v5852
      %6366 = vst.msk [vmem:[%s199 + $0x3ac] sm:$0xf] %vm6130, %v5853
      %6367 = vst.msk [vmem:[%s199 + $0x3b0] sm:$0xf] %vm6130, %v5854
      %6368 = vst.msk [vmem:[%s199 + $0x3b4] sm:$0xf] %vm6130, %v5855
      %6369 = vst.msk [vmem:[%s199 + $0x3b8] sm:$0xf] %vm6130, %v5856
      %6370 = vst.msk [vmem:[%s199 + $0x3bc] sm:$0xf] %vm6130, %v5857
      %6371 = vst.msk [vmem:[%s199 + $0x3c0] sm:$0xf] %vm6130, %v5858
      %6372 = vst.msk [vmem:[%s199 + $0x3c4] sm:$0xf] %vm6130, %v5859
      %6373 = vst.msk [vmem:[%s199 + $0x3c8] sm:$0xf] %vm6130, %v5860
      %6374 = vst.msk [vmem:[%s199 + $0x3cc] sm:$0xf] %vm6130, %v5861
      %6375 = vst.msk [vmem:[%s199 + $0x3d0] sm:$0xf] %vm6130, %v5862
      %6376 = vst.msk [vmem:[%s199 + $0x3d4] sm:$0xf] %vm6130, %v5863
      %6377 = vst.msk [vmem:[%s199 + $0x3d8] sm:$0xf] %vm6130, %v5864
      %6378 = vst.msk [vmem:[%s199 + $0x3dc] sm:$0xf] %vm6130, %v5865
      %6379 = vst.msk [vmem:[%s199 + $0x3e0] sm:$0xf] %vm6130, %v5866
      %6380 = vst.msk [vmem:[%s199 + $0x3e4] sm:$0xf] %vm6130, %v5867
      %6381 = vst.msk [vmem:[%s199 + $0x3e8] sm:$0xf] %vm6130, %v5868
      %6382 = vst.msk [vmem:[%s199 + $0x3ec] sm:$0xf] %vm6130, %v5869
      %6383 = vst.msk [vmem:[%s199 + $0x3f0] sm:$0xf] %vm6130, %v5870
      %6384 = vst.msk [vmem:[%s199 + $0x3f4] sm:$0xf] %vm6130, %v5871
      %6385 = vst.msk [vmem:[%s199 + $0x3f8] sm:$0xf] %vm6130, %v5872
      %6386 = vst.msk [vmem:[%s199 + $0x3fc] sm:$0xf] %vm6130, %v5873
      %6387 = vst.msk [vmem:[%s199 + $0x400] sm:$0xf] %vm6130, %v5874
      %6388 = vst.msk [vmem:[%s199 + $0x404] sm:$0xf] %vm6130, %v5875
      %6389 = vst.msk [vmem:[%s199 + $0x408] sm:$0xf] %vm6130, %v5876
      %6390 = vst.msk [vmem:[%s199 + $0x40c] sm:$0xf] %vm6130, %v5877
      %6391 = vst.msk [vmem:[%s199 + $0x410] sm:$0xf] %vm6130, %v5878
      %6392 = vst.msk [vmem:[%s199 + $0x414] sm:$0xf] %vm6130, %v5879
      %6393 = vst.msk [vmem:[%s199 + $0x418] sm:$0xf] %vm6130, %v5880
      %6394 = vst.msk [vmem:[%s199 + $0x41c] sm:$0xf] %vm6130, %v5881
      %6395 = vst.msk [vmem:[%s199 + $0x420] sm:$0xf] %vm6130, %v5882
      %6396 = vst.msk [vmem:[%s199 + $0x424] sm:$0xf] %vm6130, %v5883
      %6397 = vst.msk [vmem:[%s199 + $0x428] sm:$0xf] %vm6130, %v5884
      %6398 = vst.msk [vmem:[%s199 + $0x42c] sm:$0xf] %vm6130, %v5885
      %6399 = vst.msk [vmem:[%s199 + $0x430] sm:$0xf] %vm6130, %v5886
      %6400 = vst.msk [vmem:[%s199 + $0x434] sm:$0xf] %vm6130, %v5887
      %6401 = vst.msk [vmem:[%s199 + $0x438] sm:$0xf] %vm6130, %v5888
      %6402 = vst.msk [vmem:[%s199 + $0x43c] sm:$0xf] %vm6130, %v5889
      %6403 = vst.msk [vmem:[%s199 + $0x440] sm:$0xf] %vm6130, %v5890
      %6404 = vst.msk [vmem:[%s199 + $0x444] sm:$0xf] %vm6130, %v5891
      %6405 = vst.msk [vmem:[%s199 + $0x448] sm:$0xf] %vm6130, %v5892
      %6406 = vst.msk [vmem:[%s199 + $0x44c] sm:$0xf] %vm6130, %v5893
      %6407 = vst.msk [vmem:[%s199 + $0x450] sm:$0xf] %vm6130, %v5894
      %6408 = vst.msk [vmem:[%s199 + $0x454] sm:$0xf] %vm6130, %v5895
      %6409 = vst.msk [vmem:[%s199 + $0x458] sm:$0xf] %vm6130, %v5896
      %6410 = vst.msk [vmem:[%s199 + $0x45c] sm:$0xf] %vm6130, %v5897
      %6411 = vst.msk [vmem:[%s199 + $0x460] sm:$0xf] %vm6130, %v5898
      %6412 = vst.msk [vmem:[%s199 + $0x464] sm:$0xf] %vm6130, %v5899
      %6413 = vst.msk [vmem:[%s199 + $0x468] sm:$0xf] %vm6130, %v5900
      %6414 = vst.msk [vmem:[%s199 + $0x46c] sm:$0xf] %vm6130, %v5901
      %6415 = vst.msk [vmem:[%s199 + $0x470] sm:$0xf] %vm6130, %v5902
      %6416 = vst.msk [vmem:[%s199 + $0x474] sm:$0xf] %vm6130, %v5903
      %6417 = vst.msk [vmem:[%s199 + $0x478] sm:$0xf] %vm6130, %v5904
      %6418 = vst.msk [vmem:[%s199 + $0x47c] sm:$0xf] %vm6130, %v5905
      %6419 = vst.msk [vmem:[%s199 + $0x480] sm:$0xf] %vm6130, %v5906
      %6420 = vst.msk [vmem:[%s199 + $0x484] sm:$0xf] %vm6130, %v5907
      %6421 = vst.msk [vmem:[%s199 + $0x488] sm:$0xf] %vm6130, %v5908
      %6422 = vst.msk [vmem:[%s199 + $0x48c] sm:$0xf] %vm6130, %v5909
      %6423 = vst.msk [vmem:[%s199 + $0x490] sm:$0xf] %vm6130, %v5910
      %6424 = vst.msk [vmem:[%s199 + $0x494] sm:$0xf] %vm6130, %v5911
      %6425 = vst.msk [vmem:[%s199 + $0x498] sm:$0xf] %vm6130, %v5912
      %6426 = vst.msk [vmem:[%s199 + $0x49c] sm:$0xf] %vm6130, %v5913
      %6427 = vst.msk [vmem:[%s199 + $0x4a0] sm:$0xf] %vm6130, %v5914
      %6428 = vst.msk [vmem:[%s199 + $0x4a4] sm:$0xf] %vm6130, %v5915
      %6429 = vst.msk [vmem:[%s199 + $0x4a8] sm:$0xf] %vm6130, %v5916
      %6430 = vst.msk [vmem:[%s199 + $0x4ac] sm:$0xf] %vm6130, %v5917
      %6431 = vst.msk [vmem:[%s199 + $0x4b0] sm:$0xf] %vm6130, %v5918
      %6432 = vst.msk [vmem:[%s199 + $0x4b4] sm:$0xf] %vm6130, %v5919
      %6433 = vst.msk [vmem:[%s199 + $0x4b8] sm:$0xf] %vm6130, %v5920
      %6434 = vst.msk [vmem:[%s199 + $0x4bc] sm:$0xf] %vm6130, %v5921
      %6435 = vst.msk [vmem:[%s199 + $0x4c0] sm:$0xf] %vm6130, %v5922
      %6436 = vst.msk [vmem:[%s199 + $0x4c4] sm:$0xf] %vm6130, %v5923
      %6437 = vst.msk [vmem:[%s199 + $0x4c8] sm:$0xf] %vm6130, %v5924
      %6438 = vst.msk [vmem:[%s199 + $0x4cc] sm:$0xf] %vm6130, %v5925
      %6439 = vst.msk [vmem:[%s199 + $0x4d0] sm:$0xf] %vm6130, %v5926
      %6440 = vst.msk [vmem:[%s199 + $0x4d4] sm:$0xf] %vm6130, %v5927
      %6441 = vst.msk [vmem:[%s199 + $0x4d8] sm:$0xf] %vm6130, %v5928
      %6442 = vst.msk [vmem:[%s199 + $0x4dc] sm:$0xf] %vm6130, %v5929
      %6443 = vst.msk [vmem:[%s199 + $0x4e0] sm:$0xf] %vm6130, %v5930
      %6444 = vst.msk [vmem:[%s199 + $0x4e4] sm:$0xf] %vm6130, %v5931
      %6445 = vst.msk [vmem:[%s199 + $0x4e8] sm:$0xf] %vm6130, %v5932
      %6446 = vst.msk [vmem:[%s199 + $0x4ec] sm:$0xf] %vm6130, %v5933
      %6447 = vst.msk [vmem:[%s199 + $0x4f0] sm:$0xf] %vm6130, %v5934
      %6448 = vst.msk [vmem:[%s199 + $0x4f4] sm:$0xf] %vm6130, %v5935
      %6449 = vst.msk [vmem:[%s199 + $0x4f8] sm:$0xf] %vm6130, %v5936
      %6450 = vst.msk [vmem:[%s199 + $0x4fc] sm:$0xf] %vm6130, %v5937
      %6451 = vst.msk [vmem:[%s199 + $0x500] sm:$0xf] %vm6130, %v5938
      %6452 = vst.msk [vmem:[%s199 + $0x504] sm:$0xf] %vm6130, %v5939
      %6453 = vst.msk [vmem:[%s199 + $0x508] sm:$0xf] %vm6130, %v5940
      %6454 = vst.msk [vmem:[%s199 + $0x50c] sm:$0xf] %vm6130, %v5941
      %6455 = vst.msk [vmem:[%s199 + $0x510] sm:$0xf] %vm6130, %v5942
      %6456 = vst.msk [vmem:[%s199 + $0x514] sm:$0xf] %vm6130, %v5943
      %6457 = vst.msk [vmem:[%s199 + $0x518] sm:$0xf] %vm6130, %v5944
      %6458 = vst.msk [vmem:[%s199 + $0x51c] sm:$0xf] %vm6130, %v5945
      %6459 = vst.msk [vmem:[%s199 + $0x520] sm:$0xf] %vm6130, %v5946
      %6460 = vst.msk [vmem:[%s199 + $0x524] sm:$0xf] %vm6130, %v5947
      %6461 = vst.msk [vmem:[%s199 + $0x528] sm:$0xf] %vm6130, %v5948
      %6462 = vst.msk [vmem:[%s199 + $0x52c] sm:$0xf] %vm6130, %v5949
      %6463 = vst.msk [vmem:[%s199 + $0x530] sm:$0xf] %vm6130, %v5950
      %6464 = vst.msk [vmem:[%s199 + $0x534] sm:$0xf] %vm6130, %v5951
      %6465 = vst.msk [vmem:[%s199 + $0x538] sm:$0xf] %vm6130, %v5952
      %6466 = vst.msk [vmem:[%s199 + $0x53c] sm:$0xf] %vm6130, %v5953
      %6467 = vst.msk [vmem:[%s199 + $0x540] sm:$0xf] %vm6130, %v5954
      %6468 = vst.msk [vmem:[%s199 + $0x544] sm:$0xf] %vm6130, %v5955
      %6469 = vst.msk [vmem:[%s199 + $0x548] sm:$0xf] %vm6130, %v5956
      %6470 = vst.msk [vmem:[%s199 + $0x54c] sm:$0xf] %vm6130, %v5957
      %6471 = vst.msk [vmem:[%s199 + $0x550] sm:$0xf] %vm6130, %v5958
      %6472 = vst.msk [vmem:[%s199 + $0x554] sm:$0xf] %vm6130, %v5959
      %6473 = vst.msk [vmem:[%s199 + $0x558] sm:$0xf] %vm6130, %v5960
      %6474 = vst.msk [vmem:[%s199 + $0x55c] sm:$0xf] %vm6130, %v5961
      %6475 = vst.msk [vmem:[%s199 + $0x560] sm:$0xf] %vm6130, %v5962
      %6476 = vst.msk [vmem:[%s199 + $0x564] sm:$0xf] %vm6130, %v5963
      %6477 = vst.msk [vmem:[%s199 + $0x568] sm:$0xf] %vm6130, %v5964
      %6478 = vst.msk [vmem:[%s199 + $0x56c] sm:$0xf] %vm6130, %v5965
      %6479 = vst.msk [vmem:[%s199 + $0x570] sm:$0xf] %vm6130, %v5966
      %6480 = vst.msk [vmem:[%s199 + $0x574] sm:$0xf] %vm6130, %v5967
      %6481 = vst.msk [vmem:[%s199 + $0x578] sm:$0xf] %vm6130, %v5968
      %6482 = vst.msk [vmem:[%s199 + $0x57c] sm:$0xf] %vm6130, %v5969
      %6483 = vst.msk [vmem:[%s199 + $0x580] sm:$0xf] %vm6130, %v5970
      %6484 = vst.msk [vmem:[%s199 + $0x584] sm:$0xf] %vm6130, %v5971
      %6485 = vst.msk [vmem:[%s199 + $0x588] sm:$0xf] %vm6130, %v5972
      %6486 = vst.msk [vmem:[%s199 + $0x58c] sm:$0xf] %vm6130, %v5973
      %6487 = vst.msk [vmem:[%s199 + $0x590] sm:$0xf] %vm6130, %v5974
      %6488 = vst.msk [vmem:[%s199 + $0x594] sm:$0xf] %vm6130, %v5975
      %6489 = vst.msk [vmem:[%s199 + $0x598] sm:$0xf] %vm6130, %v5976
      %6490 = vst.msk [vmem:[%s199 + $0x59c] sm:$0xf] %vm6130, %v5977
      %6491 = vst.msk [vmem:[%s199 + $0x5a0] sm:$0xf] %vm6130, %v5978
      %6492 = vst.msk [vmem:[%s199 + $0x5a4] sm:$0xf] %vm6130, %v5979
      %6493 = vst.msk [vmem:[%s199 + $0x5a8] sm:$0xf] %vm6130, %v5980
      %6494 = vst.msk [vmem:[%s199 + $0x5ac] sm:$0xf] %vm6130, %v5981
      %6495 = vst.msk [vmem:[%s199 + $0x5b0] sm:$0xf] %vm6130, %v5982
      %6496 = vst.msk [vmem:[%s199 + $0x5b4] sm:$0xf] %vm6130, %v5983
      %6497 = vst.msk [vmem:[%s199 + $0x5b8] sm:$0xf] %vm6130, %v5984
      %6498 = vst.msk [vmem:[%s199 + $0x5bc] sm:$0xf] %vm6130, %v5985
      %6499 = vst.msk [vmem:[%s199 + $0x5c0] sm:$0xf] %vm6130, %v5986
      %6500 = vst.msk [vmem:[%s199 + $0x5c4] sm:$0xf] %vm6130, %v5987
      %6501 = vst.msk [vmem:[%s199 + $0x5c8] sm:$0xf] %vm6130, %v5988
      %6502 = vst.msk [vmem:[%s199 + $0x5cc] sm:$0xf] %vm6130, %v5989
      %6503 = vst.msk [vmem:[%s199 + $0x5d0] sm:$0xf] %vm6130, %v5990
      %6504 = vst.msk [vmem:[%s199 + $0x5d4] sm:$0xf] %vm6130, %v5991
      %6505 = vst.msk [vmem:[%s199 + $0x5d8] sm:$0xf] %vm6130, %v5992
      %6506 = vst.msk [vmem:[%s199 + $0x5dc] sm:$0xf] %vm6130, %v5993
      %6507 = vst.msk [vmem:[%s199 + $0x5e0] sm:$0xf] %vm6130, %v5994
      %6508 = vst.msk [vmem:[%s199 + $0x5e4] sm:$0xf] %vm6130, %v5995
      %6509 = vst.msk [vmem:[%s199 + $0x5e8] sm:$0xf] %vm6130, %v5996
      %6510 = vst.msk [vmem:[%s199 + $0x5ec] sm:$0xf] %vm6130, %v5997
      %6511 = vst.msk [vmem:[%s199 + $0x5f0] sm:$0xf] %vm6130, %v5998
      %6512 = vst.msk [vmem:[%s199 + $0x5f4] sm:$0xf] %vm6130, %v5999
      %6513 = vst.msk [vmem:[%s199 + $0x5f8] sm:$0xf] %vm6130, %v6000
      %6514 = vst.msk [vmem:[%s199 + $0x5fc] sm:$0xf] %vm6130, %v6001
      %6515 = vst.msk [vmem:[%s199 + $0x600] sm:$0xf] %vm6130, %v6002
      %6516 = vst.msk [vmem:[%s199 + $0x604] sm:$0xf] %vm6130, %v6003
      %6517 = vst.msk [vmem:[%s199 + $0x608] sm:$0xf] %vm6130, %v6004
      %6518 = vst.msk [vmem:[%s199 + $0x60c] sm:$0xf] %vm6130, %v6005
      %6519 = vst.msk [vmem:[%s199 + $0x610] sm:$0xf] %vm6130, %v6006
      %6520 = vst.msk [vmem:[%s199 + $0x614] sm:$0xf] %vm6130, %v6007
      %6521 = vst.msk [vmem:[%s199 + $0x618] sm:$0xf] %vm6130, %v6008
      %6522 = vst.msk [vmem:[%s199 + $0x61c] sm:$0xf] %vm6130, %v6009
      %6523 = vst.msk [vmem:[%s199 + $0x620] sm:$0xf] %vm6130, %v6010
      %6524 = vst.msk [vmem:[%s199 + $0x624] sm:$0xf] %vm6130, %v6011
      %6525 = vst.msk [vmem:[%s199 + $0x628] sm:$0xf] %vm6130, %v6012
      %6526 = vst.msk [vmem:[%s199 + $0x62c] sm:$0xf] %vm6130, %v6013
      %6527 = vst.msk [vmem:[%s199 + $0x630] sm:$0xf] %vm6130, %v6014
      %6528 = vst.msk [vmem:[%s199 + $0x634] sm:$0xf] %vm6130, %v6015
      %6529 = vst.msk [vmem:[%s199 + $0x638] sm:$0xf] %vm6130, %v6016
      %6530 = vst.msk [vmem:[%s199 + $0x63c] sm:$0xf] %vm6130, %v6017
      %6531 = vst.msk [vmem:[%s199 + $0x640] sm:$0xf] %vm6130, %v6018
      %6532 = vst.msk [vmem:[%s199 + $0x644] sm:$0xf] %vm6130, %v6019
      %6533 = vst.msk [vmem:[%s199 + $0x648] sm:$0xf] %vm6130, %v6020
      %6534 = vst.msk [vmem:[%s199 + $0x64c] sm:$0xf] %vm6130, %v6021
      %6535 = vst.msk [vmem:[%s199 + $0x650] sm:$0xf] %vm6130, %v6022
      %6536 = vst.msk [vmem:[%s199 + $0x654] sm:$0xf] %vm6130, %v6023
      %6537 = vst.msk [vmem:[%s199 + $0x658] sm:$0xf] %vm6130, %v6024
      %6538 = vst.msk [vmem:[%s199 + $0x65c] sm:$0xf] %vm6130, %v6025
      %6539 = vst.msk [vmem:[%s199 + $0x660] sm:$0xf] %vm6130, %v6026
      %6540 = vst.msk [vmem:[%s199 + $0x664] sm:$0xf] %vm6130, %v6027
      %6541 = vst.msk [vmem:[%s199 + $0x668] sm:$0xf] %vm6130, %v6028
      %6542 = vst.msk [vmem:[%s199 + $0x66c] sm:$0xf] %vm6130, %v6029
      %6543 = vst.msk [vmem:[%s199 + $0x670] sm:$0xf] %vm6130, %v6030
      %6544 = vst.msk [vmem:[%s199 + $0x674] sm:$0xf] %vm6130, %v6031
      %6545 = vst.msk [vmem:[%s199 + $0x678] sm:$0xf] %vm6130, %v6032
      %6546 = vst.msk [vmem:[%s199 + $0x67c] sm:$0xf] %vm6130, %v6033
      %6547 = vst.msk [vmem:[%s199 + $0x680] sm:$0xf] %vm6130, %v6034
      %6548 = vst.msk [vmem:[%s199 + $0x684] sm:$0xf] %vm6130, %v6035
      %6549 = vst.msk [vmem:[%s199 + $0x688] sm:$0xf] %vm6130, %v6036
      %6550 = vst.msk [vmem:[%s199 + $0x68c] sm:$0xf] %vm6130, %v6037
      %6551 = vst.msk [vmem:[%s199 + $0x690] sm:$0xf] %vm6130, %v6038
      %6552 = vst.msk [vmem:[%s199 + $0x694] sm:$0xf] %vm6130, %v6039
      %6553 = vst.msk [vmem:[%s199 + $0x698] sm:$0xf] %vm6130, %v6040
      %6554 = vst.msk [vmem:[%s199 + $0x69c] sm:$0xf] %vm6130, %v6041
      %6555 = vst.msk [vmem:[%s199 + $0x6a0] sm:$0xf] %vm6130, %v6042
      %6556 = vst.msk [vmem:[%s199 + $0x6a4] sm:$0xf] %vm6130, %v6043
      %6557 = vst.msk [vmem:[%s199 + $0x6a8] sm:$0xf] %vm6130, %v6044
      %6558 = vst.msk [vmem:[%s199 + $0x6ac] sm:$0xf] %vm6130, %v6045
      %6559 = vst.msk [vmem:[%s199 + $0x6b0] sm:$0xf] %vm6130, %v6046
      %6560 = vst.msk [vmem:[%s199 + $0x6b4] sm:$0xf] %vm6130, %v6047
      %6561 = vst.msk [vmem:[%s199 + $0x6b8] sm:$0xf] %vm6130, %v6048
      %6562 = vst.msk [vmem:[%s199 + $0x6bc] sm:$0xf] %vm6130, %v6049
      %6563 = vst.msk [vmem:[%s199 + $0x6c0] sm:$0xf] %vm6130, %v6050
      %6564 = vst.msk [vmem:[%s199 + $0x6c4] sm:$0xf] %vm6130, %v6051
      %6565 = vst.msk [vmem:[%s199 + $0x6c8] sm:$0xf] %vm6130, %v6052
      %6566 = vst.msk [vmem:[%s199 + $0x6cc] sm:$0xf] %vm6130, %v6053
      %6567 = vst.msk [vmem:[%s199 + $0x6d0] sm:$0xf] %vm6130, %v6054
      %6568 = vst.msk [vmem:[%s199 + $0x6d4] sm:$0xf] %vm6130, %v6055
      %6569 = vst.msk [vmem:[%s199 + $0x6d8] sm:$0xf] %vm6130, %v6056
      %6570 = vst.msk [vmem:[%s199 + $0x6dc] sm:$0xf] %vm6130, %v6057
      %6571 = vst.msk [vmem:[%s199 + $0x6e0] sm:$0xf] %vm6130, %v6058
      %6572 = vst.msk [vmem:[%s199 + $0x6e4] sm:$0xf] %vm6130, %v6059
      %6573 = vst.msk [vmem:[%s199 + $0x6e8] sm:$0xf] %vm6130, %v6060
      %6574 = vst.msk [vmem:[%s199 + $0x6ec] sm:$0xf] %vm6130, %v6061
      %6575 = vst.msk [vmem:[%s199 + $0x6f0] sm:$0xf] %vm6130, %v6062
      %6576 = vst.msk [vmem:[%s199 + $0x6f4] sm:$0xf] %vm6130, %v6063
      %6577 = vst.msk [vmem:[%s199 + $0x6f8] sm:$0xf] %vm6130, %v6064
      %6578 = vst.msk [vmem:[%s199 + $0x6fc] sm:$0xf] %vm6130, %v6065
      %6579 = vst.msk [vmem:[%s199 + $0x700] sm:$0xf] %vm6130, %v6066
      %6580 = vst.msk [vmem:[%s199 + $0x704] sm:$0xf] %vm6130, %v6067
      %6581 = vst.msk [vmem:[%s199 + $0x708] sm:$0xf] %vm6130, %v6068
      %6582 = vst.msk [vmem:[%s199 + $0x70c] sm:$0xf] %vm6130, %v6069
      %6583 = vst.msk [vmem:[%s199 + $0x710] sm:$0xf] %vm6130, %v6070
      %6584 = vst.msk [vmem:[%s199 + $0x714] sm:$0xf] %vm6130, %v6071
      %6585 = vst.msk [vmem:[%s199 + $0x718] sm:$0xf] %vm6130, %v6072
      %6586 = vst.msk [vmem:[%s199 + $0x71c] sm:$0xf] %vm6130, %v6073
      %6587 = vst.msk [vmem:[%s199 + $0x720] sm:$0xf] %vm6130, %v6074
      %6588 = vst.msk [vmem:[%s199 + $0x724] sm:$0xf] %vm6130, %v6075
      %6589 = vst.msk [vmem:[%s199 + $0x728] sm:$0xf] %vm6130, %v6076
      %6590 = vst.msk [vmem:[%s199 + $0x72c] sm:$0xf] %vm6130, %v6077
      %6591 = vst.msk [vmem:[%s199 + $0x730] sm:$0xf] %vm6130, %v6078
      %6592 = vst.msk [vmem:[%s199 + $0x734] sm:$0xf] %vm6130, %v6079
      %6593 = vst.msk [vmem:[%s199 + $0x738] sm:$0xf] %vm6130, %v6080
      %6594 = vst.msk [vmem:[%s199 + $0x73c] sm:$0xf] %vm6130, %v6081
      %6595 = vst.msk [vmem:[%s199 + $0x740] sm:$0xf] %vm6130, %v6082
      %6596 = vst.msk [vmem:[%s199 + $0x744] sm:$0xf] %vm6130, %v6083
      %6597 = vst.msk [vmem:[%s199 + $0x748] sm:$0xf] %vm6130, %v6084
      %6598 = vst.msk [vmem:[%s199 + $0x74c] sm:$0xf] %vm6130, %v6085
      %6599 = vst.msk [vmem:[%s199 + $0x750] sm:$0xf] %vm6130, %v6086
      %6600 = vst.msk [vmem:[%s199 + $0x754] sm:$0xf] %vm6130, %v6087
      %6601 = vst.msk [vmem:[%s199 + $0x758] sm:$0xf] %vm6130, %v6088
      %6602 = vst.msk [vmem:[%s199 + $0x75c] sm:$0xf] %vm6130, %v6089
      %6603 = vst.msk [vmem:[%s199 + $0x760] sm:$0xf] %vm6130, %v6090
      %6604 = vst.msk [vmem:[%s199 + $0x764] sm:$0xf] %vm6130, %v6091
      %6605 = vst.msk [vmem:[%s199 + $0x768] sm:$0xf] %vm6130, %v6092
      %6606 = vst.msk [vmem:[%s199 + $0x76c] sm:$0xf] %vm6130, %v6093
      %6607 = vst.msk [vmem:[%s199 + $0x770] sm:$0xf] %vm6130, %v6094
      %6608 = vst.msk [vmem:[%s199 + $0x774] sm:$0xf] %vm6130, %v6095
      %6609 = vst.msk [vmem:[%s199 + $0x778] sm:$0xf] %vm6130, %v6096
      %6610 = vst.msk [vmem:[%s199 + $0x77c] sm:$0xf] %vm6130, %v6097
      %6611 = vst.msk [vmem:[%s199 + $0x780] sm:$0xf] %vm6130, %v6098
      %6612 = vst.msk [vmem:[%s199 + $0x784] sm:$0xf] %vm6130, %v6099
      %6613 = vst.msk [vmem:[%s199 + $0x788] sm:$0xf] %vm6130, %v6100
      %6614 = vst.msk [vmem:[%s199 + $0x78c] sm:$0xf] %vm6130, %v6101
      %6615 = vst.msk [vmem:[%s199 + $0x790] sm:$0xf] %vm6130, %v6102
      %6616 = vst.msk [vmem:[%s199 + $0x794] sm:$0xf] %vm6130, %v6103
      %6617 = vst.msk [vmem:[%s199 + $0x798] sm:$0xf] %vm6130, %v6104
      %6618 = vst.msk [vmem:[%s199 + $0x79c] sm:$0xf] %vm6130, %v6105
      %6619 = vst.msk [vmem:[%s199 + $0x7a0] sm:$0xf] %vm6130, %v6106
      %6620 = vst.msk [vmem:[%s199 + $0x7a4] sm:$0xf] %vm6130, %v6107
      %6621 = vst.msk [vmem:[%s199 + $0x7a8] sm:$0xf] %vm6130, %v6108
      %6622 = vst.msk [vmem:[%s199 + $0x7ac] sm:$0xf] %vm6130, %v6109
      %6623 = vst.msk [vmem:[%s199 + $0x7b0] sm:$0xf] %vm6130, %v6110
      %6624 = vst.msk [vmem:[%s199 + $0x7b4] sm:$0xf] %vm6130, %v6111
      %6625 = vst.msk [vmem:[%s199 + $0x7b8] sm:$0xf] %vm6130, %v6112
      %6626 = vst.msk [vmem:[%s199 + $0x7bc] sm:$0xf] %vm6130, %v6113
      %6627 = vst.msk [vmem:[%s199 + $0x7c0] sm:$0xf] %vm6130, %v6114
      %6628 = vst.msk [vmem:[%s199 + $0x7c4] sm:$0xf] %vm6130, %v6115
      %6629 = vst.msk [vmem:[%s199 + $0x7c8] sm:$0xf] %vm6130, %v6116
      %6630 = vst.msk [vmem:[%s199 + $0x7cc] sm:$0xf] %vm6130, %v6117
      %6631 = vst.msk [vmem:[%s199 + $0x7d0] sm:$0xf] %vm6130, %v6118
      %6632 = vst.msk [vmem:[%s199 + $0x7d4] sm:$0xf] %vm6130, %v6119
      %6633 = vst.msk [vmem:[%s199 + $0x7d8] sm:$0xf] %vm6130, %v6120
      %6634 = vst.msk [vmem:[%s199 + $0x7dc] sm:$0xf] %vm6130, %v6121
      %6635 = vst.msk [vmem:[%s199 + $0x7e0] sm:$0xf] %vm6130, %v6122
      %6636 = vst.msk [vmem:[%s199 + $0x7e4] sm:$0xf] %vm6130, %v6123
      %6637 = vst.msk [vmem:[%s199 + $0x7e8] sm:$0xf] %vm6130, %v6124
      %6638 = vst.msk [vmem:[%s199 + $0x7ec] sm:$0xf] %vm6130, %v6125
      %6639 = vst.msk [vmem:[%s199 + $0x7f0] sm:$0xf] %vm6130, %v6126
      %6640 = vst.msk [vmem:[%s199 + $0x7f4] sm:$0xf] %vm6130, %v6127
      %6641 = vst.msk [vmem:[%s199 + $0x7f8] sm:$0xf] %vm6130, %v6128
      %6642 = vst.msk [vmem:[%s199 + $0x7fc] sm:$0xf] %vm6130, %v6129
      %s6643 = smul.u32 512, %s15
      %p6644 = scmp.lt.s32.totalorder %s6643, 8191
      %s6645 = scalar_select %p6644, %s6643, 8191
      %s6646 = smul.addr %s6645, 4
      %s6647 = scalar_lea.vmem %s4, %s6646
      // Predicated region
      $region37: #{tpu_custom_call.1} parent=35 // pred_check
        %p6648 = pneg %p122
      $region38: #{tpu_custom_call.1} parent=35 // pred_check_branch
        %6650 = sbr.rel (%p6648) target = $region40
      $region39: #{tpu_custom_call.1} parent=35 // pred_region
        %s6651 = smul.u32 512, %s15
      $region40: #{tpu_custom_call.1} parent=35 // pred_fallthru
        _
    $region36: #{tpu_custom_call.1} parent=5 // pred_fallthru
      _
    %p6652 = scmp.le.s32.totalorder 2, %s10
    // Predicated region
    $region41: #{tpu_custom_call.1} parent=5 // pred_check
      %p6653 = pneg %p6652
    $region42: #{tpu_custom_call.1} parent=5 // pred_check_branch
      %6655 = sbr.rel (%p6653) target = $region44
    $region43: #{tpu_custom_call.1} parent=5 // pred_region
      %s6656 = ssub.s32 %s10, 2
      // Predicated region
      $region45: #{tpu_custom_call.1} parent=43 // pred_check
        %p6657 = pneg %p128
      $region46: #{tpu_custom_call.1} parent=43 // pred_check_branch
        %6659 = sbr.rel (%p6657) target = $region48
      $region47: #{tpu_custom_call.1} parent=43 // pred_region
        %s6660 = smul.u32 512, %s16
        %p6661 = scmp.lt.s32.totalorder %s6660, 8191
        %s6662 = scalar_select %p6661, %s6660, 8191
        %s6663 = smul.addr %s6662, 4
        %s6664 = scalar_lea.vmem %s4, %s6663
      $region48: #{tpu_custom_call.1} parent=43 // pred_fallthru
        _
    $region44: #{tpu_custom_call.1} parent=5 // pred_fallthru
      _
  $region6: #{tpu_custom_call.1} parent=0 // loop_footer
    %s14 = sadd.s32 1, %s10
  $region7: #{tpu_custom_call.1} parent=0 // loop_footer_branch
    %9 = sbr.rel target = $region3
  $region8: #{tpu_custom_call.1} parent=0 // loop_exit
    _

</llo_original>
